<compile_context>
chip_gen: v7x
topology: tpu7x:2x2x1
jax: 0.10.0
libtpu: 0.0.40
codegen_flags: <defaults>
</compile_context>

<pallas_src>
import functools

import jax
import jax.numpy as jnp
from jax.experimental import pallas as pl
from jax.experimental.pallas import tpu as pltpu


def _round_up(v, m):
    return ((v + m - 1) // m) * m


# ----------------------------------------------------------------------------
# One GATv2 layer (GATv2Conv + ELU + LayerNorm) + residual Linear, traced as a
# pure value-level function inside the fused kernel.
#
#   w       : [Fin, 3*P]  = [ W_lin_l |0 | W_lin_r |0 | W_res |0 ], every
#                           segment zero-padded to P (multiple of 128 lanes).
#   va      : [3, P]      rows = (b_lin_l, b_lin_r, w_edge), zero-padded.
#   vb      : [4, Dout]   rows = (conv_bias, ln_gamma, ln_beta, res_bias).
#   sel_att : [P, heads]  per-head channel selector with the attention vector
#                         folded in (precomputed in the wrapper).
# ----------------------------------------------------------------------------
def _gatv2_block(x, adj, ew, w, va, vb, sel_att, *, heads, ch, concat):
    n = x.shape[0]
    hc = heads * ch
    d_out = hc if concat else ch
    p = w.shape[1] // 3                                     # lane-aligned segment width

    # fused node-side matmul: [lin_l | lin_r | res_proj] in one MXU pass
    z = jnp.dot(x, w, preferred_element_type=jnp.float32)   # [N, 3P]
    xl = z[:, 0:p] + va[0:1, :]                             # lin_l (source),  [N, P]
    xr = z[:, p:2 * p] + va[1:2, :]                         # lin_r (target),  [N, P]
    res = z[:, 2 * p:2 * p + d_out] + vb[3:4, :]            # residual Linear, [N, Dout]
    we = va[2:3, :]                                         # lin_edge weight, [1, P]

    # head-batched GATv2 scores: comb[i,j,:] = x_r[i] + x_l[j] + ew[i,j]*w_e
    comb = xr[:, None, :] + xl[None, :, :] + ew[:, :, None] * we[None, :, :]  # [N,N,P]
    comb = jnp.maximum(comb, 0.2 * comb)                    # LeakyReLU(0.2), one VALU op
    # per-head channel reduction on the MXU, attention vector folded in
    s = jnp.dot(comb.reshape(n * n, p), sel_att,
                preferred_element_type=jnp.float32).reshape(n, n, heads)

    # masked softmax over sources j (self-loops guarantee >=1 unmasked entry/row)
    adj3 = adj[:, :, None]                                  # [N, N, 1]
    s = jnp.where(adj3 > 0, s, -1e30)
    m = jnp.max(s, axis=1, keepdims=True)
    pexp = jnp.exp(s - m) * adj3
    denom = jnp.sum(pexp, axis=1, keepdims=True)
    alpha = pexp * pl.reciprocal(denom)                     # exact: rows sum to 1
    # TODO(synk): for the tiled/scaled version lay s out as [H, Ni, Nj] so the
    #             softmax axis is the 128-lane axis (heads=4 on lanes wastes
    #             lane occupancy at scale).

    # aggregation: per-head MXU contraction over source nodes
    o_parts = []
    for h in range(heads):
        a_h = alpha[:, :, h]                                # [N, N]
        xl_h = xl[:, h * ch:(h + 1) * ch]                   # [N, ch]
        o_parts.append(jnp.dot(a_h, xl_h, preferred_element_type=jnp.float32))
    if concat:
        o = jnp.concatenate(o_parts, axis=-1)               # [N, hc]
    else:
        o = o_parts[0]
        for part in o_parts[1:]:
            o = o + part
        o = o * (1.0 / heads)                               # mean over heads, [N, ch]

    o = o + vb[0:1, :]                                      # conv output bias

    # ELU -> dropout(identity, eval) -> LayerNorm(eps=1e-5)
    o = jnp.where(o > 0, o, jnp.exp(jnp.minimum(o, 0.0)) - 1.0)
    mu = jnp.mean(o, axis=-1, keepdims=True)
    var = jnp.mean(jnp.square(o - mu), axis=-1, keepdims=True)
    o = (o - mu) * jax.lax.rsqrt(var + 1e-5) * vb[1:2, :] + vb[2:3, :]

    # residual connection (h = h_new + res_proj(h_prev))
    return o + res


# ----------------------------------------------------------------------------
# Fused kernel: densify graph + layer1 (concat) + layer2 (mean) in one call.
# ----------------------------------------------------------------------------
def _fused_gnn_kernel(x_ref, dst_ref, src_ref, edgef_ref,
                      w1_ref, va1_ref, vb1_ref, sa1_ref,
                      w2_ref, va2_ref, vb2_ref, sa2_ref,
                      out_ref, *, heads, ch1, ch2):
    n = x_ref.shape[0]
    e = dst_ref.shape[1]

    # ---- densify the graph ONCE (remove self-loops, re-add with fill='mean')
    dst = dst_ref[...]                                      # [1, E] int32
    src_col = src_ref[...]                                  # [E, 1] int32
    valid = edgef_ref[0:1, :]                               # [1, E]  (src != dst)
    w_edge = edgef_ref[1:2, :]                              # [1, E]  weight * valid

    iota_ne = jax.lax.broadcasted_iota(jnp.int32, (n, e), 0)
    oh_dst = (iota_ne == dst).astype(jnp.float32)           # [N, E]
    iota_en = jax.lax.broadcasted_iota(jnp.int32, (e, n), 1)
    oh_src_t = (iota_en == src_col).astype(jnp.float32)     # [E, N] transposed one-hot

    a_rows = oh_dst * valid                                 # [N, E]
    w_rows = oh_dst * w_edge                                # [N, E]
    adj_cnt = jnp.dot(a_rows, oh_src_t, preferred_element_type=jnp.float32)   # [N, N]
    ew_dense = jnp.dot(w_rows, oh_src_t, preferred_element_type=jnp.float32)  # [N, N]
    # TODO(synk): duplicate parallel edges collapse into one dense softmax slot
    #             (summed weight); PyG softmaxes each parallel edge separately.

    deg = jnp.sum(a_rows, axis=1, keepdims=True)            # [N, 1]
    wsum = jnp.sum(w_rows, axis=1, keepdims=True)           # [N, 1]
    mean_w = jnp.where(deg > 0, wsum / jnp.maximum(deg, 1.0), 0.0)  # fill_value='mean'

    ri = jax.lax.broadcasted_iota(jnp.int32, (n, n), 0)
    ci = jax.lax.broadcasted_iota(jnp.int32, (n, n), 1)
    eye = (ri == ci).astype(jnp.float32)
    adj = jnp.minimum(adj_cnt, 1.0) * (1.0 - eye) + eye     # self-loops re-added
    ew = ew_dense * (1.0 - eye) + mean_w * eye

    # ---- two fused GATv2 layers (intermediate h1 never leaves the kernel)
    x0 = x_ref[...].astype(jnp.float32)
    h1 = _gatv2_block(x0, adj, ew, w1_ref[...], va1_ref[...], vb1_ref[...],
                      sa1_ref[...], heads=heads, ch=ch1, concat=True)
    h2 = _gatv2_block(h1, adj, ew, w2_ref[...], va2_ref[...], vb2_ref[...],
                      sa2_ref[...], heads=heads, ch=ch2, concat=False)

    # lane-dense output slab (unmasked vst); real channels in the first ch2 lanes
    pad = out_ref.shape[1] - h2.shape[1]
    if pad > 0:
        h2 = jnp.concatenate([h2, jnp.zeros((n, pad), h2.dtype)], axis=-1)
    out_ref[...] = h2.astype(out_ref.dtype)


# ----------------------------------------------------------------------------
# Wrapper: packs params into lane-aligned operands and calls the fused kernel.
# ----------------------------------------------------------------------------
def _pack_layer(p, heads, ch, pad):
    hc = heads * ch
    pad_cols = lambda w: jnp.pad(w, ((0, 0), (0, pad - w.shape[1])))
    pad_vec = lambda v: jnp.pad(v, (0, pad - v.shape[0]))
    w_comb = jnp.concatenate(
        [pad_cols(p['w_l']), pad_cols(p['w_r']), pad_cols(p['w_res'])], axis=1)
    vecs_a = jnp.stack([pad_vec(p['b_l']), pad_vec(p['b_r']), pad_vec(p['w_e'])], axis=0)
    vecs_b = jnp.stack([p['b_conv'], p['ln_g'], p['ln_b'], p['b_res']], axis=0)
    # per-head channel selector with the attention vector folded in: [pad, heads]
    k = jnp.arange(pad)
    sel = ((k[:, None] // ch) == jnp.arange(heads)[None, :]) & (k[:, None] < hc)
    sel_att = sel.astype(jnp.float32) * pad_vec(p['att'])[:, None]
    return w_comb, vecs_a, vecs_b, sel_att


def advanced_gnn_encoder(x, edge_index, edge_weight, params, *,
                         heads, hidden_channels, out_channels):
    n = x.shape[0]
    e = edge_index.shape[1]
    p1, p2 = params

    hc1, dout1 = heads * hidden_channels, heads * hidden_channels
    hc2, dout2 = heads * out_channels, out_channels
    pad1 = _round_up(max(hc1, dout1), 128)
    pad2 = _round_up(max(hc2, dout2), 128)
    out_pad = _round_up(out_channels, 128)

    # edge metadata pre-shaped for the in-kernel densification
    src = edge_index[0].astype(jnp.int32)
    dst = edge_index[1].astype(jnp.int32)
    valid = (src != dst).astype(jnp.float32)                # drop existing self-loops
    dst_row = dst.reshape(1, e)
    src_col = src.reshape(e, 1)
    edge_f = jnp.stack([valid, edge_weight.astype(jnp.float32) * valid], axis=0)

    pk1 = _pack_layer(p1, heads, hidden_channels, pad1)
    pk2 = _pack_layer(p2, heads, out_channels, pad2)

    kernel = functools.partial(_fused_gnn_kernel, heads=heads,
                               ch1=hidden_channels, ch2=out_channels)
    out = pl.pallas_call(
        kernel,
        out_shape=jax.ShapeDtypeStruct((n, out_pad), jnp.float32),
        in_specs=[pl.BlockSpec(memory_space=pltpu.MemorySpace.VMEM)] * 12,
        out_specs=pl.BlockSpec(memory_space=pltpu.MemorySpace.VMEM),
    )(x, dst_row, src_col, edge_f, *pk1, *pk2)
    # TODO(synk): for large graphs tile both target and source axes flash-style
    #             (online masked softmax with running m/l scratch), use
    #             PrefetchScalarGridSpec CSR block metadata to skip empty
    #             (i,j) blocks, dimension_semantics=("parallel","arbitrary"),
    #             and size tiles for v7x's 64 MiB VMEM.
    # TODO(synk): on v6e/v7x cast x / packed weights to bf16 at this boundary
    #             (keep preferred_element_type=f32 accumulation); keep f32 on v5e.
    return out[:, :out_channels]


# ----------------------------------------------------------------------------
# Deterministic parameter init (shapes follow the PyTorch module).
# ----------------------------------------------------------------------------
def init_layer_params(key, fin, ch, heads, concat):
    hc = heads * ch
    d_out = hc if concat else ch
    k = jax.random.split(key, 8)
    s = 0.1
    return {
        'w_l': jax.random.normal(k[0], (fin, hc), jnp.float32) * s,   # lin_l weight
        'b_l': jax.random.normal(k[1], (hc,), jnp.float32) * s,       # lin_l bias
        'w_r': jax.random.normal(k[2], (fin, hc), jnp.float32) * s,   # lin_r weight
        'b_r': jax.random.normal(k[3], (hc,), jnp.float32) * s,       # lin_r bias
        'w_e': jax.random.normal(k[4], (hc,), jnp.float32) * s,       # lin_edge (edge_dim=1, no bias)
        'att': jax.random.normal(k[5], (hc,), jnp.float32) * s,       # attention vector
        'b_conv': jax.random.normal(k[6], (d_out,), jnp.float32) * s, # conv output bias
        'ln_g': jnp.ones((d_out,), jnp.float32),                      # LayerNorm weight
        'ln_b': jnp.zeros((d_out,), jnp.float32),                     # LayerNorm bias
        'w_res': jax.random.normal(k[7], (fin, d_out), jnp.float32) * s,  # residual Linear
        'b_res': jnp.zeros((d_out,), jnp.float32),
    }


if __name__ == "__main__":
    N = 16               # nodes
    IN_CH = 8            # in_channels
    HID = 8              # hidden_channels
    HEADS = 4            # heads  -> hidden_dim = 32
    OUT_CH = 16          # out_channels

    key = jax.random.PRNGKey(0)
    kx, kw, kp1, kp2 = jax.random.split(key, 4)

    # node features
    x = jax.random.normal(kx, (N, IN_CH), jnp.float32)

    # deterministic edge list (no duplicates, no self-loops): (i+off) -> i
    src_list, dst_list = [], []
    for i in range(N):
        for off in (1, 2, 4):
            src_list.append((i + off) % N)
            dst_list.append(i)
    edge_index = jnp.array([src_list, dst_list], dtype=jnp.int32)     # [2, E]
    edge_weight = jax.random.uniform(kw, (edge_index.shape[1],), jnp.float32)

    params = (
        init_layer_params(kp1, IN_CH, HID, HEADS, concat=True),
        init_layer_params(kp2, HID * HEADS, OUT_CH, HEADS, concat=False),
    )

    fwd = jax.jit(functools.partial(advanced_gnn_encoder,
                                    heads=HEADS,
                                    hidden_channels=HID,
                                    out_channels=OUT_CH))
    out = fwd(x, edge_index, edge_weight, params)
    out = jax.block_until_ready(out)

    assert out.shape == (N, OUT_CH), out.shape
    assert bool(jnp.all(jnp.isfinite(out)))
    print("KERNEL_OK")
</pallas_src>

<mosaic_0001>
module attributes {stable_mosaic.version = 11 : i64} {
  func.func @_fused_gnn_kernel(%arg0: memref<16x8xf32, #tpu.memory_space<vmem>>, %arg1: memref<1x48xi32, #tpu.memory_space<vmem>>, %arg2: memref<48x1xi32, #tpu.memory_space<vmem>>, %arg3: memref<2x48xf32, #tpu.memory_space<vmem>>, %arg4: memref<8x384xf32, #tpu.memory_space<vmem>>, %arg5: memref<3x128xf32, #tpu.memory_space<vmem>>, %arg6: memref<4x32xf32, #tpu.memory_space<vmem>>, %arg7: memref<128x4xf32, #tpu.memory_space<vmem>>, %arg8: memref<32x384xf32, #tpu.memory_space<vmem>>, %arg9: memref<3x128xf32, #tpu.memory_space<vmem>>, %arg10: memref<4x16xf32, #tpu.memory_space<vmem>>, %arg11: memref<128x4xf32, #tpu.memory_space<vmem>>, %arg12: memref<16x128xf32, #tpu.memory_space<vmem>>) attributes {dimension_semantics = [], scalar_prefetch = 0 : i64, scratch_operands = 0 : i64, tpu.core_type = #tpu.core_type<tc>} {
    %c0 = arith.constant 0 : index
    %c0_0 = arith.constant 0 : index
    %0 = vector.load %arg1[%c0, %c0_0] : memref<1x48xi32, #tpu.memory_space<vmem>>, vector<1x48xi32>
    %c0_1 = arith.constant 0 : index
    %c0_2 = arith.constant 0 : index
    %1 = vector.load %arg2[%c0_1, %c0_2] : memref<48x1xi32, #tpu.memory_space<vmem>>, vector<48x1xi32>
    %c0_3 = arith.constant 0 : index
    %c0_4 = arith.constant 0 : index
    %2 = vector.load %arg3[%c0_3, %c0_4] : memref<2x48xf32, #tpu.memory_space<vmem>>, vector<1x48xf32>
    %c1 = arith.constant 1 : index
    %c0_5 = arith.constant 0 : index
    %3 = vector.load %arg3[%c1, %c0_5] : memref<2x48xf32, #tpu.memory_space<vmem>>, vector<1x48xf32>
    %4 = tpu.iota {dimensions = array<i32: 0>} : vector<16x48xi32>
    %5 = vector.broadcast %0 : vector<1x48xi32> to vector<16x48xi32>
    %6 = arith.cmpi eq, %4, %5 : vector<16x48xi32>
    %7 = arith.extui %6 : vector<16x48xi1> to vector<16x48xi32>
    %8 = arith.sitofp %7 : vector<16x48xi32> to vector<16x48xf32>
    %9 = tpu.iota {dimensions = array<i32: 1>} : vector<48x16xi32>
    %10 = vector.broadcast %1 : vector<48x1xi32> to vector<48x16xi32>
    %11 = arith.cmpi eq, %9, %10 : vector<48x16xi32>
    %12 = arith.extui %11 : vector<48x16xi1> to vector<48x16xi32>
    %13 = arith.sitofp %12 : vector<48x16xi32> to vector<48x16xf32>
    %14 = vector.broadcast %2 : vector<1x48xf32> to vector<16x48xf32>
    %15 = arith.mulf %8, %14 : vector<16x48xf32>
    %16 = vector.broadcast %3 : vector<1x48xf32> to vector<16x48xf32>
    %17 = arith.mulf %8, %16 : vector<16x48xf32>
    %cst = arith.constant dense<0.000000e+00> : vector<16x16xf32>
    %18 = tpu.matmul %15, %13, %cst {dimension_numbers = #tpu.dot_dimension_numbers<[1], [0], [0], [1], [0, 0, 1, 1], [], []>} : vector<16x48xf32>, vector<48x16xf32>, vector<16x16xf32> -> vector<16x16xf32>
    %cst_6 = arith.constant dense<0.000000e+00> : vector<16x16xf32>
    %19 = tpu.matmul %17, %13, %cst_6 {dimension_numbers = #tpu.dot_dimension_numbers<[1], [0], [0], [1], [0, 0, 1, 1], [], []>} : vector<16x48xf32>, vector<48x16xf32>, vector<16x16xf32> -> vector<16x16xf32>
    %cst_7 = arith.constant dense<0.000000e+00> : vector<16xf32>
    %20 = vector.multi_reduction <add>, %15, %cst_7 [1] : vector<16x48xf32> to vector<16xf32>
    %21 = vector.shape_cast %20 : vector<16xf32> to vector<16x1xf32>
    %cst_8 = arith.constant dense<0.000000e+00> : vector<16xf32>
    %22 = vector.multi_reduction <add>, %17, %cst_8 [1] : vector<16x48xf32> to vector<16xf32>
    %23 = vector.shape_cast %22 : vector<16xf32> to vector<16x1xf32>
    %cst_9 = arith.constant 0.000000e+00 : f32
    %24 = vector.broadcast %cst_9 : f32 to vector<16x1xf32>
    %25 = arith.cmpf ogt, %21, %24 : vector<16x1xf32>
    %cst_10 = arith.constant 1.000000e+00 : f32
    %26 = vector.broadcast %cst_10 : f32 to vector<16x1xf32>
    %27 = arith.maximumf %21, %26 : vector<16x1xf32>
    %28 = arith.divf %23, %27 : vector<16x1xf32>
    %cst_11 = arith.constant 0.000000e+00 : f32
    %29 = vector.broadcast %cst_11 : f32 to vector<16x1xf32>
    %30 = arith.select %25, %28, %29 : vector<16x1xi1>, vector<16x1xf32>
    %31 = tpu.iota {dimensions = array<i32: 0>} : vector<16x16xi32>
    %32 = tpu.iota {dimensions = array<i32: 1>} : vector<16x16xi32>
    %33 = arith.cmpi eq, %31, %32 : vector<16x16xi32>
    %34 = arith.extui %33 : vector<16x16xi1> to vector<16x16xi32>
    %35 = arith.sitofp %34 : vector<16x16xi32> to vector<16x16xf32>
    %cst_12 = arith.constant 1.000000e+00 : f32
    %36 = vector.broadcast %cst_12 : f32 to vector<16x16xf32>
    %37 = arith.minimumf %18, %36 : vector<16x16xf32>
    %cst_13 = arith.constant 1.000000e+00 : f32
    %38 = vector.broadcast %cst_13 : f32 to vector<16x16xf32>
    %39 = arith.subf %38, %35 : vector<16x16xf32>
    %40 = arith.mulf %37, %39 : vector<16x16xf32>
    %41 = arith.addf %40, %35 : vector<16x16xf32>
    %cst_14 = arith.constant 1.000000e+00 : f32
    %42 = vector.broadcast %cst_14 : f32 to vector<16x16xf32>
    %43 = arith.subf %42, %35 : vector<16x16xf32>
    %44 = arith.mulf %19, %43 : vector<16x16xf32>
    %45 = vector.broadcast %30 : vector<16x1xf32> to vector<16x16xf32>
    %46 = arith.mulf %45, %35 : vector<16x16xf32>
    %47 = arith.addf %44, %46 : vector<16x16xf32>
    %c0_15 = arith.constant 0 : index
    %c0_16 = arith.constant 0 : index
    %48 = vector.load %arg0[%c0_15, %c0_16] : memref<16x8xf32, #tpu.memory_space<vmem>>, vector<16x8xf32>
    %c0_17 = arith.constant 0 : index
    %c0_18 = arith.constant 0 : index
    %49 = vector.load %arg4[%c0_17, %c0_18] : memref<8x384xf32, #tpu.memory_space<vmem>>, vector<8x384xf32>
    %c0_19 = arith.constant 0 : index
    %c0_20 = arith.constant 0 : index
    %50 = vector.load %arg5[%c0_19, %c0_20] : memref<3x128xf32, #tpu.memory_space<vmem>>, vector<3x128xf32>
    %c0_21 = arith.constant 0 : index
    %c0_22 = arith.constant 0 : index
    %51 = vector.load %arg6[%c0_21, %c0_22] : memref<4x32xf32, #tpu.memory_space<vmem>>, vector<4x32xf32>
    %c0_23 = arith.constant 0 : index
    %c0_24 = arith.constant 0 : index
    %52 = vector.load %arg7[%c0_23, %c0_24] : memref<128x4xf32, #tpu.memory_space<vmem>>, vector<128x4xf32>
    %cst_25 = arith.constant dense<0.000000e+00> : vector<16x384xf32>
    %53 = tpu.matmul %48, %49, %cst_25 {dimension_numbers = #tpu.dot_dimension_numbers<[1], [0], [0], [1], [0, 0, 1, 1], [], []>} : vector<16x8xf32>, vector<8x384xf32>, vector<16x384xf32> -> vector<16x384xf32>
    %54 = vector.extract_strided_slice %53 {offsets = [0, 0], sizes = [16, 128], strides = [1, 1]} : vector<16x384xf32> to vector<16x128xf32>
    %55 = vector.extract_strided_slice %50 {offsets = [0, 0], sizes = [1, 128], strides = [1, 1]} : vector<3x128xf32> to vector<1x128xf32>
    %56 = vector.broadcast %55 : vector<1x128xf32> to vector<16x128xf32>
    %57 = arith.addf %54, %56 : vector<16x128xf32>
    %58 = vector.extract_strided_slice %53 {offsets = [0, 128], sizes = [16, 128], strides = [1, 1]} : vector<16x384xf32> to vector<16x128xf32>
    %59 = vector.extract_strided_slice %50 {offsets = [1, 0], sizes = [1, 128], strides = [1, 1]} : vector<3x128xf32> to vector<1x128xf32>
    %60 = vector.broadcast %59 : vector<1x128xf32> to vector<16x128xf32>
    %61 = arith.addf %58, %60 : vector<16x128xf32>
    %62 = vector.extract_strided_slice %53 {offsets = [0, 256], sizes = [16, 32], strides = [1, 1]} : vector<16x384xf32> to vector<16x32xf32>
    %63 = vector.extract_strided_slice %51 {offsets = [3, 0], sizes = [1, 32], strides = [1, 1]} : vector<4x32xf32> to vector<1x32xf32>
    %64 = vector.broadcast %63 : vector<1x32xf32> to vector<16x32xf32>
    %65 = arith.addf %62, %64 : vector<16x32xf32>
    %66 = vector.extract_strided_slice %50 {offsets = [2, 0], sizes = [1, 128], strides = [1, 1]} : vector<3x128xf32> to vector<1x128xf32>
    %67 = vector.shape_cast %61 : vector<16x128xf32> to vector<16x1x128xf32>
    %68 = vector.shape_cast %57 : vector<16x128xf32> to vector<1x16x128xf32>
    %69 = vector.broadcast %67 : vector<16x1x128xf32> to vector<16x16x128xf32>
    %70 = vector.broadcast %68 : vector<1x16x128xf32> to vector<16x16x128xf32>
    %71 = arith.addf %69, %70 : vector<16x16x128xf32>
    %72 = vector.shape_cast %47 : vector<16x16xf32> to vector<16x16x1xf32>
    %73 = vector.shape_cast %66 : vector<1x128xf32> to vector<1x1x128xf32>
    %74 = vector.broadcast %72 : vector<16x16x1xf32> to vector<16x16x128xf32>
    %75 = vector.broadcast %73 : vector<1x1x128xf32> to vector<16x16x128xf32>
    %76 = arith.mulf %74, %75 : vector<16x16x128xf32>
    %77 = arith.addf %71, %76 : vector<16x16x128xf32>
    %cst_26 = arith.constant 2.000000e-01 : f32
    %78 = vector.broadcast %cst_26 : f32 to vector<16x16x128xf32>
    %79 = arith.mulf %78, %77 : vector<16x16x128xf32>
    %80 = arith.maximumf %77, %79 : vector<16x16x128xf32>
    %81 = vector.shape_cast %80 : vector<16x16x128xf32> to vector<256x128xf32>
    %cst_27 = arith.constant dense<0.000000e+00> : vector<256x4xf32>
    %82 = tpu.matmul %81, %52, %cst_27 {dimension_numbers = #tpu.dot_dimension_numbers<[1], [0], [0], [1], [0, 0, 1, 1], [], []>} : vector<256x128xf32>, vector<128x4xf32>, vector<256x4xf32> -> vector<256x4xf32>
    %83 = vector.shape_cast %82 : vector<256x4xf32> to vector<16x16x4xf32>
    %84 = vector.shape_cast %41 : vector<16x16xf32> to vector<16x16x1xf32>
    %cst_28 = arith.constant 0.000000e+00 : f32
    %85 = vector.broadcast %cst_28 : f32 to vector<16x16x1xf32>
    %86 = arith.cmpf ogt, %84, %85 : vector<16x16x1xf32>
    %cst_29 = arith.constant -1.000000e+30 : f32
    %87 = vector.shape_cast %86 : vector<16x16x1xi1> to vector<16x16x1xi1>
    %88 = vector.broadcast %87 : vector<16x16x1xi1> to vector<16x16x4xi1>
    %89 = vector.broadcast %cst_29 : f32 to vector<16x16x4xf32>
    %90 = arith.select %88, %83, %89 : vector<16x16x4xi1>, vector<16x16x4xf32>
    %cst_30 = arith.constant dense<0xFF800000> : vector<16x4xf32>
    %91 = vector.multi_reduction <maximumf>, %90, %cst_30 [1] : vector<16x16x4xf32> to vector<16x4xf32>
    %92 = vector.shape_cast %91 : vector<16x4xf32> to vector<16x1x4xf32>
    %93 = vector.broadcast %92 : vector<16x1x4xf32> to vector<16x16x4xf32>
    %94 = arith.subf %90, %93 : vector<16x16x4xf32>
    %95 = math.exp %94 : vector<16x16x4xf32>
    %96 = vector.broadcast %84 : vector<16x16x1xf32> to vector<16x16x4xf32>
    %97 = arith.mulf %95, %96 : vector<16x16x4xf32>
    %cst_31 = arith.constant dense<0.000000e+00> : vector<16x4xf32>
    %98 = vector.multi_reduction <add>, %97, %cst_31 [1] : vector<16x16x4xf32> to vector<16x4xf32>
    %99 = vector.shape_cast %98 : vector<16x4xf32> to vector<16x1x4xf32>
    %100 = tpu.reciprocal %99 : vector<16x1x4xf32> -> vector<16x1x4xf32>
    %101 = vector.broadcast %100 : vector<16x1x4xf32> to vector<16x16x4xf32>
    %102 = arith.mulf %97, %101 : vector<16x16x4xf32>
    %103 = vector.extract_strided_slice %102 {offsets = [0, 0, 0], sizes = [16, 16, 1], strides = [1, 1, 1]} : vector<16x16x4xf32> to vector<16x16x1xf32>
    %104 = vector.shape_cast %103 : vector<16x16x1xf32> to vector<16x16xf32>
    %105 = vector.extract_strided_slice %57 {offsets = [0, 0], sizes = [16, 8], strides = [1, 1]} : vector<16x128xf32> to vector<16x8xf32>
    %cst_32 = arith.constant dense<0.000000e+00> : vector<16x8xf32>
    %106 = tpu.matmul %104, %105, %cst_32 {dimension_numbers = #tpu.dot_dimension_numbers<[1], [0], [0], [1], [0, 0, 1, 1], [], []>} : vector<16x16xf32>, vector<16x8xf32>, vector<16x8xf32> -> vector<16x8xf32>
    %107 = vector.extract_strided_slice %102 {offsets = [0, 0, 1], sizes = [16, 16, 1], strides = [1, 1, 1]} : vector<16x16x4xf32> to vector<16x16x1xf32>
    %108 = vector.shape_cast %107 : vector<16x16x1xf32> to vector<16x16xf32>
    %109 = vector.extract_strided_slice %57 {offsets = [0, 8], sizes = [16, 8], strides = [1, 1]} : vector<16x128xf32> to vector<16x8xf32>
    %cst_33 = arith.constant dense<0.000000e+00> : vector<16x8xf32>
    %110 = tpu.matmul %108, %109, %cst_33 {dimension_numbers = #tpu.dot_dimension_numbers<[1], [0], [0], [1], [0, 0, 1, 1], [], []>} : vector<16x16xf32>, vector<16x8xf32>, vector<16x8xf32> -> vector<16x8xf32>
    %111 = vector.extract_strided_slice %102 {offsets = [0, 0, 2], sizes = [16, 16, 1], strides = [1, 1, 1]} : vector<16x16x4xf32> to vector<16x16x1xf32>
    %112 = vector.shape_cast %111 : vector<16x16x1xf32> to vector<16x16xf32>
    %113 = vector.extract_strided_slice %57 {offsets = [0, 16], sizes = [16, 8], strides = [1, 1]} : vector<16x128xf32> to vector<16x8xf32>
    %cst_34 = arith.constant dense<0.000000e+00> : vector<16x8xf32>
    %114 = tpu.matmul %112, %113, %cst_34 {dimension_numbers = #tpu.dot_dimension_numbers<[1], [0], [0], [1], [0, 0, 1, 1], [], []>} : vector<16x16xf32>, vector<16x8xf32>, vector<16x8xf32> -> vector<16x8xf32>
    %115 = vector.extract_strided_slice %102 {offsets = [0, 0, 3], sizes = [16, 16, 1], strides = [1, 1, 1]} : vector<16x16x4xf32> to vector<16x16x1xf32>
    %116 = vector.shape_cast %115 : vector<16x16x1xf32> to vector<16x16xf32>
    %117 = vector.extract_strided_slice %57 {offsets = [0, 24], sizes = [16, 8], strides = [1, 1]} : vector<16x128xf32> to vector<16x8xf32>
    %cst_35 = arith.constant dense<0.000000e+00> : vector<16x8xf32>
    %118 = tpu.matmul %116, %117, %cst_35 {dimension_numbers = #tpu.dot_dimension_numbers<[1], [0], [0], [1], [0, 0, 1, 1], [], []>} : vector<16x16xf32>, vector<16x8xf32>, vector<16x8xf32> -> vector<16x8xf32>
    %119 = tpu.concatenate %106, %110, %114, %118 in 1 : vector<16x8xf32>, vector<16x8xf32>, vector<16x8xf32>, vector<16x8xf32> -> vector<16x32xf32>
    %120 = vector.extract_strided_slice %51 {offsets = [0, 0], sizes = [1, 32], strides = [1, 1]} : vector<4x32xf32> to vector<1x32xf32>
    %121 = vector.broadcast %120 : vector<1x32xf32> to vector<16x32xf32>
    %122 = arith.addf %119, %121 : vector<16x32xf32>
    %cst_36 = arith.constant 0.000000e+00 : f32
    %123 = vector.broadcast %cst_36 : f32 to vector<16x32xf32>
    %124 = arith.cmpf ogt, %122, %123 : vector<16x32xf32>
    %cst_37 = arith.constant 0.000000e+00 : f32
    %125 = vector.broadcast %cst_37 : f32 to vector<16x32xf32>
    %126 = arith.minimumf %122, %125 : vector<16x32xf32>
    %127 = math.exp %126 : vector<16x32xf32>
    %cst_38 = arith.constant 1.000000e+00 : f32
    %128 = vector.broadcast %cst_38 : f32 to vector<16x32xf32>
    %129 = arith.subf %127, %128 : vector<16x32xf32>
    %130 = arith.select %124, %122, %129 : vector<16x32xi1>, vector<16x32xf32>
    %cst_39 = arith.constant dense<0.000000e+00> : vector<16xf32>
    %131 = vector.multi_reduction <add>, %130, %cst_39 [1] : vector<16x32xf32> to vector<16xf32>
    %132 = vector.shape_cast %131 : vector<16xf32> to vector<16x1xf32>
    %cst_40 = arith.constant 3.200000e+01 : f32
    %133 = vector.broadcast %cst_40 : f32 to vector<16x1xf32>
    %134 = arith.divf %132, %133 : vector<16x1xf32>
    %135 = vector.broadcast %134 : vector<16x1xf32> to vector<16x32xf32>
    %136 = arith.subf %130, %135 : vector<16x32xf32>
    %137 = arith.mulf %136, %136 : vector<16x32xf32>
    %cst_41 = arith.constant dense<0.000000e+00> : vector<16xf32>
    %138 = vector.multi_reduction <add>, %137, %cst_41 [1] : vector<16x32xf32> to vector<16xf32>
    %139 = vector.shape_cast %138 : vector<16xf32> to vector<16x1xf32>
    %cst_42 = arith.constant 3.200000e+01 : f32
    %140 = vector.broadcast %cst_42 : f32 to vector<16x1xf32>
    %141 = arith.divf %139, %140 : vector<16x1xf32>
    %142 = vector.broadcast %134 : vector<16x1xf32> to vector<16x32xf32>
    %143 = arith.subf %130, %142 : vector<16x32xf32>
    %cst_43 = arith.constant 9.99999974E-6 : f32
    %144 = vector.broadcast %cst_43 : f32 to vector<16x1xf32>
    %145 = arith.addf %141, %144 : vector<16x1xf32>
    %146 = math.rsqrt %145 : vector<16x1xf32>
    %147 = vector.broadcast %146 : vector<16x1xf32> to vector<16x32xf32>
    %148 = arith.mulf %143, %147 : vector<16x32xf32>
    %149 = vector.extract_strided_slice %51 {offsets = [1, 0], sizes = [1, 32], strides = [1, 1]} : vector<4x32xf32> to vector<1x32xf32>
    %150 = vector.broadcast %149 : vector<1x32xf32> to vector<16x32xf32>
    %151 = arith.mulf %148, %150 : vector<16x32xf32>
    %152 = vector.extract_strided_slice %51 {offsets = [2, 0], sizes = [1, 32], strides = [1, 1]} : vector<4x32xf32> to vector<1x32xf32>
    %153 = vector.broadcast %152 : vector<1x32xf32> to vector<16x32xf32>
    %154 = arith.addf %151, %153 : vector<16x32xf32>
    %155 = arith.addf %154, %65 : vector<16x32xf32>
    %c0_44 = arith.constant 0 : index
    %c0_45 = arith.constant 0 : index
    %156 = vector.load %arg8[%c0_44, %c0_45] : memref<32x384xf32, #tpu.memory_space<vmem>>, vector<32x384xf32>
    %c0_46 = arith.constant 0 : index
    %c0_47 = arith.constant 0 : index
    %157 = vector.load %arg9[%c0_46, %c0_47] : memref<3x128xf32, #tpu.memory_space<vmem>>, vector<3x128xf32>
    %c0_48 = arith.constant 0 : index
    %c0_49 = arith.constant 0 : index
    %158 = vector.load %arg10[%c0_48, %c0_49] : memref<4x16xf32, #tpu.memory_space<vmem>>, vector<4x16xf32>
    %c0_50 = arith.constant 0 : index
    %c0_51 = arith.constant 0 : index
    %159 = vector.load %arg11[%c0_50, %c0_51] : memref<128x4xf32, #tpu.memory_space<vmem>>, vector<128x4xf32>
    %cst_52 = arith.constant dense<0.000000e+00> : vector<16x384xf32>
    %160 = tpu.matmul %155, %156, %cst_52 {dimension_numbers = #tpu.dot_dimension_numbers<[1], [0], [0], [1], [0, 0, 1, 1], [], []>} : vector<16x32xf32>, vector<32x384xf32>, vector<16x384xf32> -> vector<16x384xf32>
    %161 = vector.extract_strided_slice %160 {offsets = [0, 0], sizes = [16, 128], strides = [1, 1]} : vector<16x384xf32> to vector<16x128xf32>
    %162 = vector.extract_strided_slice %157 {offsets = [0, 0], sizes = [1, 128], strides = [1, 1]} : vector<3x128xf32> to vector<1x128xf32>
    %163 = vector.broadcast %162 : vector<1x128xf32> to vector<16x128xf32>
    %164 = arith.addf %161, %163 : vector<16x128xf32>
    %165 = vector.extract_strided_slice %160 {offsets = [0, 128], sizes = [16, 128], strides = [1, 1]} : vector<16x384xf32> to vector<16x128xf32>
    %166 = vector.extract_strided_slice %157 {offsets = [1, 0], sizes = [1, 128], strides = [1, 1]} : vector<3x128xf32> to vector<1x128xf32>
    %167 = vector.broadcast %166 : vector<1x128xf32> to vector<16x128xf32>
    %168 = arith.addf %165, %167 : vector<16x128xf32>
    %169 = vector.extract_strided_slice %160 {offsets = [0, 256], sizes = [16, 16], strides = [1, 1]} : vector<16x384xf32> to vector<16x16xf32>
    %170 = vector.extract_strided_slice %158 {offsets = [3, 0], sizes = [1, 16], strides = [1, 1]} : vector<4x16xf32> to vector<1x16xf32>
    %171 = vector.broadcast %170 : vector<1x16xf32> to vector<16x16xf32>
    %172 = arith.addf %169, %171 : vector<16x16xf32>
    %173 = vector.extract_strided_slice %157 {offsets = [2, 0], sizes = [1, 128], strides = [1, 1]} : vector<3x128xf32> to vector<1x128xf32>
    %174 = vector.shape_cast %168 : vector<16x128xf32> to vector<16x1x128xf32>
    %175 = vector.shape_cast %164 : vector<16x128xf32> to vector<1x16x128xf32>
    %176 = vector.broadcast %174 : vector<16x1x128xf32> to vector<16x16x128xf32>
    %177 = vector.broadcast %175 : vector<1x16x128xf32> to vector<16x16x128xf32>
    %178 = arith.addf %176, %177 : vector<16x16x128xf32>
    %179 = vector.shape_cast %47 : vector<16x16xf32> to vector<16x16x1xf32>
    %180 = vector.shape_cast %173 : vector<1x128xf32> to vector<1x1x128xf32>
    %181 = vector.broadcast %179 : vector<16x16x1xf32> to vector<16x16x128xf32>
    %182 = vector.broadcast %180 : vector<1x1x128xf32> to vector<16x16x128xf32>
    %183 = arith.mulf %181, %182 : vector<16x16x128xf32>
    %184 = arith.addf %178, %183 : vector<16x16x128xf32>
    %cst_53 = arith.constant 2.000000e-01 : f32
    %185 = vector.broadcast %cst_53 : f32 to vector<16x16x128xf32>
    %186 = arith.mulf %185, %184 : vector<16x16x128xf32>
    %187 = arith.maximumf %184, %186 : vector<16x16x128xf32>
    %188 = vector.shape_cast %187 : vector<16x16x128xf32> to vector<256x128xf32>
    %cst_54 = arith.constant dense<0.000000e+00> : vector<256x4xf32>
    %189 = tpu.matmul %188, %159, %cst_54 {dimension_numbers = #tpu.dot_dimension_numbers<[1], [0], [0], [1], [0, 0, 1, 1], [], []>} : vector<256x128xf32>, vector<128x4xf32>, vector<256x4xf32> -> vector<256x4xf32>
    %190 = vector.shape_cast %189 : vector<256x4xf32> to vector<16x16x4xf32>
    %191 = vector.shape_cast %41 : vector<16x16xf32> to vector<16x16x1xf32>
    %cst_55 = arith.constant 0.000000e+00 : f32
    %192 = vector.broadcast %cst_55 : f32 to vector<16x16x1xf32>
    %193 = arith.cmpf ogt, %191, %192 : vector<16x16x1xf32>
    %cst_56 = arith.constant -1.000000e+30 : f32
    %194 = vector.shape_cast %193 : vector<16x16x1xi1> to vector<16x16x1xi1>
    %195 = vector.broadcast %194 : vector<16x16x1xi1> to vector<16x16x4xi1>
    %196 = vector.broadcast %cst_56 : f32 to vector<16x16x4xf32>
    %197 = arith.select %195, %190, %196 : vector<16x16x4xi1>, vector<16x16x4xf32>
    %cst_57 = arith.constant dense<0xFF800000> : vector<16x4xf32>
    %198 = vector.multi_reduction <maximumf>, %197, %cst_57 [1] : vector<16x16x4xf32> to vector<16x4xf32>
    %199 = vector.shape_cast %198 : vector<16x4xf32> to vector<16x1x4xf32>
    %200 = vector.broadcast %199 : vector<16x1x4xf32> to vector<16x16x4xf32>
    %201 = arith.subf %197, %200 : vector<16x16x4xf32>
    %202 = math.exp %201 : vector<16x16x4xf32>
    %203 = vector.broadcast %191 : vector<16x16x1xf32> to vector<16x16x4xf32>
    %204 = arith.mulf %202, %203 : vector<16x16x4xf32>
    %cst_58 = arith.constant dense<0.000000e+00> : vector<16x4xf32>
    %205 = vector.multi_reduction <add>, %204, %cst_58 [1] : vector<16x16x4xf32> to vector<16x4xf32>
    %206 = vector.shape_cast %205 : vector<16x4xf32> to vector<16x1x4xf32>
    %207 = tpu.reciprocal %206 : vector<16x1x4xf32> -> vector<16x1x4xf32>
    %208 = vector.broadcast %207 : vector<16x1x4xf32> to vector<16x16x4xf32>
    %209 = arith.mulf %204, %208 : vector<16x16x4xf32>
    %210 = vector.extract_strided_slice %209 {offsets = [0, 0, 0], sizes = [16, 16, 1], strides = [1, 1, 1]} : vector<16x16x4xf32> to vector<16x16x1xf32>
    %211 = vector.shape_cast %210 : vector<16x16x1xf32> to vector<16x16xf32>
    %212 = vector.extract_strided_slice %164 {offsets = [0, 0], sizes = [16, 16], strides = [1, 1]} : vector<16x128xf32> to vector<16x16xf32>
    %cst_59 = arith.constant dense<0.000000e+00> : vector<16x16xf32>
    %213 = tpu.matmul %211, %212, %cst_59 {dimension_numbers = #tpu.dot_dimension_numbers<[1], [0], [0], [1], [0, 0, 1, 1], [], []>} : vector<16x16xf32>, vector<16x16xf32>, vector<16x16xf32> -> vector<16x16xf32>
    %214 = vector.extract_strided_slice %209 {offsets = [0, 0, 1], sizes = [16, 16, 1], strides = [1, 1, 1]} : vector<16x16x4xf32> to vector<16x16x1xf32>
    %215 = vector.shape_cast %214 : vector<16x16x1xf32> to vector<16x16xf32>
    %216 = vector.extract_strided_slice %164 {offsets = [0, 16], sizes = [16, 16], strides = [1, 1]} : vector<16x128xf32> to vector<16x16xf32>
    %cst_60 = arith.constant dense<0.000000e+00> : vector<16x16xf32>
    %217 = tpu.matmul %215, %216, %cst_60 {dimension_numbers = #tpu.dot_dimension_numbers<[1], [0], [0], [1], [0, 0, 1, 1], [], []>} : vector<16x16xf32>, vector<16x16xf32>, vector<16x16xf32> -> vector<16x16xf32>
    %218 = vector.extract_strided_slice %209 {offsets = [0, 0, 2], sizes = [16, 16, 1], strides = [1, 1, 1]} : vector<16x16x4xf32> to vector<16x16x1xf32>
    %219 = vector.shape_cast %218 : vector<16x16x1xf32> to vector<16x16xf32>
    %220 = vector.extract_strided_slice %164 {offsets = [0, 32], sizes = [16, 16], strides = [1, 1]} : vector<16x128xf32> to vector<16x16xf32>
    %cst_61 = arith.constant dense<0.000000e+00> : vector<16x16xf32>
    %221 = tpu.matmul %219, %220, %cst_61 {dimension_numbers = #tpu.dot_dimension_numbers<[1], [0], [0], [1], [0, 0, 1, 1], [], []>} : vector<16x16xf32>, vector<16x16xf32>, vector<16x16xf32> -> vector<16x16xf32>
    %222 = vector.extract_strided_slice %209 {offsets = [0, 0, 3], sizes = [16, 16, 1], strides = [1, 1, 1]} : vector<16x16x4xf32> to vector<16x16x1xf32>
    %223 = vector.shape_cast %222 : vector<16x16x1xf32> to vector<16x16xf32>
    %224 = vector.extract_strided_slice %164 {offsets = [0, 48], sizes = [16, 16], strides = [1, 1]} : vector<16x128xf32> to vector<16x16xf32>
    %cst_62 = arith.constant dense<0.000000e+00> : vector<16x16xf32>
    %225 = tpu.matmul %223, %224, %cst_62 {dimension_numbers = #tpu.dot_dimension_numbers<[1], [0], [0], [1], [0, 0, 1, 1], [], []>} : vector<16x16xf32>, vector<16x16xf32>, vector<16x16xf32> -> vector<16x16xf32>
    %226 = arith.addf %213, %217 : vector<16x16xf32>
    %227 = arith.addf %226, %221 : vector<16x16xf32>
    %228 = arith.addf %227, %225 : vector<16x16xf32>
    %cst_63 = arith.constant 2.500000e-01 : f32
    %229 = vector.broadcast %cst_63 : f32 to vector<16x16xf32>
    %230 = arith.mulf %228, %229 : vector<16x16xf32>
    %231 = vector.extract_strided_slice %158 {offsets = [0, 0], sizes = [1, 16], strides = [1, 1]} : vector<4x16xf32> to vector<1x16xf32>
    %232 = vector.broadcast %231 : vector<1x16xf32> to vector<16x16xf32>
    %233 = arith.addf %230, %232 : vector<16x16xf32>
    %cst_64 = arith.constant 0.000000e+00 : f32
    %234 = vector.broadcast %cst_64 : f32 to vector<16x16xf32>
    %235 = arith.cmpf ogt, %233, %234 : vector<16x16xf32>
    %cst_65 = arith.constant 0.000000e+00 : f32
    %236 = vector.broadcast %cst_65 : f32 to vector<16x16xf32>
    %237 = arith.minimumf %233, %236 : vector<16x16xf32>
    %238 = math.exp %237 : vector<16x16xf32>
    %cst_66 = arith.constant 1.000000e+00 : f32
    %239 = vector.broadcast %cst_66 : f32 to vector<16x16xf32>
    %240 = arith.subf %238, %239 : vector<16x16xf32>
    %241 = arith.select %235, %233, %240 : vector<16x16xi1>, vector<16x16xf32>
    %cst_67 = arith.constant dense<0.000000e+00> : vector<16xf32>
    %242 = vector.multi_reduction <add>, %241, %cst_67 [1] : vector<16x16xf32> to vector<16xf32>
    %243 = vector.shape_cast %242 : vector<16xf32> to vector<16x1xf32>
    %cst_68 = arith.constant 1.600000e+01 : f32
    %244 = vector.broadcast %cst_68 : f32 to vector<16x1xf32>
    %245 = arith.divf %243, %244 : vector<16x1xf32>
    %246 = vector.broadcast %245 : vector<16x1xf32> to vector<16x16xf32>
    %247 = arith.subf %241, %246 : vector<16x16xf32>
    %248 = arith.mulf %247, %247 : vector<16x16xf32>
    %cst_69 = arith.constant dense<0.000000e+00> : vector<16xf32>
    %249 = vector.multi_reduction <add>, %248, %cst_69 [1] : vector<16x16xf32> to vector<16xf32>
    %250 = vector.shape_cast %249 : vector<16xf32> to vector<16x1xf32>
    %cst_70 = arith.constant 1.600000e+01 : f32
    %251 = vector.broadcast %cst_70 : f32 to vector<16x1xf32>
    %252 = arith.divf %250, %251 : vector<16x1xf32>
    %253 = vector.broadcast %245 : vector<16x1xf32> to vector<16x16xf32>
    %254 = arith.subf %241, %253 : vector<16x16xf32>
    %cst_71 = arith.constant 9.99999974E-6 : f32
    %255 = vector.broadcast %cst_71 : f32 to vector<16x1xf32>
    %256 = arith.addf %252, %255 : vector<16x1xf32>
    %257 = math.rsqrt %256 : vector<16x1xf32>
    %258 = vector.broadcast %257 : vector<16x1xf32> to vector<16x16xf32>
    %259 = arith.mulf %254, %258 : vector<16x16xf32>
    %260 = vector.extract_strided_slice %158 {offsets = [1, 0], sizes = [1, 16], strides = [1, 1]} : vector<4x16xf32> to vector<1x16xf32>
    %261 = vector.broadcast %260 : vector<1x16xf32> to vector<16x16xf32>
    %262 = arith.mulf %259, %261 : vector<16x16xf32>
    %263 = vector.extract_strided_slice %158 {offsets = [2, 0], sizes = [1, 16], strides = [1, 1]} : vector<4x16xf32> to vector<1x16xf32>
    %264 = vector.broadcast %263 : vector<1x16xf32> to vector<16x16xf32>
    %265 = arith.addf %262, %264 : vector<16x16xf32>
    %266 = arith.addf %265, %172 : vector<16x16xf32>
    %cst_72 = arith.constant 0.000000e+00 : f32
    %267 = vector.broadcast %cst_72 : f32 to vector<16x112xf32>
    %268 = tpu.concatenate %266, %267 in 1 : vector<16x16xf32>, vector<16x112xf32> -> vector<16x128xf32>
    %c0_73 = arith.constant 0 : index
    %c0_74 = arith.constant 0 : index
    %269 = vector.load %arg12[%c0_73, %c0_74] : memref<16x128xf32, #tpu.memory_space<vmem>>, vector<16x128xf32>
    tpu.vector_store %arg12[%c0_73, %c0_74], %268 {strides = array<i32>} : memref<16x128xf32, #tpu.memory_space<vmem>>, vector<16x128xf32>,
    return
  }
}

</mosaic_0001>

<llo_original>
// kernel: advanced_gnn_encoder.1
$region0: #{advanced_gnn_encoder.1}
  #allocation0 [shape = 'u32[]', space=smem, size = 0x4, offset = 0x4, fixed_abs, tag = 'smem constant byte address 0x4 - core index']
  #allocation1 [shape = 'u32[144,128]{1,0:T(1,128)}', space=vmem, size = 0x12000, scoped, tag = 'internal scratch']
  %s0 = inlined_call_operand.vmem [shape: f32[16,8], index: 0, kind: input, shape index: {}]
  %s1 = inlined_call_operand.vmem [shape: s32[1,48], index: 1, kind: input, shape index: {}]
  %s2 = inlined_call_operand.vmem [shape: s32[48,1], index: 2, kind: input, shape index: {}]
  %s3 = inlined_call_operand.vmem [shape: f32[2,48], index: 3, kind: input, shape index: {}]
  %s4 = inlined_call_operand.vmem [shape: f32[8,384], index: 4, kind: input, shape index: {}]
  %s5 = inlined_call_operand.vmem [shape: f32[3,128], index: 5, kind: input, shape index: {}]
  %s6 = inlined_call_operand.vmem [shape: f32[4,32], index: 6, kind: input, shape index: {}]
  %s7 = inlined_call_operand.vmem [shape: f32[128,4], index: 7, kind: input, shape index: {}]
  %s8 = inlined_call_operand.vmem [shape: f32[32,384], index: 8, kind: input, shape index: {}]
  %s9 = inlined_call_operand.vmem [shape: f32[3,128], index: 9, kind: input, shape index: {}]
  %s10 = inlined_call_operand.vmem [shape: f32[4,16], index: 10, kind: input, shape index: {}]
  %s11 = inlined_call_operand.vmem [shape: f32[128,4], index: 11, kind: input, shape index: {}]
  %s12 = inlined_call_operand.hbm [shape: f32[16,128], index: 12, kind: output, shape index: {}]
  %s13 = sld [smem:[#allocation0]]
  $region58: #{advanced_gnn_encoder.1} parent=0
    _
  %s15 = ssub.s32 1, %s13
  %s16 = scalar_select 0, %s15, %s13
  $region1: #{advanced_gnn_encoder.1} parent=0
    #allocation2 [shape = 'u8[8192]{0}', space=vmem, size = 0x2000, scoped, tag = 'output window, operand 0, single buffered']
    #allocation3 [shape = 's32[1]{0}', space=sflag, size = 0x4, scoped, tag = 'scoped memory for advanced_gnn_encoder.1']
    %17 = vsyncpa [#allocation3], 0
    // Predicated region
    $region2: #{advanced_gnn_encoder.1} parent=1 // pred_check
      _
    $region3: #{advanced_gnn_encoder.1} parent=1 // pred_check_branch
      %19 = sbr.rel (0) target = $region5
    $region4: #{advanced_gnn_encoder.1} parent=1 // pred_region
      _
    $region5: #{advanced_gnn_encoder.1} parent=1 // pred_fallthru
      _
    // Predicated region
    $region6: #{advanced_gnn_encoder.1} parent=1 // pred_check
      _
    $region7: #{advanced_gnn_encoder.1} parent=1 // pred_check_branch
      %21 = sbr.rel (0) target = $region9
    $region8: #{advanced_gnn_encoder.1} parent=1 // pred_region
      _
    $region9: #{advanced_gnn_encoder.1} parent=1 // pred_fallthru
      _
    // Predicated region
    $region10: #{advanced_gnn_encoder.1} parent=1 // pred_check
      _
    $region11: #{advanced_gnn_encoder.1} parent=1 // pred_check_branch
      %23 = sbr.rel (0) target = $region13
    $region12: #{advanced_gnn_encoder.1} parent=1 // pred_region
      _
    $region13: #{advanced_gnn_encoder.1} parent=1 // pred_fallthru
      _
    // Predicated region
    $region14: #{advanced_gnn_encoder.1} parent=1 // pred_check
      _
    $region15: #{advanced_gnn_encoder.1} parent=1 // pred_check_branch
      %25 = sbr.rel (0) target = $region17
    $region16: #{advanced_gnn_encoder.1} parent=1 // pred_region
      _
    $region17: #{advanced_gnn_encoder.1} parent=1 // pred_fallthru
      _
    // Predicated region
    $region18: #{advanced_gnn_encoder.1} parent=1 // pred_check
      _
    $region19: #{advanced_gnn_encoder.1} parent=1 // pred_check_branch
      %27 = sbr.rel (0) target = $region21
    $region20: #{advanced_gnn_encoder.1} parent=1 // pred_region
      _
    $region21: #{advanced_gnn_encoder.1} parent=1 // pred_fallthru
      _
    // Predicated region
    $region22: #{advanced_gnn_encoder.1} parent=1 // pred_check
      _
    $region23: #{advanced_gnn_encoder.1} parent=1 // pred_check_branch
      %29 = sbr.rel (0) target = $region25
    $region24: #{advanced_gnn_encoder.1} parent=1 // pred_region
      _
    $region25: #{advanced_gnn_encoder.1} parent=1 // pred_fallthru
      _
    // Predicated region
    $region26: #{advanced_gnn_encoder.1} parent=1 // pred_check
      _
    $region27: #{advanced_gnn_encoder.1} parent=1 // pred_check_branch
      %31 = sbr.rel (0) target = $region29
    $region28: #{advanced_gnn_encoder.1} parent=1 // pred_region
      _
    $region29: #{advanced_gnn_encoder.1} parent=1 // pred_fallthru
      _
    // Predicated region
    $region30: #{advanced_gnn_encoder.1} parent=1 // pred_check
      _
    $region31: #{advanced_gnn_encoder.1} parent=1 // pred_check_branch
      %33 = sbr.rel (0) target = $region33
    $region32: #{advanced_gnn_encoder.1} parent=1 // pred_region
      _
    $region33: #{advanced_gnn_encoder.1} parent=1 // pred_fallthru
      _
    // Predicated region
    $region34: #{advanced_gnn_encoder.1} parent=1 // pred_check
      _
    $region35: #{advanced_gnn_encoder.1} parent=1 // pred_check_branch
      %35 = sbr.rel (0) target = $region37
    $region36: #{advanced_gnn_encoder.1} parent=1 // pred_region
      _
    $region37: #{advanced_gnn_encoder.1} parent=1 // pred_fallthru
      _
    // Predicated region
    $region38: #{advanced_gnn_encoder.1} parent=1 // pred_check
      _
    $region39: #{advanced_gnn_encoder.1} parent=1 // pred_check_branch
      %37 = sbr.rel (0) target = $region41
    $region40: #{advanced_gnn_encoder.1} parent=1 // pred_region
      _
    $region41: #{advanced_gnn_encoder.1} parent=1 // pred_fallthru
      _
    // Predicated region
    $region42: #{advanced_gnn_encoder.1} parent=1 // pred_check
      _
    $region43: #{advanced_gnn_encoder.1} parent=1 // pred_check_branch
      %39 = sbr.rel (0) target = $region45
    $region44: #{advanced_gnn_encoder.1} parent=1 // pred_region
      _
    $region45: #{advanced_gnn_encoder.1} parent=1 // pred_fallthru
      _
    // Predicated region
    $region46: #{advanced_gnn_encoder.1} parent=1 // pred_check
      _
    $region47: #{advanced_gnn_encoder.1} parent=1 // pred_check_branch
      %41 = sbr.rel (0) target = $region49
    $region48: #{advanced_gnn_encoder.1} parent=1 // pred_region
      _
    $region49: #{advanced_gnn_encoder.1} parent=1 // pred_fallthru
      _
    %v42 = vld [vmem:[%s1] sm:$0x1]
    %v43 = vld [vmem:[%s2] sm:$0xff]
    %v44 = vld [vmem:[%s2 + $0x8] sm:$0xff]
    %v45 = vld [vmem:[%s2 + $0x10] sm:$0xff]
    %v46 = vld [vmem:[%s2 + $0x18] sm:$0xff]
    %v47 = vld [vmem:[%s2 + $0x20] sm:$0xff]
    %v48 = vld [vmem:[%s2 + $0x28] sm:$0xff]
    %v49 = vld [vmem:[%s3] sm:$0x1]
    %v50 = vld [vmem:[%s3 + $0x1] sm:$0x1]
    %v51 = vlaneseq
    %v52 = vshrl.u32 %v51, 7
    %v53 = vadd.s32 %v52, 8
    %v54 = vlaneseq
    %v55 = vshrl.u32 %v54, 7
    %v56 = vsub.s32 0, %v55
    %v57 = vrot.slane %v42, %v56
    %vm58 = vcmp.eq.s32.totalorder %v52, %v57
    %vm59 = vcmp.eq.s32.totalorder %v53, %v57
    %v60 = vsel %vm58, 1, 0
    %v61 = vsel %vm59, 1, 0
    %v62 = vcvt.s32.f32 %v60
    %v63 = vcvt.s32.f32 %v61
    %v64 = vlaneseq
    %v65 = vand.u32 %v64, 127
    %66 = vset.pattern.permute.xlu0 0
    %67 = vperm.xlu0 %66, %v43
    %v68 = vpop.permute.xlu0 %67
    %69 = vset.pattern.permute.xlu0 0
    %70 = vperm.xlu0 %69, %v44
    %v71 = vpop.permute.xlu0 %70
    %72 = vset.pattern.permute.xlu0 0
    %73 = vperm.xlu0 %72, %v45
    %v74 = vpop.permute.xlu0 %73
    %75 = vset.pattern.permute.xlu0 0
    %76 = vperm.xlu0 %75, %v46
    %v77 = vpop.permute.xlu0 %76
    %78 = vset.pattern.permute.xlu0 0
    %79 = vperm.xlu0 %78, %v47
    %v80 = vpop.permute.xlu0 %79
    %81 = vset.pattern.permute.xlu0 0
    %82 = vperm.xlu0 %81, %v48
    %v83 = vpop.permute.xlu0 %82
    %vm84 = vcmp.eq.s32.totalorder %v65, %v68
    %vm85 = vcmp.eq.s32.totalorder %v65, %v71
    %vm86 = vcmp.eq.s32.totalorder %v65, %v74
    %vm87 = vcmp.eq.s32.totalorder %v65, %v77
    %vm88 = vcmp.eq.s32.totalorder %v65, %v80
    %vm89 = vcmp.eq.s32.totalorder %v65, %v83
    %v90 = vsel %vm84, 1, 0
    %v91 = vsel %vm85, 1, 0
    %v92 = vsel %vm86, 1, 0
    %v93 = vsel %vm87, 1, 0
    %v94 = vsel %vm88, 1, 0
    %v95 = vsel %vm89, 1, 0
    %v96 = vcvt.s32.f32 %v90
    %v97 = vcvt.s32.f32 %v91
    %v98 = vcvt.s32.f32 %v92
    %v99 = vcvt.s32.f32 %v93
    %v100 = vcvt.s32.f32 %v94
    %v101 = vcvt.s32.f32 %v95
    %v102 = vlaneseq
    %v103 = vshrl.u32 %v102, 7
    %v104 = vsub.s32 0, %v103
    %v105 = vrot.slane %v49, %v104
    %v106 = vmul.f32 %v62, %v105
    %v107 = vmul.f32 %v63, %v105
    %v108 = vlaneseq
    %v109 = vshrl.u32 %v108, 7
    %v110 = vsub.s32 0, %v109
    %v111 = vrot.slane %v50, %v110
    %v112 = vmul.f32 %v62, %v111
    %v113 = vmul.f32 %v63, %v111
    %vm114 = vcmask 392192
    %v116 = vsel %vm114, %v106, 0
    %v119 = vsel %vm114, %v107, 0
    %121 = vmatprep.subr.mxu0 0.0
    %122 = vmatpush1.msra.mxu0 %v96
    %123 = vmatprep.subr.mxu0 0.0
    %124 = vmatpush1.msra.mxu0 %v97
    %125 = vmatprep.subr.mxu0 0.0
    %126 = vmatpush1.msra.mxu0 %v98
    %127 = vmatprep.subr.mxu0 0.0
    %128 = vmatpush1.msra.mxu0 %v99
    %129 = vmatprep.subr.mxu0 0.0
    %130 = vmatpush1.msra.mxu0 %v100
    %131 = vmatprep.subr.mxu0 0.0
    %132 = vmatpush1.msra.mxu0 %v101
    %133 = vmatprep.subr.mxu0 0.0
    %134 = vmatpush1.msra.mxu0 0.0
    %135 = vmatprep.subr.mxu0 0.0
    %136 = vmatpush1.msra.mxu0 0.0
    %137 = vmatprep.subr.mxu0 0.0
    %138 = vmatpush1.msra.mxu0 0.0
    %139 = vmatprep.subr.mxu0 0.0
    %140 = vmatpush1.msra.mxu0 0.0
    %141 = vmatprep.subr.mxu0 0.0
    %142 = vmatpush1.msra.mxu0 0.0
    %143 = vmatprep.subr.mxu0 0.0
    %144 = vmatpush1.msra.mxu0 0.0
    %145 = vmatprep.subr.mxu0 0.0
    %146 = vmatpush1.msra.mxu0 0.0
    %147 = vmatprep.subr.mxu0 0.0
    %148 = vmatpush1.msra.mxu0 0.0
    %149 = vmatprep.subr.mxu0 0.0
    %150 = vmatpush1.msra.mxu0 0.0
    %151 = vmatprep.subr.mxu0 0.0
    %152 = vmatpush1.msra.mxu0 0.0
    %153 = vmatprep.subr.mxu0 0.0
    %154 = vmatpush1.msra.mxu0 0.0
    %155 = vmatprep.subr.mxu0 0.0
    %156 = vmatpush1.msra.mxu0 0.0
    %157 = vmatprep.subr.mxu0 0.0
    %158 = vmatpush1.msra.mxu0 0.0
    %159 = vmatprep.subr.mxu0 0.0
    %160 = vmatpush1.msra.mxu0 0.0
    %161 = vmatprep.subr.mxu0 0.0
    %162 = vmatpush1.msra.mxu0 0.0
    %163 = vmatprep.subr.mxu0 0.0
    %164 = vmatpush1.msra.mxu0 0.0
    %165 = vmatprep.subr.mxu0 0.0
    %166 = vmatpush1.msra.mxu0 0.0
    %167 = vmatprep.subr.mxu0 0.0
    %168 = vmatpush1.msra.mxu0 0.0
    %169 = vmatprep.subr.mxu0 0.0
    %170 = vmatpush1.msra.mxu0 0.0
    %171 = vmatprep.subr.mxu0 0.0
    %172 = vmatpush1.msra.mxu0 0.0
    %173 = vmatprep.subr.mxu0 0.0
    %174 = vmatpush1.msra.mxu0 0.0
    %175 = vmatprep.subr.mxu0 0.0
    %176 = vmatpush1.msra.mxu0 0.0
    %177 = vmatprep.subr.mxu0 0.0
    %178 = vmatpush1.msra.mxu0 0.0
    %179 = vmatprep.subr.mxu0 0.0
    %180 = vmatpush1.msra.mxu0 0.0
    %181 = vmatprep.subr.mxu0 0.0
    %182 = vmatpush1.msra.mxu0 0.0
    %183 = vmatprep.subr.mxu0 0.0
    %184 = vmatpush1.msra.mxu0 0.0
    %185 = vmatprep.mubr.f32.mxu0 0.0
    %186 = vmatmul.mubr.f32.gmra.mrb[0].mxu0 %v116
    %v187 = vpop.f32.mrb[0].mxu0
    %v188 = vadd.f32 0.0, %v187
    %v189 = vpop.f32.mrb[0].mxu0
    %190 = vmatprep.mubr.f32.mxu0 0.0
    %191 = vmatmul.mubr.f32.gmra.mrb[0].mxu0 %v119
    %v192 = vpop.f32.mrb[0].mxu0
    %v193 = vadd.f32 0.0, %v192
    %v194 = vpop.f32.mrb[0].mxu0
    %195 = vdwg.mxu0
    %v197 = vsel %vm114, %v112, 0
    %v200 = vsel %vm114, %v113, 0
    %202 = vmatprep.subr.mxu0 0.0
    %203 = vmatpush1.msra.mxu0 %v96
    %204 = vmatprep.subr.mxu0 0.0
    %205 = vmatpush1.msra.mxu0 %v97
    %206 = vmatprep.subr.mxu0 0.0
    %207 = vmatpush1.msra.mxu0 %v98
    %208 = vmatprep.subr.mxu0 0.0
    %209 = vmatpush1.msra.mxu0 %v99
    %210 = vmatprep.subr.mxu0 0.0
    %211 = vmatpush1.msra.mxu0 %v100
    %212 = vmatprep.subr.mxu0 0.0
    %213 = vmatpush1.msra.mxu0 %v101
    %214 = vmatprep.subr.mxu0 0.0
    %215 = vmatpush1.msra.mxu0 0.0
    %216 = vmatprep.subr.mxu0 0.0
    %217 = vmatpush1.msra.mxu0 0.0
    %218 = vmatprep.subr.mxu0 0.0
    %219 = vmatpush1.msra.mxu0 0.0
    %220 = vmatprep.subr.mxu0 0.0
    %221 = vmatpush1.msra.mxu0 0.0
    %222 = vmatprep.subr.mxu0 0.0
    %223 = vmatpush1.msra.mxu0 0.0
    %224 = vmatprep.subr.mxu0 0.0
    %225 = vmatpush1.msra.mxu0 0.0
    %226 = vmatprep.subr.mxu0 0.0
    %227 = vmatpush1.msra.mxu0 0.0
    %228 = vmatprep.subr.mxu0 0.0
    %229 = vmatpush1.msra.mxu0 0.0
    %230 = vmatprep.subr.mxu0 0.0
    %231 = vmatpush1.msra.mxu0 0.0
    %232 = vmatprep.subr.mxu0 0.0
    %233 = vmatpush1.msra.mxu0 0.0
    %234 = vmatprep.subr.mxu0 0.0
    %235 = vmatpush1.msra.mxu0 0.0
    %236 = vmatprep.subr.mxu0 0.0
    %237 = vmatpush1.msra.mxu0 0.0
    %238 = vmatprep.subr.mxu0 0.0
    %239 = vmatpush1.msra.mxu0 0.0
    %240 = vmatprep.subr.mxu0 0.0
    %241 = vmatpush1.msra.mxu0 0.0
    %242 = vmatprep.subr.mxu0 0.0
    %243 = vmatpush1.msra.mxu0 0.0
    %244 = vmatprep.subr.mxu0 0.0
    %245 = vmatpush1.msra.mxu0 0.0
    %246 = vmatprep.subr.mxu0 0.0
    %247 = vmatpush1.msra.mxu0 0.0
    %248 = vmatprep.subr.mxu0 0.0
    %249 = vmatpush1.msra.mxu0 0.0
    %250 = vmatprep.subr.mxu0 0.0
    %251 = vmatpush1.msra.mxu0 0.0
    %252 = vmatprep.subr.mxu0 0.0
    %253 = vmatpush1.msra.mxu0 0.0
    %254 = vmatprep.subr.mxu0 0.0
    %255 = vmatpush1.msra.mxu0 0.0
    %256 = vmatprep.subr.mxu0 0.0
    %257 = vmatpush1.msra.mxu0 0.0
    %258 = vmatprep.subr.mxu0 0.0
    %259 = vmatpush1.msra.mxu0 0.0
    %260 = vmatprep.subr.mxu0 0.0
    %261 = vmatpush1.msra.mxu0 0.0
    %262 = vmatprep.subr.mxu0 0.0
    %263 = vmatpush1.msra.mxu0 0.0
    %264 = vmatprep.subr.mxu0 0.0
    %265 = vmatpush1.msra.mxu0 0.0
    %266 = vmatprep.mubr.f32.mxu0 0.0
    %267 = vmatmul.mubr.f32.gmra.mrb[0].mxu0 %v197
    %v268 = vpop.f32.mrb[0].mxu0
    %v269 = vadd.f32 0.0, %v268
    %v270 = vpop.f32.mrb[0].mxu0
    %271 = vmatprep.mubr.f32.mxu0 0.0
    %272 = vmatmul.mubr.f32.gmra.mrb[0].mxu0 %v200
    %v273 = vpop.f32.mrb[0].mxu0
    %v274 = vadd.f32 0.0, %v273
    %v275 = vpop.f32.mrb[0].mxu0
    %276 = vdwg.mxu0
    %v277 = vsel %vm114, %v106, 0.0
    %278 = vadd.xlane.f32.xlu0 %v277
    %v279 = vpop.xlane.xlu0 %278
    %v280 = vsel %vm114, %v107, 0.0
    %281 = vadd.xlane.f32.xlu0 %v280
    %v282 = vpop.xlane.xlu0 %281
    %v283 = vsel %vm114, %v112, 0.0
    %284 = vadd.xlane.f32.xlu0 %v283
    %v285 = vpop.xlane.xlu0 %284
    %v286 = vsel %vm114, %v113, 0.0
    %287 = vadd.xlane.f32.xlu0 %v286
    %v288 = vpop.xlane.xlu0 %287
    %vm289 = vcmp.gt.f32.partialorder %v279, 0.0
    %vm290 = vcmp.gt.f32.partialorder %v282, 0.0
    %v291 = vmax.f32 %v279, 1.0
    %v292 = vmax.f32 %v282, 1.0
    %v293 = vrcp.pop %v291
    %v294 = vmul.f32 %v285, %v293
    %v295 = vrcp.pop %v292
    %v296 = vmul.f32 %v288, %v295
    %v297 = vsel %vm289, %v294, 0.0
    %v298 = vsel %vm290, %v296, 0.0
    %vm299 = vcmp.eq.s32.totalorder %v52, %v65
    %vm300 = vcmp.eq.s32.totalorder %v53, %v65
    %v301 = vsel %vm299, 1, 0
    %v302 = vsel %vm300, 1, 0
    %v303 = vcvt.s32.f32 %v301
    %v304 = vcvt.s32.f32 %v302
    %v305 = vmin.f32 %v188, 1.0
    %v306 = vmin.f32 %v193, 1.0
    %v307 = vsub.f32 1.0, %v303
    %v308 = vsub.f32 1.0, %v304
    %v309 = vmul.f32 %v305, %v307
    %v310 = vmul.f32 %v306, %v308
    %v311 = vadd.f32 %v309, %v303
    %v312 = vadd.f32 %v310, %v304
    %v313 = vmul.f32 %v269, %v307
    %v314 = vmul.f32 %v274, %v308
    %v315 = vmul.f32 %v297, %v303
    %v316 = vmul.f32 %v298, %v304
    %v317 = vadd.f32 %v313, %v315
    %v318 = vadd.f32 %v314, %v316
    %v319 = vld [vmem:[%s0] sm:$0xff]
    %v320 = vld [vmem:[%s0 + $0x8] sm:$0xff]
    %v321 = vld [vmem:[%s4] sm:$0xff]
    %v322 = vld [vmem:[%s4 + $0x8] sm:$0xff]
    %v323 = vld [vmem:[%s4 + $0x10] sm:$0xff]
    %v324 = vld [vmem:[%s5] sm:$0x7]
    %v325 = vld [vmem:[%s6] sm:$0xf]
    %v326 = vld [vmem:[%s7] sm:$0xff]
    %v327 = vld [vmem:[%s7 + $0x8] sm:$0xff]
    %v328 = vld [vmem:[%s7 + $0x10] sm:$0xff]
    %v329 = vld [vmem:[%s7 + $0x18] sm:$0xff]
    %v330 = vld [vmem:[%s7 + $0x20] sm:$0xff]
    %v331 = vld [vmem:[%s7 + $0x28] sm:$0xff]
    %v332 = vld [vmem:[%s7 + $0x30] sm:$0xff]
    %v333 = vld [vmem:[%s7 + $0x38] sm:$0xff]
    %v334 = vld [vmem:[%s7 + $0x40] sm:$0xff]
    %v335 = vld [vmem:[%s7 + $0x48] sm:$0xff]
    %v336 = vld [vmem:[%s7 + $0x50] sm:$0xff]
    %v337 = vld [vmem:[%s7 + $0x58] sm:$0xff]
    %v338 = vld [vmem:[%s7 + $0x60] sm:$0xff]
    %v339 = vld [vmem:[%s7 + $0x68] sm:$0xff]
    %v340 = vld [vmem:[%s7 + $0x70] sm:$0xff]
    %v341 = vld [vmem:[%s7 + $0x78] sm:$0xff]
    %vm342 = vcmask 64512
    %v344 = vsel %vm342, %v319, 0
    %v347 = vsel %vm342, %v320, 0
    %349 = vmatprep.subr.mxu0 %v322
    %350 = vmatpush1.msra.mxu0 %v321
    %351 = vmatprep.subr.mxu0 0.0
    %352 = vmatpush1.msra.mxu0 0.0
    %353 = vmatprep.subr.mxu0 0.0
    %354 = vmatpush1.msra.mxu0 0.0
    %355 = vmatprep.subr.mxu0 0.0
    %356 = vmatpush1.msra.mxu0 0.0
    %357 = vmatprep.subr.mxu0 0.0
    %358 = vmatpush1.msra.mxu0 0.0
    %359 = vmatprep.subr.mxu0 0.0
    %360 = vmatpush1.msra.mxu0 0.0
    %361 = vmatprep.subr.mxu0 0.0
    %362 = vmatpush1.msra.mxu0 0.0
    %363 = vmatprep.subr.mxu0 0.0
    %364 = vmatpush1.msra.mxu0 0.0
    %365 = vmatprep.subr.mxu0 0.0
    %366 = vmatpush1.msra.mxu0 0.0
    %367 = vmatprep.subr.mxu0 0.0
    %368 = vmatpush1.msra.mxu0 0.0
    %369 = vmatprep.subr.mxu0 0.0
    %370 = vmatpush1.msra.mxu0 0.0
    %371 = vmatprep.subr.mxu0 0.0
    %372 = vmatpush1.msra.mxu0 0.0
    %373 = vmatprep.subr.mxu0 0.0
    %374 = vmatpush1.msra.mxu0 0.0
    %375 = vmatprep.subr.mxu0 0.0
    %376 = vmatpush1.msra.mxu0 0.0
    %377 = vmatprep.subr.mxu0 0.0
    %378 = vmatpush1.msra.mxu0 0.0
    %379 = vmatprep.subr.mxu0 0.0
    %380 = vmatpush1.msra.mxu0 0.0
    %381 = vmatprep.subr.mxu0 0.0
    %382 = vmatpush1.msra.mxu0 0.0
    %383 = vmatprep.subr.mxu0 0.0
    %384 = vmatpush1.msra.mxu0 0.0
    %385 = vmatprep.subr.mxu0 0.0
    %386 = vmatpush1.msra.mxu0 0.0
    %387 = vmatprep.subr.mxu0 0.0
    %388 = vmatpush1.msra.mxu0 0.0
    %389 = vmatprep.subr.mxu0 0.0
    %390 = vmatpush1.msra.mxu0 0.0
    %391 = vmatprep.subr.mxu0 0.0
    %392 = vmatpush1.msra.mxu0 0.0
    %393 = vmatprep.subr.mxu0 0.0
    %394 = vmatpush1.msra.mxu0 0.0
    %395 = vmatprep.subr.mxu0 0.0
    %396 = vmatpush1.msra.mxu0 0.0
    %397 = vmatprep.subr.mxu0 0.0
    %398 = vmatpush1.msra.mxu0 0.0
    %399 = vmatprep.subr.mxu0 0.0
    %400 = vmatpush1.msra.mxu0 0.0
    %401 = vmatprep.subr.mxu0 0.0
    %402 = vmatpush1.msra.mxu0 0.0
    %403 = vmatprep.subr.mxu0 0.0
    %404 = vmatpush1.msra.mxu0 0.0
    %405 = vmatprep.subr.mxu0 0.0
    %406 = vmatpush1.msra.mxu0 0.0
    %407 = vmatprep.subr.mxu0 0.0
    %408 = vmatpush1.msra.mxu0 0.0
    %409 = vmatprep.subr.mxu0 0.0
    %410 = vmatpush1.msra.mxu0 0.0
    %411 = vmatprep.subr.mxu0 0.0
    %412 = vmatpush1.msra.mxu0 0.0
    %413 = vmatprep.mubr.f32.mxu0 0.0
    %414 = vmatmul.mubr.f32.gmra.mrb[0].mxu0 %v344
    %v415 = vpop.f32.mrb[0].mxu0
    %v416 = vadd.f32 0.0, %v415
    %v417 = vpop.f32.mrb[0].mxu0
    %v418 = vadd.f32 0.0, %v417
    %419 = vmatprep.mubr.f32.mxu0 0.0
    %420 = vmatmul.mubr.f32.gmra.mrb[0].mxu0 %v347
    %v421 = vpop.f32.mrb[0].mxu0
    %v422 = vadd.f32 0.0, %v421
    %v423 = vpop.f32.mrb[0].mxu0
    %v424 = vadd.f32 0.0, %v423
    %425 = vdwg.mxu0
    %426 = vmatprep.subr.mxu0 0.0
    %427 = vmatpush1.msra.mxu0 %v323
    %428 = vmatprep.subr.mxu0 0.0
    %429 = vmatpush1.msra.mxu0 0.0
    %430 = vmatprep.subr.mxu0 0.0
    %431 = vmatpush1.msra.mxu0 0.0
    %432 = vmatprep.subr.mxu0 0.0
    %433 = vmatpush1.msra.mxu0 0.0
    %434 = vmatprep.subr.mxu0 0.0
    %435 = vmatpush1.msra.mxu0 0.0
    %436 = vmatprep.subr.mxu0 0.0
    %437 = vmatpush1.msra.mxu0 0.0
    %438 = vmatprep.subr.mxu0 0.0
    %439 = vmatpush1.msra.mxu0 0.0
    %440 = vmatprep.subr.mxu0 0.0
    %441 = vmatpush1.msra.mxu0 0.0
    %442 = vmatprep.subr.mxu0 0.0
    %443 = vmatpush1.msra.mxu0 0.0
    %444 = vmatprep.subr.mxu0 0.0
    %445 = vmatpush1.msra.mxu0 0.0
    %446 = vmatprep.subr.mxu0 0.0
    %447 = vmatpush1.msra.mxu0 0.0
    %448 = vmatprep.subr.mxu0 0.0
    %449 = vmatpush1.msra.mxu0 0.0
    %450 = vmatprep.subr.mxu0 0.0
    %451 = vmatpush1.msra.mxu0 0.0
    %452 = vmatprep.subr.mxu0 0.0
    %453 = vmatpush1.msra.mxu0 0.0
    %454 = vmatprep.subr.mxu0 0.0
    %455 = vmatpush1.msra.mxu0 0.0
    %456 = vmatprep.subr.mxu0 0.0
    %457 = vmatpush1.msra.mxu0 0.0
    %458 = vmatprep.subr.mxu0 0.0
    %459 = vmatpush1.msra.mxu0 0.0
    %460 = vmatprep.subr.mxu0 0.0
    %461 = vmatpush1.msra.mxu0 0.0
    %462 = vmatprep.subr.mxu0 0.0
    %463 = vmatpush1.msra.mxu0 0.0
    %464 = vmatprep.subr.mxu0 0.0
    %465 = vmatpush1.msra.mxu0 0.0
    %466 = vmatprep.subr.mxu0 0.0
    %467 = vmatpush1.msra.mxu0 0.0
    %468 = vmatprep.subr.mxu0 0.0
    %469 = vmatpush1.msra.mxu0 0.0
    %470 = vmatprep.subr.mxu0 0.0
    %471 = vmatpush1.msra.mxu0 0.0
    %472 = vmatprep.subr.mxu0 0.0
    %473 = vmatpush1.msra.mxu0 0.0
    %474 = vmatprep.subr.mxu0 0.0
    %475 = vmatpush1.msra.mxu0 0.0
    %476 = vmatprep.subr.mxu0 0.0
    %477 = vmatpush1.msra.mxu0 0.0
    %478 = vmatprep.subr.mxu0 0.0
    %479 = vmatpush1.msra.mxu0 0.0
    %480 = vmatprep.subr.mxu0 0.0
    %481 = vmatpush1.msra.mxu0 0.0
    %482 = vmatprep.subr.mxu0 0.0
    %483 = vmatpush1.msra.mxu0 0.0
    %484 = vmatprep.subr.mxu0 0.0
    %485 = vmatpush1.msra.mxu0 0.0
    %486 = vmatprep.subr.mxu0 0.0
    %487 = vmatpush1.msra.mxu0 0.0
    %488 = vmatprep.subr.mxu0 0.0
    %489 = vmatpush1.msra.mxu0 0.0
    %490 = vmatprep.mubr.f32.mxu0 0.0
    %491 = vmatmul.mubr.f32.gmra.mrb[0].mxu0 %v344
    %v492 = vpop.f32.mrb[0].mxu0
    %v493 = vadd.f32 0.0, %v492
    %v494 = vpop.f32.mrb[0].mxu0
    %495 = vmatprep.mubr.f32.mxu0 0.0
    %496 = vmatmul.mubr.f32.gmra.mrb[0].mxu0 %v347
    %v497 = vpop.f32.mrb[0].mxu0
    %v498 = vadd.f32 0.0, %v497
    %v499 = vpop.f32.mrb[0].mxu0
    %500 = vdwg.mxu0
    %v501 = vlaneseq
    %v502 = vshrl.u32 %v501, 7
    %v503 = vsub.s32 0, %v502
    %v504 = vrot.slane %v324, %v503
    %v505 = vadd.f32 %v416, %v504
    %v506 = vadd.f32 %v422, %v504
    %v507 = vlaneseq
    %v508 = vshrl.u32 %v507, 7
    %v509 = vsub.s32 1, %v508
    %v510 = vrot.slane %v324, %v509
    %v511 = vadd.f32 %v418, %v510
    %v512 = vadd.f32 %v424, %v510
    %v513 = vlaneseq
    %v514 = vshrl.u32 %v513, 7
    %v515 = vsub.s32 3, %v514
    %v516 = vrot.slane %v325, %v515
    %v517 = vadd.f32 %v493, %v516
    %v518 = vadd.f32 %v498, %v516
    %v521 = vcombine.high %v511, %v511
    %v523 = vunpack.c.l.s4 1966171168
    %v524 = vunpack.c.0.s8 %v523
    %v525 = vlaneseq
    %v526 = vshrl.u32 %v525, 7
    %v527 = vsub.s32 %v524, %v526
    %v528 = vrot.slane %v511, %v527
    %v530 = vunpack.c.l.s4 1966171168
    %v531 = vunpack.c.0.s8 %v530
    %v532 = vlaneseq
    %v533 = vshrl.u32 %v532, 7
    %v534 = vsub.s32 %v531, %v533
    %v535 = vrot.slane %v521, %v534
    %v536 = vcombine.high %v528, %v528
    %v537 = vcombine.high %v535, %v535
    %v539 = vunpack.c.l.s4 1966171168
    %v540 = vunpack.c.0.s8 %v539
    %v541 = vlaneseq
    %v542 = vshrl.u32 %v541, 7
    %v543 = vsub.s32 %v540, %v542
    %v544 = vrot.slane %v528, %v543
    %v546 = vunpack.c.l.s4 1966171168
    %v547 = vunpack.c.0.s8 %v546
    %v548 = vlaneseq
    %v549 = vshrl.u32 %v548, 7
    %v550 = vsub.s32 %v547, %v549
    %v551 = vrot.slane %v535, %v550
    %v553 = vunpack.c.l.s4 1966171168
    %v554 = vunpack.c.0.s8 %v553
    %v555 = vlaneseq
    %v556 = vshrl.u32 %v555, 7
    %v557 = vsub.s32 %v554, %v556
    %v558 = vrot.slane %v536, %v557
    %v560 = vunpack.c.l.s4 1966171168
    %v561 = vunpack.c.0.s8 %v560
    %v562 = vlaneseq
    %v563 = vshrl.u32 %v562, 7
    %v564 = vsub.s32 %v561, %v563
    %v565 = vrot.slane %v537, %v564
    %v566 = vcombine.high %v544, %v544
    %v567 = vcombine.high %v551, %v551
    %v568 = vcombine.high %v558, %v558
    %v569 = vcombine.high %v565, %v565
    %v570 = vcombine.high %v512, %v512
    %v572 = vunpack.c.l.s4 1966171168
    %v573 = vunpack.c.0.s8 %v572
    %v574 = vlaneseq
    %v575 = vshrl.u32 %v574, 7
    %v576 = vsub.s32 %v573, %v575
    %v577 = vrot.slane %v512, %v576
    %v579 = vunpack.c.l.s4 1966171168
    %v580 = vunpack.c.0.s8 %v579
    %v581 = vlaneseq
    %v582 = vshrl.u32 %v581, 7
    %v583 = vsub.s32 %v580, %v582
    %v584 = vrot.slane %v570, %v583
    %v585 = vcombine.high %v577, %v577
    %v586 = vcombine.high %v584, %v584
    %v588 = vunpack.c.l.s4 1966171168
    %v589 = vunpack.c.0.s8 %v588
    %v590 = vlaneseq
    %v591 = vshrl.u32 %v590, 7
    %v592 = vsub.s32 %v589, %v591
    %v593 = vrot.slane %v577, %v592
    %v595 = vunpack.c.l.s4 1966171168
    %v596 = vunpack.c.0.s8 %v595
    %v597 = vlaneseq
    %v598 = vshrl.u32 %v597, 7
    %v599 = vsub.s32 %v596, %v598
    %v600 = vrot.slane %v584, %v599
    %v602 = vunpack.c.l.s4 1966171168
    %v603 = vunpack.c.0.s8 %v602
    %v604 = vlaneseq
    %v605 = vshrl.u32 %v604, 7
    %v606 = vsub.s32 %v603, %v605
    %v607 = vrot.slane %v585, %v606
    %v609 = vunpack.c.l.s4 1966171168
    %v610 = vunpack.c.0.s8 %v609
    %v611 = vlaneseq
    %v612 = vshrl.u32 %v611, 7
    %v613 = vsub.s32 %v610, %v612
    %v614 = vrot.slane %v586, %v613
    %v615 = vcombine.high %v593, %v593
    %v616 = vcombine.high %v600, %v600
    %v617 = vcombine.high %v607, %v607
    %v618 = vcombine.high %v614, %v614
    %v619 = vlaneseq
    %v620 = vshrl.u32 %v619, 7
    %v621 = vsub.s32 0, %v620
    %v622 = vrot.slane %v544, %v621
    %v623 = vlaneseq
    %v624 = vshrl.u32 %v623, 7
    %v625 = vsub.s32 0, %v624
    %v626 = vrot.slane %v558, %v625
    %v627 = vlaneseq
    %v628 = vshrl.u32 %v627, 7
    %v629 = vsub.s32 0, %v628
    %v630 = vrot.slane %v566, %v629
    %v631 = vlaneseq
    %v632 = vshrl.u32 %v631, 7
    %v633 = vsub.s32 0, %v632
    %v634 = vrot.slane %v568, %v633
    %v635 = vlaneseq
    %v636 = vshrl.u32 %v635, 7
    %v637 = vsub.s32 0, %v636
    %v638 = vrot.slane %v551, %v637
    %v639 = vlaneseq
    %v640 = vshrl.u32 %v639, 7
    %v641 = vsub.s32 0, %v640
    %v642 = vrot.slane %v565, %v641
    %v643 = vlaneseq
    %v644 = vshrl.u32 %v643, 7
    %v645 = vsub.s32 0, %v644
    %v646 = vrot.slane %v567, %v645
    %v647 = vlaneseq
    %v648 = vshrl.u32 %v647, 7
    %v649 = vsub.s32 0, %v648
    %v650 = vrot.slane %v569, %v649
    %v651 = vlaneseq
    %v652 = vshrl.u32 %v651, 7
    %v653 = vsub.s32 0, %v652
    %v654 = vrot.slane %v593, %v653
    %v655 = vlaneseq
    %v656 = vshrl.u32 %v655, 7
    %v657 = vsub.s32 0, %v656
    %v658 = vrot.slane %v607, %v657
    %v659 = vlaneseq
    %v660 = vshrl.u32 %v659, 7
    %v661 = vsub.s32 0, %v660
    %v662 = vrot.slane %v615, %v661
    %v663 = vlaneseq
    %v664 = vshrl.u32 %v663, 7
    %v665 = vsub.s32 0, %v664
    %v666 = vrot.slane %v617, %v665
    %v667 = vlaneseq
    %v668 = vshrl.u32 %v667, 7
    %v669 = vsub.s32 0, %v668
    %v670 = vrot.slane %v600, %v669
    %v671 = vlaneseq
    %v672 = vshrl.u32 %v671, 7
    %v673 = vsub.s32 0, %v672
    %v674 = vrot.slane %v614, %v673
    %v675 = vlaneseq
    %v676 = vshrl.u32 %v675, 7
    %v677 = vsub.s32 0, %v676
    %v678 = vrot.slane %v616, %v677
    %v679 = vlaneseq
    %v680 = vshrl.u32 %v679, 7
    %v681 = vsub.s32 0, %v680
    %v682 = vrot.slane %v618, %v681
    %v699 = vadd.f32 %v622, %v505
    %v700 = vadd.f32 %v622, %v506
    %v701 = vadd.f32 %v626, %v505
    %v702 = vadd.f32 %v626, %v506
    %v703 = vadd.f32 %v630, %v505
    %v704 = vadd.f32 %v630, %v506
    %v705 = vadd.f32 %v634, %v505
    %v706 = vadd.f32 %v634, %v506
    %v707 = vadd.f32 %v638, %v505
    %v708 = vadd.f32 %v638, %v506
    %v709 = vadd.f32 %v642, %v505
    %v710 = vadd.f32 %v642, %v506
    %v711 = vadd.f32 %v646, %v505
    %v712 = vadd.f32 %v646, %v506
    %v713 = vadd.f32 %v650, %v505
    %v714 = vadd.f32 %v650, %v506
    %v715 = vadd.f32 %v654, %v505
    %v716 = vadd.f32 %v654, %v506
    %v717 = vadd.f32 %v658, %v505
    %v718 = vadd.f32 %v658, %v506
    %v719 = vadd.f32 %v662, %v505
    %v720 = vadd.f32 %v662, %v506
    %v721 = vadd.f32 %v666, %v505
    %v722 = vadd.f32 %v666, %v506
    %v723 = vadd.f32 %v670, %v505
    %v724 = vadd.f32 %v670, %v506
    %v725 = vadd.f32 %v674, %v505
    %v726 = vadd.f32 %v674, %v506
    %v727 = vadd.f32 %v678, %v505
    %v728 = vadd.f32 %v678, %v506
    %v729 = vadd.f32 %v682, %v505
    %v730 = vadd.f32 %v682, %v506
    %v731 = vlaneseq
    %v732 = vshrl.u32 %v731, 7
    %v733 = vsub.s32 0, %v732
    %v734 = vrot.slane %v317, %v733
    %736 = vbcast.lane.b32.xlu0 %v734, 256
    %v737 = vpop.permute.xlu0 %736
    %s739 = sor.u32 256, 8
    %740 = vbcast.lane.b32.xlu0 %v734, %s739
    %v741 = vpop.permute.xlu0 %740
    %v742 = vlaneseq
    %v743 = vshrl.u32 %v742, 7
    %v744 = vsub.s32 1, %v743
    %v745 = vrot.slane %v317, %v744
    %747 = vbcast.lane.b32.xlu0 %v745, 256
    %v748 = vpop.permute.xlu0 %747
    %s750 = sor.u32 256, 8
    %751 = vbcast.lane.b32.xlu0 %v745, %s750
    %v752 = vpop.permute.xlu0 %751
    %v753 = vlaneseq
    %v754 = vshrl.u32 %v753, 7
    %v755 = vsub.s32 2, %v754
    %v756 = vrot.slane %v317, %v755
    %758 = vbcast.lane.b32.xlu0 %v756, 256
    %v759 = vpop.permute.xlu0 %758
    %s761 = sor.u32 256, 8
    %762 = vbcast.lane.b32.xlu0 %v756, %s761
    %v763 = vpop.permute.xlu0 %762
    %v764 = vlaneseq
    %v765 = vshrl.u32 %v764, 7
    %v766 = vsub.s32 3, %v765
    %v767 = vrot.slane %v317, %v766
    %769 = vbcast.lane.b32.xlu0 %v767, 256
    %v770 = vpop.permute.xlu0 %769
    %s772 = sor.u32 256, 8
    %773 = vbcast.lane.b32.xlu0 %v767, %s772
    %v774 = vpop.permute.xlu0 %773
    %v775 = vlaneseq
    %v776 = vshrl.u32 %v775, 7
    %v777 = vsub.s32 4, %v776
    %v778 = vrot.slane %v317, %v777
    %780 = vbcast.lane.b32.xlu0 %v778, 256
    %v781 = vpop.permute.xlu0 %780
    %s783 = sor.u32 256, 8
    %784 = vbcast.lane.b32.xlu0 %v778, %s783
    %v785 = vpop.permute.xlu0 %784
    %v786 = vlaneseq
    %v787 = vshrl.u32 %v786, 7
    %v788 = vsub.s32 5, %v787
    %v789 = vrot.slane %v317, %v788
    %791 = vbcast.lane.b32.xlu0 %v789, 256
    %v792 = vpop.permute.xlu0 %791
    %s794 = sor.u32 256, 8
    %795 = vbcast.lane.b32.xlu0 %v789, %s794
    %v796 = vpop.permute.xlu0 %795
    %v797 = vlaneseq
    %v798 = vshrl.u32 %v797, 7
    %v799 = vsub.s32 6, %v798
    %v800 = vrot.slane %v317, %v799
    %802 = vbcast.lane.b32.xlu0 %v800, 256
    %v803 = vpop.permute.xlu0 %802
    %s805 = sor.u32 256, 8
    %806 = vbcast.lane.b32.xlu0 %v800, %s805
    %v807 = vpop.permute.xlu0 %806
    %v808 = vlaneseq
    %v809 = vshrl.u32 %v808, 7
    %v810 = vsub.s32 7, %v809
    %v811 = vrot.slane %v317, %v810
    %813 = vbcast.lane.b32.xlu0 %v811, 256
    %v814 = vpop.permute.xlu0 %813
    %s816 = sor.u32 256, 8
    %817 = vbcast.lane.b32.xlu0 %v811, %s816
    %v818 = vpop.permute.xlu0 %817
    %v819 = vlaneseq
    %v820 = vshrl.u32 %v819, 7
    %v821 = vsub.s32 0, %v820
    %v822 = vrot.slane %v318, %v821
    %824 = vbcast.lane.b32.xlu0 %v822, 256
    %v825 = vpop.permute.xlu0 %824
    %s827 = sor.u32 256, 8
    %828 = vbcast.lane.b32.xlu0 %v822, %s827
    %v829 = vpop.permute.xlu0 %828
    %v830 = vlaneseq
    %v831 = vshrl.u32 %v830, 7
    %v832 = vsub.s32 1, %v831
    %v833 = vrot.slane %v318, %v832
    %835 = vbcast.lane.b32.xlu0 %v833, 256
    %v836 = vpop.permute.xlu0 %835
    %s838 = sor.u32 256, 8
    %839 = vbcast.lane.b32.xlu0 %v833, %s838
    %v840 = vpop.permute.xlu0 %839
    %v841 = vlaneseq
    %v842 = vshrl.u32 %v841, 7
    %v843 = vsub.s32 2, %v842
    %v844 = vrot.slane %v318, %v843
    %846 = vbcast.lane.b32.xlu0 %v844, 256
    %v847 = vpop.permute.xlu0 %846
    %s849 = sor.u32 256, 8
    %850 = vbcast.lane.b32.xlu0 %v844, %s849
    %v851 = vpop.permute.xlu0 %850
    %v852 = vlaneseq
    %v853 = vshrl.u32 %v852, 7
    %v854 = vsub.s32 3, %v853
    %v855 = vrot.slane %v318, %v854
    %857 = vbcast.lane.b32.xlu0 %v855, 256
    %v858 = vpop.permute.xlu0 %857
    %s860 = sor.u32 256, 8
    %861 = vbcast.lane.b32.xlu0 %v855, %s860
    %v862 = vpop.permute.xlu0 %861
    %v863 = vlaneseq
    %v864 = vshrl.u32 %v863, 7
    %v865 = vsub.s32 4, %v864
    %v866 = vrot.slane %v318, %v865
    %868 = vbcast.lane.b32.xlu0 %v866, 256
    %v869 = vpop.permute.xlu0 %868
    %s871 = sor.u32 256, 8
    %872 = vbcast.lane.b32.xlu0 %v866, %s871
    %v873 = vpop.permute.xlu0 %872
    %v874 = vlaneseq
    %v875 = vshrl.u32 %v874, 7
    %v876 = vsub.s32 5, %v875
    %v877 = vrot.slane %v318, %v876
    %879 = vbcast.lane.b32.xlu0 %v877, 256
    %v880 = vpop.permute.xlu0 %879
    %s882 = sor.u32 256, 8
    %883 = vbcast.lane.b32.xlu0 %v877, %s882
    %v884 = vpop.permute.xlu0 %883
    %v885 = vlaneseq
    %v886 = vshrl.u32 %v885, 7
    %v887 = vsub.s32 6, %v886
    %v888 = vrot.slane %v318, %v887
    %890 = vbcast.lane.b32.xlu0 %v888, 256
    %v891 = vpop.permute.xlu0 %890
    %s893 = sor.u32 256, 8
    %894 = vbcast.lane.b32.xlu0 %v888, %s893
    %v895 = vpop.permute.xlu0 %894
    %v896 = vlaneseq
    %v897 = vshrl.u32 %v896, 7
    %v898 = vsub.s32 7, %v897
    %v899 = vrot.slane %v318, %v898
    %901 = vbcast.lane.b32.xlu0 %v899, 256
    %v902 = vpop.permute.xlu0 %901
    %s904 = sor.u32 256, 8
    %905 = vbcast.lane.b32.xlu0 %v899, %s904
    %v906 = vpop.permute.xlu0 %905
    %v907 = vlaneseq
    %v908 = vshrl.u32 %v907, 7
    %v909 = vsub.s32 2, %v908
    %v910 = vrot.slane %v324, %v909
    %v911 = vmul.f32 %v737, %v910
    %v912 = vmul.f32 %v741, %v910
    %v913 = vmul.f32 %v748, %v910
    %v914 = vmul.f32 %v752, %v910
    %v915 = vmul.f32 %v759, %v910
    %v916 = vmul.f32 %v763, %v910
    %v917 = vmul.f32 %v770, %v910
    %v918 = vmul.f32 %v774, %v910
    %v919 = vmul.f32 %v781, %v910
    %v920 = vmul.f32 %v785, %v910
    %v921 = vmul.f32 %v792, %v910
    %v922 = vmul.f32 %v796, %v910
    %v923 = vmul.f32 %v803, %v910
    %v924 = vmul.f32 %v807, %v910
    %v925 = vmul.f32 %v814, %v910
    %v926 = vmul.f32 %v818, %v910
    %v927 = vmul.f32 %v825, %v910
    %v928 = vmul.f32 %v829, %v910
    %v929 = vmul.f32 %v836, %v910
    %v930 = vmul.f32 %v840, %v910
    %v931 = vmul.f32 %v847, %v910
    %v932 = vmul.f32 %v851, %v910
    %v933 = vmul.f32 %v858, %v910
    %v934 = vmul.f32 %v862, %v910
    %v935 = vmul.f32 %v869, %v910
    %v936 = vmul.f32 %v873, %v910
    %v937 = vmul.f32 %v880, %v910
    %v938 = vmul.f32 %v884, %v910
    %v939 = vmul.f32 %v891, %v910
    %v940 = vmul.f32 %v895, %v910
    %v941 = vmul.f32 %v902, %v910
    %v942 = vmul.f32 %v906, %v910
    %v943 = vadd.f32 %v699, %v911
    %v944 = vadd.f32 %v700, %v912
    %v945 = vadd.f32 %v701, %v913
    %v946 = vadd.f32 %v702, %v914
    %v947 = vadd.f32 %v703, %v915
    %v948 = vadd.f32 %v704, %v916
    %v949 = vadd.f32 %v705, %v917
    %v950 = vadd.f32 %v706, %v918
    %v951 = vadd.f32 %v707, %v919
    %v952 = vadd.f32 %v708, %v920
    %v953 = vadd.f32 %v709, %v921
    %v954 = vadd.f32 %v710, %v922
    %v955 = vadd.f32 %v711, %v923
    %v956 = vadd.f32 %v712, %v924
    %v957 = vadd.f32 %v713, %v925
    %v958 = vadd.f32 %v714, %v926
    %v959 = vadd.f32 %v715, %v927
    %v960 = vadd.f32 %v716, %v928
    %v961 = vadd.f32 %v717, %v929
    %v962 = vadd.f32 %v718, %v930
    %v963 = vadd.f32 %v719, %v931
    %v964 = vadd.f32 %v720, %v932
    %v965 = vadd.f32 %v721, %v933
    %v966 = vadd.f32 %v722, %v934
    %v967 = vadd.f32 %v723, %v935
    %v968 = vadd.f32 %v724, %v936
    %v969 = vadd.f32 %v725, %v937
    %v970 = vadd.f32 %v726, %v938
    %v971 = vadd.f32 %v727, %v939
    %v972 = vadd.f32 %v728, %v940
    %v973 = vadd.f32 %v729, %v941
    %v974 = vadd.f32 %v730, %v942
    %v975 = vmul.f32 %v943, 0.2
    %v976 = vmul.f32 %v944, 0.2
    %v977 = vmul.f32 %v945, 0.2
    %v978 = vmul.f32 %v946, 0.2
    %v979 = vmul.f32 %v947, 0.2
    %v980 = vmul.f32 %v948, 0.2
    %v981 = vmul.f32 %v949, 0.2
    %v982 = vmul.f32 %v950, 0.2
    %v983 = vmul.f32 %v951, 0.2
    %v984 = vmul.f32 %v952, 0.2
    %v985 = vmul.f32 %v953, 0.2
    %v986 = vmul.f32 %v954, 0.2
    %v987 = vmul.f32 %v955, 0.2
    %v988 = vmul.f32 %v956, 0.2
    %v989 = vmul.f32 %v957, 0.2
    %v990 = vmul.f32 %v958, 0.2
    %v991 = vmul.f32 %v959, 0.2
    %v992 = vmul.f32 %v960, 0.2
    %v993 = vmul.f32 %v961, 0.2
    %v994 = vmul.f32 %v962, 0.2
    %v995 = vmul.f32 %v963, 0.2
    %v996 = vmul.f32 %v964, 0.2
    %v997 = vmul.f32 %v965, 0.2
    %v998 = vmul.f32 %v966, 0.2
    %v999 = vmul.f32 %v967, 0.2
    %v1000 = vmul.f32 %v968, 0.2
    %v1001 = vmul.f32 %v969, 0.2
    %v1002 = vmul.f32 %v970, 0.2
    %v1003 = vmul.f32 %v971, 0.2
    %v1004 = vmul.f32 %v972, 0.2
    %v1005 = vmul.f32 %v973, 0.2
    %v1006 = vmul.f32 %v974, 0.2
    %v1007 = vmax.f32 %v943, %v975
    %v1008 = vmax.f32 %v944, %v976
    %v1009 = vmax.f32 %v945, %v977
    %v1010 = vmax.f32 %v946, %v978
    %v1011 = vmax.f32 %v947, %v979
    %v1012 = vmax.f32 %v948, %v980
    %v1013 = vmax.f32 %v949, %v981
    %v1014 = vmax.f32 %v950, %v982
    %v1015 = vmax.f32 %v951, %v983
    %v1016 = vmax.f32 %v952, %v984
    %v1017 = vmax.f32 %v953, %v985
    %v1018 = vmax.f32 %v954, %v986
    %v1019 = vmax.f32 %v955, %v987
    %v1020 = vmax.f32 %v956, %v988
    %v1021 = vmax.f32 %v957, %v989
    %v1022 = vmax.f32 %v958, %v990
    %v1023 = vmax.f32 %v959, %v991
    %v1024 = vmax.f32 %v960, %v992
    %v1025 = vmax.f32 %v961, %v993
    %v1026 = vmax.f32 %v962, %v994
    %v1027 = vmax.f32 %v963, %v995
    %v1028 = vmax.f32 %v964, %v996
    %v1029 = vmax.f32 %v965, %v997
    %v1030 = vmax.f32 %v966, %v998
    %v1031 = vmax.f32 %v967, %v999
    %v1032 = vmax.f32 %v968, %v1000
    %v1033 = vmax.f32 %v969, %v1001
    %v1034 = vmax.f32 %v970, %v1002
    %v1035 = vmax.f32 %v971, %v1003
    %v1036 = vmax.f32 %v972, %v1004
    %v1037 = vmax.f32 %v973, %v1005
    %v1038 = vmax.f32 %v974, %v1006
    %1039 = vmatprep.subr.mxu0 0.0
    %1040 = vmatpush1.msra.mxu0 %v326
    %1041 = vmatprep.subr.mxu0 0.0
    %1042 = vmatpush1.msra.mxu0 %v327
    %1043 = vmatprep.subr.mxu0 0.0
    %1044 = vmatpush1.msra.mxu0 %v328
    %1045 = vmatprep.subr.mxu0 0.0
    %1046 = vmatpush1.msra.mxu0 %v329
    %1047 = vmatprep.subr.mxu0 0.0
    %1048 = vmatpush1.msra.mxu0 %v330
    %1049 = vmatprep.subr.mxu0 0.0
    %1050 = vmatpush1.msra.mxu0 %v331
    %1051 = vmatprep.subr.mxu0 0.0
    %1052 = vmatpush1.msra.mxu0 %v332
    %1053 = vmatprep.subr.mxu0 0.0
    %1054 = vmatpush1.msra.mxu0 %v333
    %1055 = vmatprep.subr.mxu0 0.0
    %1056 = vmatpush1.msra.mxu0 %v334
    %1057 = vmatprep.subr.mxu0 0.0
    %1058 = vmatpush1.msra.mxu0 %v335
    %1059 = vmatprep.subr.mxu0 0.0
    %1060 = vmatpush1.msra.mxu0 %v336
    %1061 = vmatprep.subr.mxu0 0.0
    %1062 = vmatpush1.msra.mxu0 %v337
    %1063 = vmatprep.subr.mxu0 0.0
    %1064 = vmatpush1.msra.mxu0 %v338
    %1065 = vmatprep.subr.mxu0 0.0
    %1066 = vmatpush1.msra.mxu0 %v339
    %1067 = vmatprep.subr.mxu0 0.0
    %1068 = vmatpush1.msra.mxu0 %v340
    %1069 = vmatprep.subr.mxu0 0.0
    %1070 = vmatpush1.msra.mxu0 %v341
    %1071 = vmatprep.subr.mxu0 0.0
    %1072 = vmatpush1.msra.mxu0 0.0
    %1073 = vmatprep.subr.mxu0 0.0
    %1074 = vmatpush1.msra.mxu0 0.0
    %1075 = vmatprep.subr.mxu0 0.0
    %1076 = vmatpush1.msra.mxu0 0.0
    %1077 = vmatprep.subr.mxu0 0.0
    %1078 = vmatpush1.msra.mxu0 0.0
    %1079 = vmatprep.subr.mxu0 0.0
    %1080 = vmatpush1.msra.mxu0 0.0
    %1081 = vmatprep.subr.mxu0 0.0
    %1082 = vmatpush1.msra.mxu0 0.0
    %1083 = vmatprep.subr.mxu0 0.0
    %1084 = vmatpush1.msra.mxu0 0.0
    %1085 = vmatprep.subr.mxu0 0.0
    %1086 = vmatpush1.msra.mxu0 0.0
    %1087 = vmatprep.subr.mxu0 0.0
    %1088 = vmatpush1.msra.mxu0 0.0
    %1089 = vmatprep.subr.mxu0 0.0
    %1090 = vmatpush1.msra.mxu0 0.0
    %1091 = vmatprep.subr.mxu0 0.0
    %1092 = vmatpush1.msra.mxu0 0.0
    %1093 = vmatprep.subr.mxu0 0.0
    %1094 = vmatpush1.msra.mxu0 0.0
    %1095 = vmatprep.subr.mxu0 0.0
    %1096 = vmatpush1.msra.mxu0 0.0
    %1097 = vmatprep.subr.mxu0 0.0
    %1098 = vmatpush1.msra.mxu0 0.0
    %1099 = vmatprep.subr.mxu0 0.0
    %1100 = vmatpush1.msra.mxu0 0.0
    %1101 = vmatprep.subr.mxu0 0.0
    %1102 = vmatpush1.msra.mxu0 0.0
    %1103 = vmatprep.mubr.f32.mxu0 0.0
    %1104 = vmatmul.mubr.f32.gmra.mrb[0].mxu0 %v1007
    %v1105 = vpop.f32.mrb[0].mxu0
    %v1106 = vadd.f32 0.0, %v1105
    %v1107 = vpop.f32.mrb[0].mxu0
    %1108 = vmatprep.mubr.f32.mxu0 0.0
    %1109 = vmatmul.mubr.f32.gmra.mrb[0].mxu0 %v1008
    %v1110 = vpop.f32.mrb[0].mxu0
    %v1111 = vadd.f32 0.0, %v1110
    %v1112 = vpop.f32.mrb[0].mxu0
    %1113 = vmatprep.mubr.f32.mxu0 0.0
    %1114 = vmatmul.mubr.f32.gmra.mrb[0].mxu0 %v1009
    %v1115 = vpop.f32.mrb[0].mxu0
    %v1116 = vadd.f32 0.0, %v1115
    %v1117 = vpop.f32.mrb[0].mxu0
    %1118 = vmatprep.mubr.f32.mxu0 0.0
    %1119 = vmatmul.mubr.f32.gmra.mrb[0].mxu0 %v1010
    %v1120 = vpop.f32.mrb[0].mxu0
    %v1121 = vadd.f32 0.0, %v1120
    %v1122 = vpop.f32.mrb[0].mxu0
    %1123 = vmatprep.mubr.f32.mxu0 0.0
    %1124 = vmatmul.mubr.f32.gmra.mrb[0].mxu0 %v1011
    %v1125 = vpop.f32.mrb[0].mxu0
    %v1126 = vadd.f32 0.0, %v1125
    %v1127 = vpop.f32.mrb[0].mxu0
    %1128 = vmatprep.mubr.f32.mxu0 0.0
    %1129 = vmatmul.mubr.f32.gmra.mrb[0].mxu0 %v1012
    %v1130 = vpop.f32.mrb[0].mxu0
    %v1131 = vadd.f32 0.0, %v1130
    %v1132 = vpop.f32.mrb[0].mxu0
    %1133 = vmatprep.mubr.f32.mxu0 0.0
    %1134 = vmatmul.mubr.f32.gmra.mrb[0].mxu0 %v1013
    %v1135 = vpop.f32.mrb[0].mxu0
    %v1136 = vadd.f32 0.0, %v1135
    %v1137 = vpop.f32.mrb[0].mxu0
    %1138 = vmatprep.mubr.f32.mxu0 0.0
    %1139 = vmatmul.mubr.f32.gmra.mrb[0].mxu0 %v1014
    %v1140 = vpop.f32.mrb[0].mxu0
    %v1141 = vadd.f32 0.0, %v1140
    %v1142 = vpop.f32.mrb[0].mxu0
    %1143 = vmatprep.mubr.f32.mxu0 0.0
    %1144 = vmatmul.mubr.f32.gmra.mrb[0].mxu0 %v1015
    %v1145 = vpop.f32.mrb[0].mxu0
    %v1146 = vadd.f32 0.0, %v1145
    %v1147 = vpop.f32.mrb[0].mxu0
    %1148 = vmatprep.mubr.f32.mxu0 0.0
    %1149 = vmatmul.mubr.f32.gmra.mrb[0].mxu0 %v1016
    %v1150 = vpop.f32.mrb[0].mxu0
    %v1151 = vadd.f32 0.0, %v1150
    %v1152 = vpop.f32.mrb[0].mxu0
    %1153 = vmatprep.mubr.f32.mxu0 0.0
    %1154 = vmatmul.mubr.f32.gmra.mrb[0].mxu0 %v1017
    %v1155 = vpop.f32.mrb[0].mxu0
    %v1156 = vadd.f32 0.0, %v1155
    %v1157 = vpop.f32.mrb[0].mxu0
    %1158 = vmatprep.mubr.f32.mxu0 0.0
    %1159 = vmatmul.mubr.f32.gmra.mrb[0].mxu0 %v1018
    %v1160 = vpop.f32.mrb[0].mxu0
    %v1161 = vadd.f32 0.0, %v1160
    %v1162 = vpop.f32.mrb[0].mxu0
    %1163 = vmatprep.mubr.f32.mxu0 0.0
    %1164 = vmatmul.mubr.f32.gmra.mrb[0].mxu0 %v1019
    %v1165 = vpop.f32.mrb[0].mxu0
    %v1166 = vadd.f32 0.0, %v1165
    %v1167 = vpop.f32.mrb[0].mxu0
    %1168 = vmatprep.mubr.f32.mxu0 0.0
    %1169 = vmatmul.mubr.f32.gmra.mrb[0].mxu0 %v1020
    %v1170 = vpop.f32.mrb[0].mxu0
    %v1171 = vadd.f32 0.0, %v1170
    %v1172 = vpop.f32.mrb[0].mxu0
    %1173 = vmatprep.mubr.f32.mxu0 0.0
    %1174 = vmatmul.mubr.f32.gmra.mrb[0].mxu0 %v1021
    %v1175 = vpop.f32.mrb[0].mxu0
    %v1176 = vadd.f32 0.0, %v1175
    %v1177 = vpop.f32.mrb[0].mxu0
    %1178 = vmatprep.mubr.f32.mxu0 0.0
    %1179 = vmatmul.mubr.f32.gmra.mrb[0].mxu0 %v1022
    %v1180 = vpop.f32.mrb[0].mxu0
    %v1181 = vadd.f32 0.0, %v1180
    %v1182 = vpop.f32.mrb[0].mxu0
    %1183 = vmatprep.mubr.f32.mxu0 0.0
    %1184 = vmatmul.mubr.f32.gmra.mrb[0].mxu0 %v1023
    %v1185 = vpop.f32.mrb[0].mxu0
    %v1186 = vadd.f32 0.0, %v1185
    %v1187 = vpop.f32.mrb[0].mxu0
    %1188 = vmatprep.mubr.f32.mxu0 0.0
    %1189 = vmatmul.mubr.f32.gmra.mrb[0].mxu0 %v1024
    %v1190 = vpop.f32.mrb[0].mxu0
    %v1191 = vadd.f32 0.0, %v1190
    %v1192 = vpop.f32.mrb[0].mxu0
    %1193 = vmatprep.mubr.f32.mxu0 0.0
    %1194 = vmatmul.mubr.f32.gmra.mrb[0].mxu0 %v1025
    %v1195 = vpop.f32.mrb[0].mxu0
    %v1196 = vadd.f32 0.0, %v1195
    %v1197 = vpop.f32.mrb[0].mxu0
    %1198 = vmatprep.mubr.f32.mxu0 0.0
    %1199 = vmatmul.mubr.f32.gmra.mrb[0].mxu0 %v1026
    %v1200 = vpop.f32.mrb[0].mxu0
    %v1201 = vadd.f32 0.0, %v1200
    %v1202 = vpop.f32.mrb[0].mxu0
    %1203 = vmatprep.mubr.f32.mxu0 0.0
    %1204 = vmatmul.mubr.f32.gmra.mrb[0].mxu0 %v1027
    %v1205 = vpop.f32.mrb[0].mxu0
    %v1206 = vadd.f32 0.0, %v1205
    %v1207 = vpop.f32.mrb[0].mxu0
    %1208 = vmatprep.mubr.f32.mxu0 0.0
    %1209 = vmatmul.mubr.f32.gmra.mrb[0].mxu0 %v1028
    %v1210 = vpop.f32.mrb[0].mxu0
    %v1211 = vadd.f32 0.0, %v1210
    %v1212 = vpop.f32.mrb[0].mxu0
    %1213 = vmatprep.mubr.f32.mxu0 0.0
    %1214 = vmatmul.mubr.f32.gmra.mrb[0].mxu0 %v1029
    %v1215 = vpop.f32.mrb[0].mxu0
    %v1216 = vadd.f32 0.0, %v1215
    %v1217 = vpop.f32.mrb[0].mxu0
    %1218 = vmatprep.mubr.f32.mxu0 0.0
    %1219 = vmatmul.mubr.f32.gmra.mrb[0].mxu0 %v1030
    %v1220 = vpop.f32.mrb[0].mxu0
    %v1221 = vadd.f32 0.0, %v1220
    %v1222 = vpop.f32.mrb[0].mxu0
    %1223 = vmatprep.mubr.f32.mxu0 0.0
    %1224 = vmatmul.mubr.f32.gmra.mrb[0].mxu0 %v1031
    %v1225 = vpop.f32.mrb[0].mxu0
    %v1226 = vadd.f32 0.0, %v1225
    %v1227 = vpop.f32.mrb[0].mxu0
    %1228 = vmatprep.mubr.f32.mxu0 0.0
    %1229 = vmatmul.mubr.f32.gmra.mrb[0].mxu0 %v1032
    %v1230 = vpop.f32.mrb[0].mxu0
    %v1231 = vadd.f32 0.0, %v1230
    %v1232 = vpop.f32.mrb[0].mxu0
    %1233 = vmatprep.mubr.f32.mxu0 0.0
    %1234 = vmatmul.mubr.f32.gmra.mrb[0].mxu0 %v1033
    %v1235 = vpop.f32.mrb[0].mxu0
    %v1236 = vadd.f32 0.0, %v1235
    %v1237 = vpop.f32.mrb[0].mxu0
    %1238 = vmatprep.mubr.f32.mxu0 0.0
    %1239 = vmatmul.mubr.f32.gmra.mrb[0].mxu0 %v1034
    %v1240 = vpop.f32.mrb[0].mxu0
    %v1241 = vadd.f32 0.0, %v1240
    %v1242 = vpop.f32.mrb[0].mxu0
    %1243 = vmatprep.mubr.f32.mxu0 0.0
    %1244 = vmatmul.mubr.f32.gmra.mrb[0].mxu0 %v1035
    %v1245 = vpop.f32.mrb[0].mxu0
    %v1246 = vadd.f32 0.0, %v1245
    %v1247 = vpop.f32.mrb[0].mxu0
    %1248 = vmatprep.mubr.f32.mxu0 0.0
    %1249 = vmatmul.mubr.f32.gmra.mrb[0].mxu0 %v1036
    %v1250 = vpop.f32.mrb[0].mxu0
    %v1251 = vadd.f32 0.0, %v1250
    %v1252 = vpop.f32.mrb[0].mxu0
    %1253 = vmatprep.mubr.f32.mxu0 0.0
    %1254 = vmatmul.mubr.f32.gmra.mrb[0].mxu0 %v1037
    %v1255 = vpop.f32.mrb[0].mxu0
    %v1256 = vadd.f32 0.0, %v1255
    %v1257 = vpop.f32.mrb[0].mxu0
    %1258 = vmatprep.mubr.f32.mxu0 0.0
    %1259 = vmatmul.mubr.f32.gmra.mrb[0].mxu0 %v1038
    %v1260 = vpop.f32.mrb[0].mxu0
    %v1261 = vadd.f32 0.0, %v1260
    %v1262 = vpop.f32.mrb[0].mxu0
    %1263 = vdwg.mxu0
    %v1264 = vlaneseq
    %v1265 = vshrl.u32 %v1264, 7
    %v1266 = vsub.s32 0, %v1265
    %v1267 = vrot.slane %v311, %v1266
    %1269 = vbcast.lane.b32.xlu0 %v1267, 256
    %v1270 = vpop.permute.xlu0 %1269
    %s1272 = sor.u32 256, 8
    %1273 = vbcast.lane.b32.xlu0 %v1267, %s1272
    %v1274 = vpop.permute.xlu0 %1273
    %v1275 = vlaneseq
    %v1276 = vshrl.u32 %v1275, 7
    %v1277 = vsub.s32 1, %v1276
    %v1278 = vrot.slane %v311, %v1277
    %1280 = vbcast.lane.b32.xlu0 %v1278, 256
    %v1281 = vpop.permute.xlu0 %1280
    %s1283 = sor.u32 256, 8
    %1284 = vbcast.lane.b32.xlu0 %v1278, %s1283
    %v1285 = vpop.permute.xlu0 %1284
    %v1286 = vlaneseq
    %v1287 = vshrl.u32 %v1286, 7
    %v1288 = vsub.s32 2, %v1287
    %v1289 = vrot.slane %v311, %v1288
    %1291 = vbcast.lane.b32.xlu0 %v1289, 256
    %v1292 = vpop.permute.xlu0 %1291
    %s1294 = sor.u32 256, 8
    %1295 = vbcast.lane.b32.xlu0 %v1289, %s1294
    %v1296 = vpop.permute.xlu0 %1295
    %v1297 = vlaneseq
    %v1298 = vshrl.u32 %v1297, 7
    %v1299 = vsub.s32 3, %v1298
    %v1300 = vrot.slane %v311, %v1299
    %1302 = vbcast.lane.b32.xlu0 %v1300, 256
    %v1303 = vpop.permute.xlu0 %1302
    %s1305 = sor.u32 256, 8
    %1306 = vbcast.lane.b32.xlu0 %v1300, %s1305
    %v1307 = vpop.permute.xlu0 %1306
    %v1308 = vlaneseq
    %v1309 = vshrl.u32 %v1308, 7
    %v1310 = vsub.s32 4, %v1309
    %v1311 = vrot.slane %v311, %v1310
    %1313 = vbcast.lane.b32.xlu0 %v1311, 256
    %v1314 = vpop.permute.xlu0 %1313
    %s1316 = sor.u32 256, 8
    %1317 = vbcast.lane.b32.xlu0 %v1311, %s1316
    %v1318 = vpop.permute.xlu0 %1317
    %v1319 = vlaneseq
    %v1320 = vshrl.u32 %v1319, 7
    %v1321 = vsub.s32 5, %v1320
    %v1322 = vrot.slane %v311, %v1321
    %1324 = vbcast.lane.b32.xlu0 %v1322, 256
    %v1325 = vpop.permute.xlu0 %1324
    %s1327 = sor.u32 256, 8
    %1328 = vbcast.lane.b32.xlu0 %v1322, %s1327
    %v1329 = vpop.permute.xlu0 %1328
    %v1330 = vlaneseq
    %v1331 = vshrl.u32 %v1330, 7
    %v1332 = vsub.s32 6, %v1331
    %v1333 = vrot.slane %v311, %v1332
    %1335 = vbcast.lane.b32.xlu0 %v1333, 256
    %v1336 = vpop.permute.xlu0 %1335
    %s1338 = sor.u32 256, 8
    %1339 = vbcast.lane.b32.xlu0 %v1333, %s1338
    %v1340 = vpop.permute.xlu0 %1339
    %v1341 = vlaneseq
    %v1342 = vshrl.u32 %v1341, 7
    %v1343 = vsub.s32 7, %v1342
    %v1344 = vrot.slane %v311, %v1343
    %1346 = vbcast.lane.b32.xlu0 %v1344, 256
    %v1347 = vpop.permute.xlu0 %1346
    %s1349 = sor.u32 256, 8
    %1350 = vbcast.lane.b32.xlu0 %v1344, %s1349
    %v1351 = vpop.permute.xlu0 %1350
    %v1352 = vlaneseq
    %v1353 = vshrl.u32 %v1352, 7
    %v1354 = vsub.s32 0, %v1353
    %v1355 = vrot.slane %v312, %v1354
    %1357 = vbcast.lane.b32.xlu0 %v1355, 256
    %v1358 = vpop.permute.xlu0 %1357
    %s1360 = sor.u32 256, 8
    %1361 = vbcast.lane.b32.xlu0 %v1355, %s1360
    %v1362 = vpop.permute.xlu0 %1361
    %v1363 = vlaneseq
    %v1364 = vshrl.u32 %v1363, 7
    %v1365 = vsub.s32 1, %v1364
    %v1366 = vrot.slane %v312, %v1365
    %1368 = vbcast.lane.b32.xlu0 %v1366, 256
    %v1369 = vpop.permute.xlu0 %1368
    %s1371 = sor.u32 256, 8
    %1372 = vbcast.lane.b32.xlu0 %v1366, %s1371
    %v1373 = vpop.permute.xlu0 %1372
    %v1374 = vlaneseq
    %v1375 = vshrl.u32 %v1374, 7
    %v1376 = vsub.s32 2, %v1375
    %v1377 = vrot.slane %v312, %v1376
    %1379 = vbcast.lane.b32.xlu0 %v1377, 256
    %v1380 = vpop.permute.xlu0 %1379
    %s1382 = sor.u32 256, 8
    %1383 = vbcast.lane.b32.xlu0 %v1377, %s1382
    %v1384 = vpop.permute.xlu0 %1383
    %v1385 = vlaneseq
    %v1386 = vshrl.u32 %v1385, 7
    %v1387 = vsub.s32 3, %v1386
    %v1388 = vrot.slane %v312, %v1387
    %1390 = vbcast.lane.b32.xlu0 %v1388, 256
    %v1391 = vpop.permute.xlu0 %1390
    %s1393 = sor.u32 256, 8
    %1394 = vbcast.lane.b32.xlu0 %v1388, %s1393
    %v1395 = vpop.permute.xlu0 %1394
    %v1396 = vlaneseq
    %v1397 = vshrl.u32 %v1396, 7
    %v1398 = vsub.s32 4, %v1397
    %v1399 = vrot.slane %v312, %v1398
    %1401 = vbcast.lane.b32.xlu0 %v1399, 256
    %v1402 = vpop.permute.xlu0 %1401
    %s1404 = sor.u32 256, 8
    %1405 = vbcast.lane.b32.xlu0 %v1399, %s1404
    %v1406 = vpop.permute.xlu0 %1405
    %v1407 = vlaneseq
    %v1408 = vshrl.u32 %v1407, 7
    %v1409 = vsub.s32 5, %v1408
    %v1410 = vrot.slane %v312, %v1409
    %1412 = vbcast.lane.b32.xlu0 %v1410, 256
    %v1413 = vpop.permute.xlu0 %1412
    %s1415 = sor.u32 256, 8
    %1416 = vbcast.lane.b32.xlu0 %v1410, %s1415
    %v1417 = vpop.permute.xlu0 %1416
    %v1418 = vlaneseq
    %v1419 = vshrl.u32 %v1418, 7
    %v1420 = vsub.s32 6, %v1419
    %v1421 = vrot.slane %v312, %v1420
    %1423 = vbcast.lane.b32.xlu0 %v1421, 256
    %v1424 = vpop.permute.xlu0 %1423
    %s1426 = sor.u32 256, 8
    %1427 = vbcast.lane.b32.xlu0 %v1421, %s1426
    %v1428 = vpop.permute.xlu0 %1427
    %v1429 = vlaneseq
    %v1430 = vshrl.u32 %v1429, 7
    %v1431 = vsub.s32 7, %v1430
    %v1432 = vrot.slane %v312, %v1431
    %1434 = vbcast.lane.b32.xlu0 %v1432, 256
    %v1435 = vpop.permute.xlu0 %1434
    %s1437 = sor.u32 256, 8
    %1438 = vbcast.lane.b32.xlu0 %v1432, %s1437
    %v1439 = vpop.permute.xlu0 %1438
    %vm1440 = vcmp.gt.f32.partialorder %v1270, 0.0
    %vm1441 = vcmp.gt.f32.partialorder %v1274, 0.0
    %vm1442 = vcmp.gt.f32.partialorder %v1281, 0.0
    %vm1443 = vcmp.gt.f32.partialorder %v1285, 0.0
    %vm1444 = vcmp.gt.f32.partialorder %v1292, 0.0
    %vm1445 = vcmp.gt.f32.partialorder %v1296, 0.0
    %vm1446 = vcmp.gt.f32.partialorder %v1303, 0.0
    %vm1447 = vcmp.gt.f32.partialorder %v1307, 0.0
    %vm1448 = vcmp.gt.f32.partialorder %v1314, 0.0
    %vm1449 = vcmp.gt.f32.partialorder %v1318, 0.0
    %vm1450 = vcmp.gt.f32.partialorder %v1325, 0.0
    %vm1451 = vcmp.gt.f32.partialorder %v1329, 0.0
    %vm1452 = vcmp.gt.f32.partialorder %v1336, 0.0
    %vm1453 = vcmp.gt.f32.partialorder %v1340, 0.0
    %vm1454 = vcmp.gt.f32.partialorder %v1347, 0.0
    %vm1455 = vcmp.gt.f32.partialorder %v1351, 0.0
    %vm1456 = vcmp.gt.f32.partialorder %v1358, 0.0
    %vm1457 = vcmp.gt.f32.partialorder %v1362, 0.0
    %vm1458 = vcmp.gt.f32.partialorder %v1369, 0.0
    %vm1459 = vcmp.gt.f32.partialorder %v1373, 0.0
    %vm1460 = vcmp.gt.f32.partialorder %v1380, 0.0
    %vm1461 = vcmp.gt.f32.partialorder %v1384, 0.0
    %vm1462 = vcmp.gt.f32.partialorder %v1391, 0.0
    %vm1463 = vcmp.gt.f32.partialorder %v1395, 0.0
    %vm1464 = vcmp.gt.f32.partialorder %v1402, 0.0
    %vm1465 = vcmp.gt.f32.partialorder %v1406, 0.0
    %vm1466 = vcmp.gt.f32.partialorder %v1413, 0.0
    %vm1467 = vcmp.gt.f32.partialorder %v1417, 0.0
    %vm1468 = vcmp.gt.f32.partialorder %v1424, 0.0
    %vm1469 = vcmp.gt.f32.partialorder %v1428, 0.0
    %vm1470 = vcmp.gt.f32.partialorder %v1435, 0.0
    %vm1471 = vcmp.gt.f32.partialorder %v1439, 0.0
    %v1472 = vsel %vm1440, 1, 0
    %v1473 = vsel %vm1441, 1, 0
    %v1474 = vsel %vm1442, 1, 0
    %v1475 = vsel %vm1443, 1, 0
    %v1476 = vsel %vm1444, 1, 0
    %v1477 = vsel %vm1445, 1, 0
    %v1478 = vsel %vm1446, 1, 0
    %v1479 = vsel %vm1447, 1, 0
    %v1480 = vsel %vm1448, 1, 0
    %v1481 = vsel %vm1449, 1, 0
    %v1482 = vsel %vm1450, 1, 0
    %v1483 = vsel %vm1451, 1, 0
    %v1484 = vsel %vm1452, 1, 0
    %v1485 = vsel %vm1453, 1, 0
    %v1486 = vsel %vm1454, 1, 0
    %v1487 = vsel %vm1455, 1, 0
    %v1488 = vsel %vm1456, 1, 0
    %v1489 = vsel %vm1457, 1, 0
    %v1490 = vsel %vm1458, 1, 0
    %v1491 = vsel %vm1459, 1, 0
    %v1492 = vsel %vm1460, 1, 0
    %v1493 = vsel %vm1461, 1, 0
    %v1494 = vsel %vm1462, 1, 0
    %v1495 = vsel %vm1463, 1, 0
    %v1496 = vsel %vm1464, 1, 0
    %v1497 = vsel %vm1465, 1, 0
    %v1498 = vsel %vm1466, 1, 0
    %v1499 = vsel %vm1467, 1, 0
    %v1500 = vsel %vm1468, 1, 0
    %v1501 = vsel %vm1469, 1, 0
    %v1502 = vsel %vm1470, 1, 0
    %v1503 = vsel %vm1471, 1, 0
    %vm1504 = vcmp.eq.s32.totalorder %v1472, 1
    %vm1505 = vcmp.eq.s32.totalorder %v1473, 1
    %vm1506 = vcmp.eq.s32.totalorder %v1474, 1
    %vm1507 = vcmp.eq.s32.totalorder %v1475, 1
    %vm1508 = vcmp.eq.s32.totalorder %v1476, 1
    %vm1509 = vcmp.eq.s32.totalorder %v1477, 1
    %vm1510 = vcmp.eq.s32.totalorder %v1478, 1
    %vm1511 = vcmp.eq.s32.totalorder %v1479, 1
    %vm1512 = vcmp.eq.s32.totalorder %v1480, 1
    %vm1513 = vcmp.eq.s32.totalorder %v1481, 1
    %vm1514 = vcmp.eq.s32.totalorder %v1482, 1
    %vm1515 = vcmp.eq.s32.totalorder %v1483, 1
    %vm1516 = vcmp.eq.s32.totalorder %v1484, 1
    %vm1517 = vcmp.eq.s32.totalorder %v1485, 1
    %vm1518 = vcmp.eq.s32.totalorder %v1486, 1
    %vm1519 = vcmp.eq.s32.totalorder %v1487, 1
    %vm1520 = vcmp.eq.s32.totalorder %v1488, 1
    %vm1521 = vcmp.eq.s32.totalorder %v1489, 1
    %vm1522 = vcmp.eq.s32.totalorder %v1490, 1
    %vm1523 = vcmp.eq.s32.totalorder %v1491, 1
    %vm1524 = vcmp.eq.s32.totalorder %v1492, 1
    %vm1525 = vcmp.eq.s32.totalorder %v1493, 1
    %vm1526 = vcmp.eq.s32.totalorder %v1494, 1
    %vm1527 = vcmp.eq.s32.totalorder %v1495, 1
    %vm1528 = vcmp.eq.s32.totalorder %v1496, 1
    %vm1529 = vcmp.eq.s32.totalorder %v1497, 1
    %vm1530 = vcmp.eq.s32.totalorder %v1498, 1
    %vm1531 = vcmp.eq.s32.totalorder %v1499, 1
    %vm1532 = vcmp.eq.s32.totalorder %v1500, 1
    %vm1533 = vcmp.eq.s32.totalorder %v1501, 1
    %vm1534 = vcmp.eq.s32.totalorder %v1502, 1
    %vm1535 = vcmp.eq.s32.totalorder %v1503, 1
    %v1536 = vsel %vm1504, %v1106, -1e+30
    %v1537 = vsel %vm1505, %v1111, -1e+30
    %v1538 = vsel %vm1506, %v1116, -1e+30
    %v1539 = vsel %vm1507, %v1121, -1e+30
    %v1540 = vsel %vm1508, %v1126, -1e+30
    %v1541 = vsel %vm1509, %v1131, -1e+30
    %v1542 = vsel %vm1510, %v1136, -1e+30
    %v1543 = vsel %vm1511, %v1141, -1e+30
    %v1544 = vsel %vm1512, %v1146, -1e+30
    %v1545 = vsel %vm1513, %v1151, -1e+30
    %v1546 = vsel %vm1514, %v1156, -1e+30
    %v1547 = vsel %vm1515, %v1161, -1e+30
    %v1548 = vsel %vm1516, %v1166, -1e+30
    %v1549 = vsel %vm1517, %v1171, -1e+30
    %v1550 = vsel %vm1518, %v1176, -1e+30
    %v1551 = vsel %vm1519, %v1181, -1e+30
    %v1552 = vsel %vm1520, %v1186, -1e+30
    %v1553 = vsel %vm1521, %v1191, -1e+30
    %v1554 = vsel %vm1522, %v1196, -1e+30
    %v1555 = vsel %vm1523, %v1201, -1e+30
    %v1556 = vsel %vm1524, %v1206, -1e+30
    %v1557 = vsel %vm1525, %v1211, -1e+30
    %v1558 = vsel %vm1526, %v1216, -1e+30
    %v1559 = vsel %vm1527, %v1221, -1e+30
    %v1560 = vsel %vm1528, %v1226, -1e+30
    %v1561 = vsel %vm1529, %v1231, -1e+30
    %v1562 = vsel %vm1530, %v1236, -1e+30
    %v1563 = vsel %vm1531, %v1241, -1e+30
    %v1564 = vsel %vm1532, %v1246, -1e+30
    %v1565 = vsel %vm1533, %v1251, -1e+30
    %v1566 = vsel %vm1534, %v1256, -1e+30
    %v1567 = vsel %vm1535, %v1261, -1e+30
    %vm1568 = vcmask 31744
    %v1569 = vsel %vm1568, %v1536, -inf
    %v1570 = vsel %vm1568, %v1537, -inf
    %v1571 = vmax.f32 %v1569, %v1570
    %v1572 = vrot.slane %v1571, 4
    %v1573 = vmax.f32 %v1571, %v1572
    %v1574 = vrot.slane %v1573, 2
    %v1575 = vmax.f32 %v1573, %v1574
    %v1576 = vrot.slane %v1575, 1
    %v1577 = vmax.f32 %v1575, %v1576
    %v1578 = vsel %vm1568, %v1538, -inf
    %v1579 = vsel %vm1568, %v1539, -inf
    %v1580 = vmax.f32 %v1578, %v1579
    %v1581 = vrot.slane %v1580, 4
    %v1582 = vmax.f32 %v1580, %v1581
    %v1583 = vrot.slane %v1582, 2
    %v1584 = vmax.f32 %v1582, %v1583
    %v1585 = vrot.slane %v1584, 1
    %v1586 = vmax.f32 %v1584, %v1585
    %v1587 = vsel %vm1568, %v1540, -inf
    %v1588 = vsel %vm1568, %v1541, -inf
    %v1589 = vmax.f32 %v1587, %v1588
    %v1590 = vrot.slane %v1589, 4
    %v1591 = vmax.f32 %v1589, %v1590
    %v1592 = vrot.slane %v1591, 2
    %v1593 = vmax.f32 %v1591, %v1592
    %v1594 = vrot.slane %v1593, 1
    %v1595 = vmax.f32 %v1593, %v1594
    %v1596 = vsel %vm1568, %v1542, -inf
    %v1597 = vsel %vm1568, %v1543, -inf
    %v1598 = vmax.f32 %v1596, %v1597
    %v1599 = vrot.slane %v1598, 4
    %v1600 = vmax.f32 %v1598, %v1599
    %v1601 = vrot.slane %v1600, 2
    %v1602 = vmax.f32 %v1600, %v1601
    %v1603 = vrot.slane %v1602, 1
    %v1604 = vmax.f32 %v1602, %v1603
    %v1605 = vsel %vm1568, %v1544, -inf
    %v1606 = vsel %vm1568, %v1545, -inf
    %v1607 = vmax.f32 %v1605, %v1606
    %v1608 = vrot.slane %v1607, 4
    %v1609 = vmax.f32 %v1607, %v1608
    %v1610 = vrot.slane %v1609, 2
    %v1611 = vmax.f32 %v1609, %v1610
    %v1612 = vrot.slane %v1611, 1
    %v1613 = vmax.f32 %v1611, %v1612
    %v1614 = vsel %vm1568, %v1546, -inf
    %v1615 = vsel %vm1568, %v1547, -inf
    %v1616 = vmax.f32 %v1614, %v1615
    %v1617 = vrot.slane %v1616, 4
    %v1618 = vmax.f32 %v1616, %v1617
    %v1619 = vrot.slane %v1618, 2
    %v1620 = vmax.f32 %v1618, %v1619
    %v1621 = vrot.slane %v1620, 1
    %v1622 = vmax.f32 %v1620, %v1621
    %v1623 = vsel %vm1568, %v1548, -inf
    %v1624 = vsel %vm1568, %v1549, -inf
    %v1625 = vmax.f32 %v1623, %v1624
    %v1626 = vrot.slane %v1625, 4
    %v1627 = vmax.f32 %v1625, %v1626
    %v1628 = vrot.slane %v1627, 2
    %v1629 = vmax.f32 %v1627, %v1628
    %v1630 = vrot.slane %v1629, 1
    %v1631 = vmax.f32 %v1629, %v1630
    %v1632 = vsel %vm1568, %v1550, -inf
    %v1633 = vsel %vm1568, %v1551, -inf
    %v1634 = vmax.f32 %v1632, %v1633
    %v1635 = vrot.slane %v1634, 4
    %v1636 = vmax.f32 %v1634, %v1635
    %v1637 = vrot.slane %v1636, 2
    %v1638 = vmax.f32 %v1636, %v1637
    %v1639 = vrot.slane %v1638, 1
    %v1640 = vmax.f32 %v1638, %v1639
    %v1641 = vsel %vm1568, %v1552, -inf
    %v1642 = vsel %vm1568, %v1553, -inf
    %v1643 = vmax.f32 %v1641, %v1642
    %v1644 = vrot.slane %v1643, 4
    %v1645 = vmax.f32 %v1643, %v1644
    %v1646 = vrot.slane %v1645, 2
    %v1647 = vmax.f32 %v1645, %v1646
    %v1648 = vrot.slane %v1647, 1
    %v1649 = vmax.f32 %v1647, %v1648
    %v1650 = vsel %vm1568, %v1554, -inf
    %v1651 = vsel %vm1568, %v1555, -inf
    %v1652 = vmax.f32 %v1650, %v1651
    %v1653 = vrot.slane %v1652, 4
    %v1654 = vmax.f32 %v1652, %v1653
    %v1655 = vrot.slane %v1654, 2
    %v1656 = vmax.f32 %v1654, %v1655
    %v1657 = vrot.slane %v1656, 1
    %v1658 = vmax.f32 %v1656, %v1657
    %v1659 = vsel %vm1568, %v1556, -inf
    %v1660 = vsel %vm1568, %v1557, -inf
    %v1661 = vmax.f32 %v1659, %v1660
    %v1662 = vrot.slane %v1661, 4
    %v1663 = vmax.f32 %v1661, %v1662
    %v1664 = vrot.slane %v1663, 2
    %v1665 = vmax.f32 %v1663, %v1664
    %v1666 = vrot.slane %v1665, 1
    %v1667 = vmax.f32 %v1665, %v1666
    %v1668 = vsel %vm1568, %v1558, -inf
    %v1669 = vsel %vm1568, %v1559, -inf
    %v1670 = vmax.f32 %v1668, %v1669
    %v1671 = vrot.slane %v1670, 4
    %v1672 = vmax.f32 %v1670, %v1671
    %v1673 = vrot.slane %v1672, 2
    %v1674 = vmax.f32 %v1672, %v1673
    %v1675 = vrot.slane %v1674, 1
    %v1676 = vmax.f32 %v1674, %v1675
    %v1677 = vsel %vm1568, %v1560, -inf
    %v1678 = vsel %vm1568, %v1561, -inf
    %v1679 = vmax.f32 %v1677, %v1678
    %v1680 = vrot.slane %v1679, 4
    %v1681 = vmax.f32 %v1679, %v1680
    %v1682 = vrot.slane %v1681, 2
    %v1683 = vmax.f32 %v1681, %v1682
    %v1684 = vrot.slane %v1683, 1
    %v1685 = vmax.f32 %v1683, %v1684
    %v1686 = vsel %vm1568, %v1562, -inf
    %v1687 = vsel %vm1568, %v1563, -inf
    %v1688 = vmax.f32 %v1686, %v1687
    %v1689 = vrot.slane %v1688, 4
    %v1690 = vmax.f32 %v1688, %v1689
    %v1691 = vrot.slane %v1690, 2
    %v1692 = vmax.f32 %v1690, %v1691
    %v1693 = vrot.slane %v1692, 1
    %v1694 = vmax.f32 %v1692, %v1693
    %v1695 = vsel %vm1568, %v1564, -inf
    %v1696 = vsel %vm1568, %v1565, -inf
    %v1697 = vmax.f32 %v1695, %v1696
    %v1698 = vrot.slane %v1697, 4
    %v1699 = vmax.f32 %v1697, %v1698
    %v1700 = vrot.slane %v1699, 2
    %v1701 = vmax.f32 %v1699, %v1700
    %v1702 = vrot.slane %v1701, 1
    %v1703 = vmax.f32 %v1701, %v1702
    %v1704 = vsel %vm1568, %v1566, -inf
    %v1705 = vsel %vm1568, %v1567, -inf
    %v1706 = vmax.f32 %v1704, %v1705
    %v1707 = vrot.slane %v1706, 4
    %v1708 = vmax.f32 %v1706, %v1707
    %v1709 = vrot.slane %v1708, 2
    %v1710 = vmax.f32 %v1708, %v1709
    %v1711 = vrot.slane %v1710, 1
    %v1712 = vmax.f32 %v1710, %v1711
    %v1713 = vsub.f32 %v1536, %v1577
    %v1714 = vsub.f32 %v1537, %v1577
    %v1715 = vsub.f32 %v1538, %v1586
    %v1716 = vsub.f32 %v1539, %v1586
    %v1717 = vsub.f32 %v1540, %v1595
    %v1718 = vsub.f32 %v1541, %v1595
    %v1719 = vsub.f32 %v1542, %v1604
    %v1720 = vsub.f32 %v1543, %v1604
    %v1721 = vsub.f32 %v1544, %v1613
    %v1722 = vsub.f32 %v1545, %v1613
    %v1723 = vsub.f32 %v1546, %v1622
    %v1724 = vsub.f32 %v1547, %v1622
    %v1725 = vsub.f32 %v1548, %v1631
    %v1726 = vsub.f32 %v1549, %v1631
    %v1727 = vsub.f32 %v1550, %v1640
    %v1728 = vsub.f32 %v1551, %v1640
    %v1729 = vsub.f32 %v1552, %v1649
    %v1730 = vsub.f32 %v1553, %v1649
    %v1731 = vsub.f32 %v1554, %v1658
    %v1732 = vsub.f32 %v1555, %v1658
    %v1733 = vsub.f32 %v1556, %v1667
    %v1734 = vsub.f32 %v1557, %v1667
    %v1735 = vsub.f32 %v1558, %v1676
    %v1736 = vsub.f32 %v1559, %v1676
    %v1737 = vsub.f32 %v1560, %v1685
    %v1738 = vsub.f32 %v1561, %v1685
    %v1739 = vsub.f32 %v1562, %v1694
    %v1740 = vsub.f32 %v1563, %v1694
    %v1741 = vsub.f32 %v1564, %v1703
    %v1742 = vsub.f32 %v1565, %v1703
    %v1743 = vsub.f32 %v1566, %v1712
    %v1744 = vsub.f32 %v1567, %v1712
    %v1745 = vmul.f32 %v1713, 1.442695
    %v1746 = vpow.pop %v1745
    %v1747 = vmul.f32 %v1714, 1.442695
    %v1748 = vpow.pop %v1747
    %v1749 = vmul.f32 %v1715, 1.442695
    %v1750 = vpow.pop %v1749
    %v1751 = vmul.f32 %v1716, 1.442695
    %v1752 = vpow.pop %v1751
    %v1753 = vmul.f32 %v1717, 1.442695
    %v1754 = vpow.pop %v1753
    %v1755 = vmul.f32 %v1718, 1.442695
    %v1756 = vpow.pop %v1755
    %v1757 = vmul.f32 %v1719, 1.442695
    %v1758 = vpow.pop %v1757
    %v1759 = vmul.f32 %v1720, 1.442695
    %v1760 = vpow.pop %v1759
    %v1761 = vmul.f32 %v1721, 1.442695
    %v1762 = vpow.pop %v1761
    %v1763 = vmul.f32 %v1722, 1.442695
    %v1764 = vpow.pop %v1763
    %v1765 = vmul.f32 %v1723, 1.442695
    %v1766 = vpow.pop %v1765
    %v1767 = vmul.f32 %v1724, 1.442695
    %v1768 = vpow.pop %v1767
    %v1769 = vmul.f32 %v1725, 1.442695
    %v1770 = vpow.pop %v1769
    %v1771 = vmul.f32 %v1726, 1.442695
    %v1772 = vpow.pop %v1771
    %v1773 = vmul.f32 %v1727, 1.442695
    %v1774 = vpow.pop %v1773
    %v1775 = vmul.f32 %v1728, 1.442695
    %v1776 = vpow.pop %v1775
    %v1777 = vmul.f32 %v1729, 1.442695
    %v1778 = vpow.pop %v1777
    %v1779 = vmul.f32 %v1730, 1.442695
    %v1780 = vpow.pop %v1779
    %v1781 = vmul.f32 %v1731, 1.442695
    %v1782 = vpow.pop %v1781
    %v1783 = vmul.f32 %v1732, 1.442695
    %v1784 = vpow.pop %v1783
    %v1785 = vmul.f32 %v1733, 1.442695
    %v1786 = vpow.pop %v1785
    %v1787 = vmul.f32 %v1734, 1.442695
    %v1788 = vpow.pop %v1787
    %v1789 = vmul.f32 %v1735, 1.442695
    %v1790 = vpow.pop %v1789
    %v1791 = vmul.f32 %v1736, 1.442695
    %v1792 = vpow.pop %v1791
    %v1793 = vmul.f32 %v1737, 1.442695
    %v1794 = vpow.pop %v1793
    %v1795 = vmul.f32 %v1738, 1.442695
    %v1796 = vpow.pop %v1795
    %v1797 = vmul.f32 %v1739, 1.442695
    %v1798 = vpow.pop %v1797
    %v1799 = vmul.f32 %v1740, 1.442695
    %v1800 = vpow.pop %v1799
    %v1801 = vmul.f32 %v1741, 1.442695
    %v1802 = vpow.pop %v1801
    %v1803 = vmul.f32 %v1742, 1.442695
    %v1804 = vpow.pop %v1803
    %v1805 = vmul.f32 %v1743, 1.442695
    %v1806 = vpow.pop %v1805
    %v1807 = vmul.f32 %v1744, 1.442695
    %v1808 = vpow.pop %v1807
    %v1809 = vmul.f32 %v1746, %v1270
    %v1810 = vmul.f32 %v1748, %v1274
    %v1811 = vmul.f32 %v1750, %v1281
    %v1812 = vmul.f32 %v1752, %v1285
    %v1813 = vmul.f32 %v1754, %v1292
    %v1814 = vmul.f32 %v1756, %v1296
    %v1815 = vmul.f32 %v1758, %v1303
    %v1816 = vmul.f32 %v1760, %v1307
    %v1817 = vmul.f32 %v1762, %v1314
    %v1818 = vmul.f32 %v1764, %v1318
    %v1819 = vmul.f32 %v1766, %v1325
    %v1820 = vmul.f32 %v1768, %v1329
    %v1821 = vmul.f32 %v1770, %v1336
    %v1822 = vmul.f32 %v1772, %v1340
    %v1823 = vmul.f32 %v1774, %v1347
    %v1824 = vmul.f32 %v1776, %v1351
    %v1825 = vmul.f32 %v1778, %v1358
    %v1826 = vmul.f32 %v1780, %v1362
    %v1827 = vmul.f32 %v1782, %v1369
    %v1828 = vmul.f32 %v1784, %v1373
    %v1829 = vmul.f32 %v1786, %v1380
    %v1830 = vmul.f32 %v1788, %v1384
    %v1831 = vmul.f32 %v1790, %v1391
    %v1832 = vmul.f32 %v1792, %v1395
    %v1833 = vmul.f32 %v1794, %v1402
    %v1834 = vmul.f32 %v1796, %v1406
    %v1835 = vmul.f32 %v1798, %v1413
    %v1836 = vmul.f32 %v1800, %v1417
    %v1837 = vmul.f32 %v1802, %v1424
    %v1838 = vmul.f32 %v1804, %v1428
    %v1839 = vmul.f32 %v1806, %v1435
    %v1840 = vmul.f32 %v1808, %v1439
    %v1841 = vsel %vm1568, %v1809, 0.0
    %v1842 = vsel %vm1568, %v1810, 0.0
    %v1843 = vadd.f32 %v1841, %v1842
    %v1844 = vrot.slane %v1843, 4
    %v1845 = vadd.f32 %v1843, %v1844
    %v1846 = vrot.slane %v1845, 2
    %v1847 = vadd.f32 %v1845, %v1846
    %v1848 = vrot.slane %v1847, 1
    %v1849 = vadd.f32 %v1847, %v1848
    %v1850 = vsel %vm1568, %v1811, 0.0
    %v1851 = vsel %vm1568, %v1812, 0.0
    %v1852 = vadd.f32 %v1850, %v1851
    %v1853 = vrot.slane %v1852, 4
    %v1854 = vadd.f32 %v1852, %v1853
    %v1855 = vrot.slane %v1854, 2
    %v1856 = vadd.f32 %v1854, %v1855
    %v1857 = vrot.slane %v1856, 1
    %v1858 = vadd.f32 %v1856, %v1857
    %v1859 = vsel %vm1568, %v1813, 0.0
    %v1860 = vsel %vm1568, %v1814, 0.0
    %v1861 = vadd.f32 %v1859, %v1860
    %v1862 = vrot.slane %v1861, 4
    %v1863 = vadd.f32 %v1861, %v1862
    %v1864 = vrot.slane %v1863, 2
    %v1865 = vadd.f32 %v1863, %v1864
    %v1866 = vrot.slane %v1865, 1
    %v1867 = vadd.f32 %v1865, %v1866
    %v1868 = vsel %vm1568, %v1815, 0.0
    %v1869 = vsel %vm1568, %v1816, 0.0
    %v1870 = vadd.f32 %v1868, %v1869
    %v1871 = vrot.slane %v1870, 4
    %v1872 = vadd.f32 %v1870, %v1871
    %v1873 = vrot.slane %v1872, 2
    %v1874 = vadd.f32 %v1872, %v1873
    %v1875 = vrot.slane %v1874, 1
    %v1876 = vadd.f32 %v1874, %v1875
    %v1877 = vsel %vm1568, %v1817, 0.0
    %v1878 = vsel %vm1568, %v1818, 0.0
    %v1879 = vadd.f32 %v1877, %v1878
    %v1880 = vrot.slane %v1879, 4
    %v1881 = vadd.f32 %v1879, %v1880
    %v1882 = vrot.slane %v1881, 2
    %v1883 = vadd.f32 %v1881, %v1882
    %v1884 = vrot.slane %v1883, 1
    %v1885 = vadd.f32 %v1883, %v1884
    %v1886 = vsel %vm1568, %v1819, 0.0
    %v1887 = vsel %vm1568, %v1820, 0.0
    %v1888 = vadd.f32 %v1886, %v1887
    %v1889 = vrot.slane %v1888, 4
    %v1890 = vadd.f32 %v1888, %v1889
    %v1891 = vrot.slane %v1890, 2
    %v1892 = vadd.f32 %v1890, %v1891
    %v1893 = vrot.slane %v1892, 1
    %v1894 = vadd.f32 %v1892, %v1893
    %v1895 = vsel %vm1568, %v1821, 0.0
    %v1896 = vsel %vm1568, %v1822, 0.0
    %v1897 = vadd.f32 %v1895, %v1896
    %v1898 = vrot.slane %v1897, 4
    %v1899 = vadd.f32 %v1897, %v1898
    %v1900 = vrot.slane %v1899, 2
    %v1901 = vadd.f32 %v1899, %v1900
    %v1902 = vrot.slane %v1901, 1
    %v1903 = vadd.f32 %v1901, %v1902
    %v1904 = vsel %vm1568, %v1823, 0.0
    %v1905 = vsel %vm1568, %v1824, 0.0
    %v1906 = vadd.f32 %v1904, %v1905
    %v1907 = vrot.slane %v1906, 4
    %v1908 = vadd.f32 %v1906, %v1907
    %v1909 = vrot.slane %v1908, 2
    %v1910 = vadd.f32 %v1908, %v1909
    %v1911 = vrot.slane %v1910, 1
    %v1912 = vadd.f32 %v1910, %v1911
    %v1913 = vsel %vm1568, %v1825, 0.0
    %v1914 = vsel %vm1568, %v1826, 0.0
    %v1915 = vadd.f32 %v1913, %v1914
    %v1916 = vrot.slane %v1915, 4
    %v1917 = vadd.f32 %v1915, %v1916
    %v1918 = vrot.slane %v1917, 2
    %v1919 = vadd.f32 %v1917, %v1918
    %v1920 = vrot.slane %v1919, 1
    %v1921 = vadd.f32 %v1919, %v1920
    %v1922 = vsel %vm1568, %v1827, 0.0
    %v1923 = vsel %vm1568, %v1828, 0.0
    %v1924 = vadd.f32 %v1922, %v1923
    %v1925 = vrot.slane %v1924, 4
    %v1926 = vadd.f32 %v1924, %v1925
    %v1927 = vrot.slane %v1926, 2
    %v1928 = vadd.f32 %v1926, %v1927
    %v1929 = vrot.slane %v1928, 1
    %v1930 = vadd.f32 %v1928, %v1929
    %v1931 = vsel %vm1568, %v1829, 0.0
    %v1932 = vsel %vm1568, %v1830, 0.0
    %v1933 = vadd.f32 %v1931, %v1932
    %v1934 = vrot.slane %v1933, 4
    %v1935 = vadd.f32 %v1933, %v1934
    %v1936 = vrot.slane %v1935, 2
    %v1937 = vadd.f32 %v1935, %v1936
    %v1938 = vrot.slane %v1937, 1
    %v1939 = vadd.f32 %v1937, %v1938
    %v1940 = vsel %vm1568, %v1831, 0.0
    %v1941 = vsel %vm1568, %v1832, 0.0
    %v1942 = vadd.f32 %v1940, %v1941
    %v1943 = vrot.slane %v1942, 4
    %v1944 = vadd.f32 %v1942, %v1943
    %v1945 = vrot.slane %v1944, 2
    %v1946 = vadd.f32 %v1944, %v1945
    %v1947 = vrot.slane %v1946, 1
    %v1948 = vadd.f32 %v1946, %v1947
    %v1949 = vsel %vm1568, %v1833, 0.0
    %v1950 = vsel %vm1568, %v1834, 0.0
    %v1951 = vadd.f32 %v1949, %v1950
    %v1952 = vrot.slane %v1951, 4
    %v1953 = vadd.f32 %v1951, %v1952
    %v1954 = vrot.slane %v1953, 2
    %v1955 = vadd.f32 %v1953, %v1954
    %v1956 = vrot.slane %v1955, 1
    %v1957 = vadd.f32 %v1955, %v1956
    %v1958 = vsel %vm1568, %v1835, 0.0
    %v1959 = vsel %vm1568, %v1836, 0.0
    %v1960 = vadd.f32 %v1958, %v1959
    %v1961 = vrot.slane %v1960, 4
    %v1962 = vadd.f32 %v1960, %v1961
    %v1963 = vrot.slane %v1962, 2
    %v1964 = vadd.f32 %v1962, %v1963
    %v1965 = vrot.slane %v1964, 1
    %v1966 = vadd.f32 %v1964, %v1965
    %v1967 = vsel %vm1568, %v1837, 0.0
    %v1968 = vsel %vm1568, %v1838, 0.0
    %v1969 = vadd.f32 %v1967, %v1968
    %v1970 = vrot.slane %v1969, 4
    %v1971 = vadd.f32 %v1969, %v1970
    %v1972 = vrot.slane %v1971, 2
    %v1973 = vadd.f32 %v1971, %v1972
    %v1974 = vrot.slane %v1973, 1
    %v1975 = vadd.f32 %v1973, %v1974
    %v1976 = vsel %vm1568, %v1839, 0.0
    %v1977 = vsel %vm1568, %v1840, 0.0
    %v1978 = vadd.f32 %v1976, %v1977
    %v1979 = vrot.slane %v1978, 4
    %v1980 = vadd.f32 %v1978, %v1979
    %v1981 = vrot.slane %v1980, 2
    %v1982 = vadd.f32 %v1980, %v1981
    %v1983 = vrot.slane %v1982, 1
    %v1984 = vadd.f32 %v1982, %v1983
    %v1985 = vrcp.pop %v1849
    %v1986 = vrcp.pop %v1858
    %v1987 = vrcp.pop %v1867
    %v1988 = vrcp.pop %v1876
    %v1989 = vrcp.pop %v1885
    %v1990 = vrcp.pop %v1894
    %v1991 = vrcp.pop %v1903
    %v1992 = vrcp.pop %v1912
    %v1993 = vrcp.pop %v1921
    %v1994 = vrcp.pop %v1930
    %v1995 = vrcp.pop %v1939
    %v1996 = vrcp.pop %v1948
    %v1997 = vrcp.pop %v1957
    %v1998 = vrcp.pop %v1966
    %v1999 = vrcp.pop %v1975
    %v2000 = vrcp.pop %v1984
    %v2001 = vmul.f32 %v1809, %v1985
    %v2002 = vmul.f32 %v1810, %v1985
    %v2003 = vmul.f32 %v1811, %v1986
    %v2004 = vmul.f32 %v1812, %v1986
    %v2005 = vmul.f32 %v1813, %v1987
    %v2006 = vmul.f32 %v1814, %v1987
    %v2007 = vmul.f32 %v1815, %v1988
    %v2008 = vmul.f32 %v1816, %v1988
    %v2009 = vmul.f32 %v1817, %v1989
    %v2010 = vmul.f32 %v1818, %v1989
    %v2011 = vmul.f32 %v1819, %v1990
    %v2012 = vmul.f32 %v1820, %v1990
    %v2013 = vmul.f32 %v1821, %v1991
    %v2014 = vmul.f32 %v1822, %v1991
    %v2015 = vmul.f32 %v1823, %v1992
    %v2016 = vmul.f32 %v1824, %v1992
    %v2017 = vmul.f32 %v1825, %v1993
    %v2018 = vmul.f32 %v1826, %v1993
    %v2019 = vmul.f32 %v1827, %v1994
    %v2020 = vmul.f32 %v1828, %v1994
    %v2021 = vmul.f32 %v1829, %v1995
    %v2022 = vmul.f32 %v1830, %v1995
    %v2023 = vmul.f32 %v1831, %v1996
    %v2024 = vmul.f32 %v1832, %v1996
    %v2025 = vmul.f32 %v1833, %v1997
    %v2026 = vmul.f32 %v1834, %v1997
    %v2027 = vmul.f32 %v1835, %v1998
    %v2028 = vmul.f32 %v1836, %v1998
    %v2029 = vmul.f32 %v1837, %v1999
    %v2030 = vmul.f32 %v1838, %v1999
    %v2031 = vmul.f32 %v1839, %v2000
    %v2032 = vmul.f32 %v1840, %v2000
    %2065 = vset.pattern.permute.xlu0 0
    %2066 = vperm.xlu0 %2065, %v2001
    %v2067 = vpop.permute.xlu0 %2066
    %2068 = vset.pattern.permute.xlu0 0
    %2069 = vperm.xlu0 %2068, %v2002
    %v2070 = vpop.permute.xlu0 %2069
    %2071 = vset.pattern.permute.xlu0 0
    %2072 = vperm.xlu0 %2071, %v2003
    %v2073 = vpop.permute.xlu0 %2072
    %2074 = vset.pattern.permute.xlu0 0
    %2075 = vperm.xlu0 %2074, %v2004
    %v2076 = vpop.permute.xlu0 %2075
    %2077 = vset.pattern.permute.xlu0 0
    %2078 = vperm.xlu0 %2077, %v2005
    %v2079 = vpop.permute.xlu0 %2078
    %2080 = vset.pattern.permute.xlu0 0
    %2081 = vperm.xlu0 %2080, %v2006
    %v2082 = vpop.permute.xlu0 %2081
    %2083 = vset.pattern.permute.xlu0 0
    %2084 = vperm.xlu0 %2083, %v2007
    %v2085 = vpop.permute.xlu0 %2084
    %2086 = vset.pattern.permute.xlu0 0
    %2087 = vperm.xlu0 %2086, %v2008
    %v2088 = vpop.permute.xlu0 %2087
    %2089 = vset.pattern.permute.xlu0 0
    %2090 = vperm.xlu0 %2089, %v2009
    %v2091 = vpop.permute.xlu0 %2090
    %2092 = vset.pattern.permute.xlu0 0
    %2093 = vperm.xlu0 %2092, %v2010
    %v2094 = vpop.permute.xlu0 %2093
    %2095 = vset.pattern.permute.xlu0 0
    %2096 = vperm.xlu0 %2095, %v2011
    %v2097 = vpop.permute.xlu0 %2096
    %2098 = vset.pattern.permute.xlu0 0
    %2099 = vperm.xlu0 %2098, %v2012
    %v2100 = vpop.permute.xlu0 %2099
    %2101 = vset.pattern.permute.xlu0 0
    %2102 = vperm.xlu0 %2101, %v2013
    %v2103 = vpop.permute.xlu0 %2102
    %2104 = vset.pattern.permute.xlu0 0
    %2105 = vperm.xlu0 %2104, %v2014
    %v2106 = vpop.permute.xlu0 %2105
    %2107 = vset.pattern.permute.xlu0 0
    %2108 = vperm.xlu0 %2107, %v2015
    %v2109 = vpop.permute.xlu0 %2108
    %2110 = vset.pattern.permute.xlu0 0
    %2111 = vperm.xlu0 %2110, %v2016
    %v2112 = vpop.permute.xlu0 %2111
    %2113 = vset.pattern.permute.xlu0 0
    %2114 = vperm.xlu0 %2113, %v2017
    %v2115 = vpop.permute.xlu0 %2114
    %2116 = vset.pattern.permute.xlu0 0
    %2117 = vperm.xlu0 %2116, %v2018
    %v2118 = vpop.permute.xlu0 %2117
    %2119 = vset.pattern.permute.xlu0 0
    %2120 = vperm.xlu0 %2119, %v2019
    %v2121 = vpop.permute.xlu0 %2120
    %2122 = vset.pattern.permute.xlu0 0
    %2123 = vperm.xlu0 %2122, %v2020
    %v2124 = vpop.permute.xlu0 %2123
    %2125 = vset.pattern.permute.xlu0 0
    %2126 = vperm.xlu0 %2125, %v2021
    %v2127 = vpop.permute.xlu0 %2126
    %2128 = vset.pattern.permute.xlu0 0
    %2129 = vperm.xlu0 %2128, %v2022
    %v2130 = vpop.permute.xlu0 %2129
    %2131 = vset.pattern.permute.xlu0 0
    %2132 = vperm.xlu0 %2131, %v2023
    %v2133 = vpop.permute.xlu0 %2132
    %2134 = vset.pattern.permute.xlu0 0
    %2135 = vperm.xlu0 %2134, %v2024
    %v2136 = vpop.permute.xlu0 %2135
    %2137 = vset.pattern.permute.xlu0 0
    %2138 = vperm.xlu0 %2137, %v2025
    %v2139 = vpop.permute.xlu0 %2138
    %2140 = vset.pattern.permute.xlu0 0
    %2141 = vperm.xlu0 %2140, %v2026
    %v2142 = vpop.permute.xlu0 %2141
    %2143 = vset.pattern.permute.xlu0 0
    %2144 = vperm.xlu0 %2143, %v2027
    %v2145 = vpop.permute.xlu0 %2144
    %2146 = vset.pattern.permute.xlu0 0
    %2147 = vperm.xlu0 %2146, %v2028
    %v2148 = vpop.permute.xlu0 %2147
    %2149 = vset.pattern.permute.xlu0 0
    %2150 = vperm.xlu0 %2149, %v2029
    %v2151 = vpop.permute.xlu0 %2150
    %2152 = vset.pattern.permute.xlu0 0
    %2153 = vperm.xlu0 %2152, %v2030
    %v2154 = vpop.permute.xlu0 %2153
    %2155 = vset.pattern.permute.xlu0 0
    %2156 = vperm.xlu0 %2155, %v2031
    %v2157 = vpop.permute.xlu0 %2156
    %2158 = vset.pattern.permute.xlu0 0
    %2159 = vperm.xlu0 %2158, %v2032
    %v2160 = vpop.permute.xlu0 %2159
    %v2161 = vlaneseq
    %v2162 = vshrl.u32 %v2161, 7
    %v2163 = vsub.s32 %v65, %v2162
    %v2164 = vrot.slane %v2067, %v2163
    %v2165 = vadd.s32 %v65, 4294967288
    %v2166 = vlaneseq
    %v2167 = vshrl.u32 %v2166, 7
    %v2168 = vsub.s32 %v2165, %v2167
    %v2169 = vrot.slane %v2070, %v2168
    %vm2170 = vcmask 130112
    %v2171 = vsel %vm2170, %v2169, %v2164
    %v2172 = vlaneseq
    %v2173 = vshrl.u32 %v2172, 7
    %v2174 = vsub.s32 %v65, %v2173
    %v2175 = vrot.slane %v2073, %v2174
    %v2176 = vlaneseq
    %v2177 = vshrl.u32 %v2176, 7
    %v2178 = vsub.s32 %v2165, %v2177
    %v2179 = vrot.slane %v2076, %v2178
    %v2180 = vsel %vm2170, %v2179, %v2175
    %v2181 = vlaneseq
    %v2182 = vshrl.u32 %v2181, 7
    %v2183 = vsub.s32 %v65, %v2182
    %v2184 = vrot.slane %v2079, %v2183
    %v2185 = vlaneseq
    %v2186 = vshrl.u32 %v2185, 7
    %v2187 = vsub.s32 %v2165, %v2186
    %v2188 = vrot.slane %v2082, %v2187
    %v2189 = vsel %vm2170, %v2188, %v2184
    %v2190 = vlaneseq
    %v2191 = vshrl.u32 %v2190, 7
    %v2192 = vsub.s32 %v65, %v2191
    %v2193 = vrot.slane %v2085, %v2192
    %v2194 = vlaneseq
    %v2195 = vshrl.u32 %v2194, 7
    %v2196 = vsub.s32 %v2165, %v2195
    %v2197 = vrot.slane %v2088, %v2196
    %v2198 = vsel %vm2170, %v2197, %v2193
    %v2199 = vlaneseq
    %v2200 = vshrl.u32 %v2199, 7
    %v2201 = vsub.s32 %v65, %v2200
    %v2202 = vrot.slane %v2091, %v2201
    %v2203 = vlaneseq
    %v2204 = vshrl.u32 %v2203, 7
    %v2205 = vsub.s32 %v2165, %v2204
    %v2206 = vrot.slane %v2094, %v2205
    %v2207 = vsel %vm2170, %v2206, %v2202
    %v2208 = vlaneseq
    %v2209 = vshrl.u32 %v2208, 7
    %v2210 = vsub.s32 %v65, %v2209
    %v2211 = vrot.slane %v2097, %v2210
    %v2212 = vlaneseq
    %v2213 = vshrl.u32 %v2212, 7
    %v2214 = vsub.s32 %v2165, %v2213
    %v2215 = vrot.slane %v2100, %v2214
    %v2216 = vsel %vm2170, %v2215, %v2211
    %v2217 = vlaneseq
    %v2218 = vshrl.u32 %v2217, 7
    %v2219 = vsub.s32 %v65, %v2218
    %v2220 = vrot.slane %v2103, %v2219
    %v2221 = vlaneseq
    %v2222 = vshrl.u32 %v2221, 7
    %v2223 = vsub.s32 %v2165, %v2222
    %v2224 = vrot.slane %v2106, %v2223
    %v2225 = vsel %vm2170, %v2224, %v2220
    %v2226 = vlaneseq
    %v2227 = vshrl.u32 %v2226, 7
    %v2228 = vsub.s32 %v65, %v2227
    %v2229 = vrot.slane %v2109, %v2228
    %v2230 = vlaneseq
    %v2231 = vshrl.u32 %v2230, 7
    %v2232 = vsub.s32 %v2165, %v2231
    %v2233 = vrot.slane %v2112, %v2232
    %v2234 = vsel %vm2170, %v2233, %v2229
    %v2235 = vlaneseq
    %v2236 = vshrl.u32 %v2235, 7
    %v2237 = vsub.s32 %v65, %v2236
    %v2238 = vrot.slane %v2115, %v2237
    %v2239 = vlaneseq
    %v2240 = vshrl.u32 %v2239, 7
    %v2241 = vsub.s32 %v2165, %v2240
    %v2242 = vrot.slane %v2118, %v2241
    %v2243 = vsel %vm2170, %v2242, %v2238
    %v2244 = vlaneseq
    %v2245 = vshrl.u32 %v2244, 7
    %v2246 = vsub.s32 %v65, %v2245
    %v2247 = vrot.slane %v2121, %v2246
    %v2248 = vlaneseq
    %v2249 = vshrl.u32 %v2248, 7
    %v2250 = vsub.s32 %v2165, %v2249
    %v2251 = vrot.slane %v2124, %v2250
    %v2252 = vsel %vm2170, %v2251, %v2247
    %v2253 = vlaneseq
    %v2254 = vshrl.u32 %v2253, 7
    %v2255 = vsub.s32 %v65, %v2254
    %v2256 = vrot.slane %v2127, %v2255
    %v2257 = vlaneseq
    %v2258 = vshrl.u32 %v2257, 7
    %v2259 = vsub.s32 %v2165, %v2258
    %v2260 = vrot.slane %v2130, %v2259
    %v2261 = vsel %vm2170, %v2260, %v2256
    %v2262 = vlaneseq
    %v2263 = vshrl.u32 %v2262, 7
    %v2264 = vsub.s32 %v65, %v2263
    %v2265 = vrot.slane %v2133, %v2264
    %v2266 = vlaneseq
    %v2267 = vshrl.u32 %v2266, 7
    %v2268 = vsub.s32 %v2165, %v2267
    %v2269 = vrot.slane %v2136, %v2268
    %v2270 = vsel %vm2170, %v2269, %v2265
    %v2271 = vlaneseq
    %v2272 = vshrl.u32 %v2271, 7
    %v2273 = vsub.s32 %v65, %v2272
    %v2274 = vrot.slane %v2139, %v2273
    %v2275 = vlaneseq
    %v2276 = vshrl.u32 %v2275, 7
    %v2277 = vsub.s32 %v2165, %v2276
    %v2278 = vrot.slane %v2142, %v2277
    %v2279 = vsel %vm2170, %v2278, %v2274
    %v2280 = vlaneseq
    %v2281 = vshrl.u32 %v2280, 7
    %v2282 = vsub.s32 %v65, %v2281
    %v2283 = vrot.slane %v2145, %v2282
    %v2284 = vlaneseq
    %v2285 = vshrl.u32 %v2284, 7
    %v2286 = vsub.s32 %v2165, %v2285
    %v2287 = vrot.slane %v2148, %v2286
    %v2288 = vsel %vm2170, %v2287, %v2283
    %v2289 = vlaneseq
    %v2290 = vshrl.u32 %v2289, 7
    %v2291 = vsub.s32 %v65, %v2290
    %v2292 = vrot.slane %v2151, %v2291
    %v2293 = vlaneseq
    %v2294 = vshrl.u32 %v2293, 7
    %v2295 = vsub.s32 %v2165, %v2294
    %v2296 = vrot.slane %v2154, %v2295
    %v2297 = vsel %vm2170, %v2296, %v2292
    %v2298 = vlaneseq
    %v2299 = vshrl.u32 %v2298, 7
    %v2300 = vsub.s32 %v65, %v2299
    %v2301 = vrot.slane %v2157, %v2300
    %v2302 = vlaneseq
    %v2303 = vshrl.u32 %v2302, 7
    %v2304 = vsub.s32 %v2165, %v2303
    %v2305 = vrot.slane %v2160, %v2304
    %v2306 = vsel %vm2170, %v2305, %v2301
    %vm2307 = vcmask 1041409
    %v2308 = vsel %vm2307, %v2180, %v2171
    %vm2309 = vcmask 1042434
    %v2310 = vsel %vm2309, %v2189, %v2308
    %vm2311 = vcmask 1043459
    %v2312 = vsel %vm2311, %v2198, %v2310
    %vm2313 = vcmask 1044484
    %v2314 = vsel %vm2313, %v2207, %v2312
    %vm2315 = vcmask 1045509
    %v2316 = vsel %vm2315, %v2216, %v2314
    %vm2317 = vcmask 1046534
    %v2318 = vsel %vm2317, %v2225, %v2316
    %vm2319 = vcmask 1047559
    %v2320 = vsel %vm2319, %v2234, %v2318
    %v2321 = vsel %vm2307, %v2252, %v2243
    %v2322 = vsel %vm2309, %v2261, %v2321
    %v2323 = vsel %vm2311, %v2270, %v2322
    %v2324 = vsel %vm2313, %v2279, %v2323
    %v2325 = vsel %vm2315, %v2288, %v2324
    %v2326 = vsel %vm2317, %v2297, %v2325
    %v2327 = vsel %vm2319, %v2306, %v2326
    %vm2328 = vcmask 130048
    %v2329 = vsel %vm2328, %v2320, 0
    %v2331 = vsel %vm2328, %v2327, 0
    %2333 = vmatprep.subr.mxu0 0.0
    %2334 = vmatpush1.msra.mxu0 %v505
    %2335 = vmatprep.subr.mxu0 0.0
    %2336 = vmatpush1.msra.mxu0 %v506
    %2337 = vmatprep.subr.mxu0 0.0
    %2338 = vmatpush1.msra.mxu0 0.0
    %2339 = vmatprep.subr.mxu0 0.0
    %2340 = vmatpush1.msra.mxu0 0.0
    %2341 = vmatprep.subr.mxu0 0.0
    %2342 = vmatpush1.msra.mxu0 0.0
    %2343 = vmatprep.subr.mxu0 0.0
    %2344 = vmatpush1.msra.mxu0 0.0
    %2345 = vmatprep.subr.mxu0 0.0
    %2346 = vmatpush1.msra.mxu0 0.0
    %2347 = vmatprep.subr.mxu0 0.0
    %2348 = vmatpush1.msra.mxu0 0.0
    %2349 = vmatprep.subr.mxu0 0.0
    %2350 = vmatpush1.msra.mxu0 0.0
    %2351 = vmatprep.subr.mxu0 0.0
    %2352 = vmatpush1.msra.mxu0 0.0
    %2353 = vmatprep.subr.mxu0 0.0
    %2354 = vmatpush1.msra.mxu0 0.0
    %2355 = vmatprep.subr.mxu0 0.0
    %2356 = vmatpush1.msra.mxu0 0.0
    %2357 = vmatprep.subr.mxu0 0.0
    %2358 = vmatpush1.msra.mxu0 0.0
    %2359 = vmatprep.subr.mxu0 0.0
    %2360 = vmatpush1.msra.mxu0 0.0
    %2361 = vmatprep.subr.mxu0 0.0
    %2362 = vmatpush1.msra.mxu0 0.0
    %2363 = vmatprep.subr.mxu0 0.0
    %2364 = vmatpush1.msra.mxu0 0.0
    %2365 = vmatprep.subr.mxu0 0.0
    %2366 = vmatpush1.msra.mxu0 0.0
    %2367 = vmatprep.subr.mxu0 0.0
    %2368 = vmatpush1.msra.mxu0 0.0
    %2369 = vmatprep.subr.mxu0 0.0
    %2370 = vmatpush1.msra.mxu0 0.0
    %2371 = vmatprep.subr.mxu0 0.0
    %2372 = vmatpush1.msra.mxu0 0.0
    %2373 = vmatprep.subr.mxu0 0.0
    %2374 = vmatpush1.msra.mxu0 0.0
    %2375 = vmatprep.subr.mxu0 0.0
    %2376 = vmatpush1.msra.mxu0 0.0
    %2377 = vmatprep.subr.mxu0 0.0
    %2378 = vmatpush1.msra.mxu0 0.0
    %2379 = vmatprep.subr.mxu0 0.0
    %2380 = vmatpush1.msra.mxu0 0.0
    %2381 = vmatprep.subr.mxu0 0.0
    %2382 = vmatpush1.msra.mxu0 0.0
    %2383 = vmatprep.subr.mxu0 0.0
    %2384 = vmatpush1.msra.mxu0 0.0
    %2385 = vmatprep.subr.mxu0 0.0
    %2386 = vmatpush1.msra.mxu0 0.0
    %2387 = vmatprep.subr.mxu0 0.0
    %2388 = vmatpush1.msra.mxu0 0.0
    %2389 = vmatprep.subr.mxu0 0.0
    %2390 = vmatpush1.msra.mxu0 0.0
    %2391 = vmatprep.subr.mxu0 0.0
    %2392 = vmatpush1.msra.mxu0 0.0
    %2393 = vmatprep.subr.mxu0 0.0
    %2394 = vmatpush1.msra.mxu0 0.0
    %2395 = vmatprep.subr.mxu0 0.0
    %2396 = vmatpush1.msra.mxu0 0.0
    %2397 = vmatprep.mubr.f32.mxu0 0.0
    %2398 = vmatmul.mubr.f32.gmra.mrb[0].mxu0 %v2329
    %v2399 = vpop.f32.mrb[0].mxu0
    %v2400 = vadd.f32 0.0, %v2399
    %v2401 = vpop.f32.mrb[0].mxu0
    %2402 = vmatprep.mubr.f32.mxu0 0.0
    %2403 = vmatmul.mubr.f32.gmra.mrb[0].mxu0 %v2331
    %v2404 = vpop.f32.mrb[0].mxu0
    %v2405 = vadd.f32 0.0, %v2404
    %v2406 = vpop.f32.mrb[0].mxu0
    %2407 = vdwg.mxu0
    %2408 = vset.pattern.permute.xlu0 1
    %2409 = vperm.xlu0 %2408, %v2001
    %v2410 = vpop.permute.xlu0 %2409
    %2411 = vset.pattern.permute.xlu0 1
    %2412 = vperm.xlu0 %2411, %v2002
    %v2413 = vpop.permute.xlu0 %2412
    %2414 = vset.pattern.permute.xlu0 1
    %2415 = vperm.xlu0 %2414, %v2003
    %v2416 = vpop.permute.xlu0 %2415
    %2417 = vset.pattern.permute.xlu0 1
    %2418 = vperm.xlu0 %2417, %v2004
    %v2419 = vpop.permute.xlu0 %2418
    %2420 = vset.pattern.permute.xlu0 1
    %2421 = vperm.xlu0 %2420, %v2005
    %v2422 = vpop.permute.xlu0 %2421
    %2423 = vset.pattern.permute.xlu0 1
    %2424 = vperm.xlu0 %2423, %v2006
    %v2425 = vpop.permute.xlu0 %2424
    %2426 = vset.pattern.permute.xlu0 1
    %2427 = vperm.xlu0 %2426, %v2007
    %v2428 = vpop.permute.xlu0 %2427
    %2429 = vset.pattern.permute.xlu0 1
    %2430 = vperm.xlu0 %2429, %v2008
    %v2431 = vpop.permute.xlu0 %2430
    %2432 = vset.pattern.permute.xlu0 1
    %2433 = vperm.xlu0 %2432, %v2009
    %v2434 = vpop.permute.xlu0 %2433
    %2435 = vset.pattern.permute.xlu0 1
    %2436 = vperm.xlu0 %2435, %v2010
    %v2437 = vpop.permute.xlu0 %2436
    %2438 = vset.pattern.permute.xlu0 1
    %2439 = vperm.xlu0 %2438, %v2011
    %v2440 = vpop.permute.xlu0 %2439
    %2441 = vset.pattern.permute.xlu0 1
    %2442 = vperm.xlu0 %2441, %v2012
    %v2443 = vpop.permute.xlu0 %2442
    %2444 = vset.pattern.permute.xlu0 1
    %2445 = vperm.xlu0 %2444, %v2013
    %v2446 = vpop.permute.xlu0 %2445
    %2447 = vset.pattern.permute.xlu0 1
    %2448 = vperm.xlu0 %2447, %v2014
    %v2449 = vpop.permute.xlu0 %2448
    %2450 = vset.pattern.permute.xlu0 1
    %2451 = vperm.xlu0 %2450, %v2015
    %v2452 = vpop.permute.xlu0 %2451
    %2453 = vset.pattern.permute.xlu0 1
    %2454 = vperm.xlu0 %2453, %v2016
    %v2455 = vpop.permute.xlu0 %2454
    %2456 = vset.pattern.permute.xlu0 1
    %2457 = vperm.xlu0 %2456, %v2017
    %v2458 = vpop.permute.xlu0 %2457
    %2459 = vset.pattern.permute.xlu0 1
    %2460 = vperm.xlu0 %2459, %v2018
    %v2461 = vpop.permute.xlu0 %2460
    %2462 = vset.pattern.permute.xlu0 1
    %2463 = vperm.xlu0 %2462, %v2019
    %v2464 = vpop.permute.xlu0 %2463
    %2465 = vset.pattern.permute.xlu0 1
    %2466 = vperm.xlu0 %2465, %v2020
    %v2467 = vpop.permute.xlu0 %2466
    %2468 = vset.pattern.permute.xlu0 1
    %2469 = vperm.xlu0 %2468, %v2021
    %v2470 = vpop.permute.xlu0 %2469
    %2471 = vset.pattern.permute.xlu0 1
    %2472 = vperm.xlu0 %2471, %v2022
    %v2473 = vpop.permute.xlu0 %2472
    %2474 = vset.pattern.permute.xlu0 1
    %2475 = vperm.xlu0 %2474, %v2023
    %v2476 = vpop.permute.xlu0 %2475
    %2477 = vset.pattern.permute.xlu0 1
    %2478 = vperm.xlu0 %2477, %v2024
    %v2479 = vpop.permute.xlu0 %2478
    %2480 = vset.pattern.permute.xlu0 1
    %2481 = vperm.xlu0 %2480, %v2025
    %v2482 = vpop.permute.xlu0 %2481
    %2483 = vset.pattern.permute.xlu0 1
    %2484 = vperm.xlu0 %2483, %v2026
    %v2485 = vpop.permute.xlu0 %2484
    %2486 = vset.pattern.permute.xlu0 1
    %2487 = vperm.xlu0 %2486, %v2027
    %v2488 = vpop.permute.xlu0 %2487
    %2489 = vset.pattern.permute.xlu0 1
    %2490 = vperm.xlu0 %2489, %v2028
    %v2491 = vpop.permute.xlu0 %2490
    %2492 = vset.pattern.permute.xlu0 1
    %2493 = vperm.xlu0 %2492, %v2029
    %v2494 = vpop.permute.xlu0 %2493
    %2495 = vset.pattern.permute.xlu0 1
    %2496 = vperm.xlu0 %2495, %v2030
    %v2497 = vpop.permute.xlu0 %2496
    %2498 = vset.pattern.permute.xlu0 1
    %2499 = vperm.xlu0 %2498, %v2031
    %v2500 = vpop.permute.xlu0 %2499
    %2501 = vset.pattern.permute.xlu0 1
    %2502 = vperm.xlu0 %2501, %v2032
    %v2503 = vpop.permute.xlu0 %2502
    %v2504 = vlaneseq
    %v2505 = vshrl.u32 %v2504, 7
    %v2506 = vsub.s32 %v65, %v2505
    %v2507 = vrot.slane %v2410, %v2506
    %v2508 = vlaneseq
    %v2509 = vshrl.u32 %v2508, 7
    %v2510 = vsub.s32 %v2165, %v2509
    %v2511 = vrot.slane %v2413, %v2510
    %v2512 = vsel %vm2170, %v2511, %v2507
    %v2513 = vlaneseq
    %v2514 = vshrl.u32 %v2513, 7
    %v2515 = vsub.s32 %v65, %v2514
    %v2516 = vrot.slane %v2416, %v2515
    %v2517 = vlaneseq
    %v2518 = vshrl.u32 %v2517, 7
    %v2519 = vsub.s32 %v2165, %v2518
    %v2520 = vrot.slane %v2419, %v2519
    %v2521 = vsel %vm2170, %v2520, %v2516
    %v2522 = vlaneseq
    %v2523 = vshrl.u32 %v2522, 7
    %v2524 = vsub.s32 %v65, %v2523
    %v2525 = vrot.slane %v2422, %v2524
    %v2526 = vlaneseq
    %v2527 = vshrl.u32 %v2526, 7
    %v2528 = vsub.s32 %v2165, %v2527
    %v2529 = vrot.slane %v2425, %v2528
    %v2530 = vsel %vm2170, %v2529, %v2525
    %v2531 = vlaneseq
    %v2532 = vshrl.u32 %v2531, 7
    %v2533 = vsub.s32 %v65, %v2532
    %v2534 = vrot.slane %v2428, %v2533
    %v2535 = vlaneseq
    %v2536 = vshrl.u32 %v2535, 7
    %v2537 = vsub.s32 %v2165, %v2536
    %v2538 = vrot.slane %v2431, %v2537
    %v2539 = vsel %vm2170, %v2538, %v2534
    %v2540 = vlaneseq
    %v2541 = vshrl.u32 %v2540, 7
    %v2542 = vsub.s32 %v65, %v2541
    %v2543 = vrot.slane %v2434, %v2542
    %v2544 = vlaneseq
    %v2545 = vshrl.u32 %v2544, 7
    %v2546 = vsub.s32 %v2165, %v2545
    %v2547 = vrot.slane %v2437, %v2546
    %v2548 = vsel %vm2170, %v2547, %v2543
    %v2549 = vlaneseq
    %v2550 = vshrl.u32 %v2549, 7
    %v2551 = vsub.s32 %v65, %v2550
    %v2552 = vrot.slane %v2440, %v2551
    %v2553 = vlaneseq
    %v2554 = vshrl.u32 %v2553, 7
    %v2555 = vsub.s32 %v2165, %v2554
    %v2556 = vrot.slane %v2443, %v2555
    %v2557 = vsel %vm2170, %v2556, %v2552
    %v2558 = vlaneseq
    %v2559 = vshrl.u32 %v2558, 7
    %v2560 = vsub.s32 %v65, %v2559
    %v2561 = vrot.slane %v2446, %v2560
    %v2562 = vlaneseq
    %v2563 = vshrl.u32 %v2562, 7
    %v2564 = vsub.s32 %v2165, %v2563
    %v2565 = vrot.slane %v2449, %v2564
    %v2566 = vsel %vm2170, %v2565, %v2561
    %v2567 = vlaneseq
    %v2568 = vshrl.u32 %v2567, 7
    %v2569 = vsub.s32 %v65, %v2568
    %v2570 = vrot.slane %v2452, %v2569
    %v2571 = vlaneseq
    %v2572 = vshrl.u32 %v2571, 7
    %v2573 = vsub.s32 %v2165, %v2572
    %v2574 = vrot.slane %v2455, %v2573
    %v2575 = vsel %vm2170, %v2574, %v2570
    %v2576 = vlaneseq
    %v2577 = vshrl.u32 %v2576, 7
    %v2578 = vsub.s32 %v65, %v2577
    %v2579 = vrot.slane %v2458, %v2578
    %v2580 = vlaneseq
    %v2581 = vshrl.u32 %v2580, 7
    %v2582 = vsub.s32 %v2165, %v2581
    %v2583 = vrot.slane %v2461, %v2582
    %v2584 = vsel %vm2170, %v2583, %v2579
    %v2585 = vlaneseq
    %v2586 = vshrl.u32 %v2585, 7
    %v2587 = vsub.s32 %v65, %v2586
    %v2588 = vrot.slane %v2464, %v2587
    %v2589 = vlaneseq
    %v2590 = vshrl.u32 %v2589, 7
    %v2591 = vsub.s32 %v2165, %v2590
    %v2592 = vrot.slane %v2467, %v2591
    %v2593 = vsel %vm2170, %v2592, %v2588
    %v2594 = vlaneseq
    %v2595 = vshrl.u32 %v2594, 7
    %v2596 = vsub.s32 %v65, %v2595
    %v2597 = vrot.slane %v2470, %v2596
    %v2598 = vlaneseq
    %v2599 = vshrl.u32 %v2598, 7
    %v2600 = vsub.s32 %v2165, %v2599
    %v2601 = vrot.slane %v2473, %v2600
    %v2602 = vsel %vm2170, %v2601, %v2597
    %v2603 = vlaneseq
    %v2604 = vshrl.u32 %v2603, 7
    %v2605 = vsub.s32 %v65, %v2604
    %v2606 = vrot.slane %v2476, %v2605
    %v2607 = vlaneseq
    %v2608 = vshrl.u32 %v2607, 7
    %v2609 = vsub.s32 %v2165, %v2608
    %v2610 = vrot.slane %v2479, %v2609
    %v2611 = vsel %vm2170, %v2610, %v2606
    %v2612 = vlaneseq
    %v2613 = vshrl.u32 %v2612, 7
    %v2614 = vsub.s32 %v65, %v2613
    %v2615 = vrot.slane %v2482, %v2614
    %v2616 = vlaneseq
    %v2617 = vshrl.u32 %v2616, 7
    %v2618 = vsub.s32 %v2165, %v2617
    %v2619 = vrot.slane %v2485, %v2618
    %v2620 = vsel %vm2170, %v2619, %v2615
    %v2621 = vlaneseq
    %v2622 = vshrl.u32 %v2621, 7
    %v2623 = vsub.s32 %v65, %v2622
    %v2624 = vrot.slane %v2488, %v2623
    %v2625 = vlaneseq
    %v2626 = vshrl.u32 %v2625, 7
    %v2627 = vsub.s32 %v2165, %v2626
    %v2628 = vrot.slane %v2491, %v2627
    %v2629 = vsel %vm2170, %v2628, %v2624
    %v2630 = vlaneseq
    %v2631 = vshrl.u32 %v2630, 7
    %v2632 = vsub.s32 %v65, %v2631
    %v2633 = vrot.slane %v2494, %v2632
    %v2634 = vlaneseq
    %v2635 = vshrl.u32 %v2634, 7
    %v2636 = vsub.s32 %v2165, %v2635
    %v2637 = vrot.slane %v2497, %v2636
    %v2638 = vsel %vm2170, %v2637, %v2633
    %v2639 = vlaneseq
    %v2640 = vshrl.u32 %v2639, 7
    %v2641 = vsub.s32 %v65, %v2640
    %v2642 = vrot.slane %v2500, %v2641
    %v2643 = vlaneseq
    %v2644 = vshrl.u32 %v2643, 7
    %v2645 = vsub.s32 %v2165, %v2644
    %v2646 = vrot.slane %v2503, %v2645
    %v2647 = vsel %vm2170, %v2646, %v2642
    %v2648 = vsel %vm2307, %v2521, %v2512
    %v2649 = vsel %vm2309, %v2530, %v2648
    %v2650 = vsel %vm2311, %v2539, %v2649
    %v2651 = vsel %vm2313, %v2548, %v2650
    %v2652 = vsel %vm2315, %v2557, %v2651
    %v2653 = vsel %vm2317, %v2566, %v2652
    %v2654 = vsel %vm2319, %v2575, %v2653
    %v2655 = vsel %vm2307, %v2593, %v2584
    %v2656 = vsel %vm2309, %v2602, %v2655
    %v2657 = vsel %vm2311, %v2611, %v2656
    %v2658 = vsel %vm2313, %v2620, %v2657
    %v2659 = vsel %vm2315, %v2629, %v2658
    %v2660 = vsel %vm2317, %v2638, %v2659
    %v2661 = vsel %vm2319, %v2647, %v2660
    %2664 = vrot.lane.b32.xlu0 %v505, 120
    %v2665 = vpop.permute.xlu0 %2664
    %2666 = vrot.lane.b32.xlu0 %v506, 120
    %v2667 = vpop.permute.xlu0 %2666
    %v2670 = vsel %vm2328, %v2654, 0
    %v2672 = vsel %vm2328, %v2661, 0
    %2674 = vmatprep.subr.mxu0 0.0
    %2675 = vmatpush1.msra.mxu0 %v2665
    %2676 = vmatprep.subr.mxu0 0.0
    %2677 = vmatpush1.msra.mxu0 %v2667
    %2678 = vmatprep.subr.mxu0 0.0
    %2679 = vmatpush1.msra.mxu0 0.0
    %2680 = vmatprep.subr.mxu0 0.0
    %2681 = vmatpush1.msra.mxu0 0.0
    %2682 = vmatprep.subr.mxu0 0.0
    %2683 = vmatpush1.msra.mxu0 0.0
    %2684 = vmatprep.subr.mxu0 0.0
    %2685 = vmatpush1.msra.mxu0 0.0
    %2686 = vmatprep.subr.mxu0 0.0
    %2687 = vmatpush1.msra.mxu0 0.0
    %2688 = vmatprep.subr.mxu0 0.0
    %2689 = vmatpush1.msra.mxu0 0.0
    %2690 = vmatprep.subr.mxu0 0.0
    %2691 = vmatpush1.msra.mxu0 0.0
    %2692 = vmatprep.subr.mxu0 0.0
    %2693 = vmatpush1.msra.mxu0 0.0
    %2694 = vmatprep.subr.mxu0 0.0
    %2695 = vmatpush1.msra.mxu0 0.0
    %2696 = vmatprep.subr.mxu0 0.0
    %2697 = vmatpush1.msra.mxu0 0.0
    %2698 = vmatprep.subr.mxu0 0.0
    %2699 = vmatpush1.msra.mxu0 0.0
    %2700 = vmatprep.subr.mxu0 0.0
    %2701 = vmatpush1.msra.mxu0 0.0
    %2702 = vmatprep.subr.mxu0 0.0
    %2703 = vmatpush1.msra.mxu0 0.0
    %2704 = vmatprep.subr.mxu0 0.0
    %2705 = vmatpush1.msra.mxu0 0.0
    %2706 = vmatprep.subr.mxu0 0.0
    %2707 = vmatpush1.msra.mxu0 0.0
    %2708 = vmatprep.subr.mxu0 0.0
    %2709 = vmatpush1.msra.mxu0 0.0
    %2710 = vmatprep.subr.mxu0 0.0
    %2711 = vmatpush1.msra.mxu0 0.0
    %2712 = vmatprep.subr.mxu0 0.0
    %2713 = vmatpush1.msra.mxu0 0.0
    %2714 = vmatprep.subr.mxu0 0.0
    %2715 = vmatpush1.msra.mxu0 0.0
    %2716 = vmatprep.subr.mxu0 0.0
    %2717 = vmatpush1.msra.mxu0 0.0
    %2718 = vmatprep.subr.mxu0 0.0
    %2719 = vmatpush1.msra.mxu0 0.0
    %2720 = vmatprep.subr.mxu0 0.0
    %2721 = vmatpush1.msra.mxu0 0.0
    %2722 = vmatprep.subr.mxu0 0.0
    %2723 = vmatpush1.msra.mxu0 0.0
    %2724 = vmatprep.subr.mxu0 0.0
    %2725 = vmatpush1.msra.mxu0 0.0
    %2726 = vmatprep.subr.mxu0 0.0
    %2727 = vmatpush1.msra.mxu0 0.0
    %2728 = vmatprep.subr.mxu0 0.0
    %2729 = vmatpush1.msra.mxu0 0.0
    %2730 = vmatprep.subr.mxu0 0.0
    %2731 = vmatpush1.msra.mxu0 0.0
    %2732 = vmatprep.subr.mxu0 0.0
    %2733 = vmatpush1.msra.mxu0 0.0
    %2734 = vmatprep.subr.mxu0 0.0
    %2735 = vmatpush1.msra.mxu0 0.0
    %2736 = vmatprep.subr.mxu0 0.0
    %2737 = vmatpush1.msra.mxu0 0.0
    %2738 = vmatprep.mubr.f32.mxu0 0.0
    %2739 = vmatmul.mubr.f32.gmra.mrb[0].mxu0 %v2670
    %v2740 = vpop.f32.mrb[0].mxu0
    %v2741 = vadd.f32 0.0, %v2740
    %v2742 = vpop.f32.mrb[0].mxu0
    %2743 = vmatprep.mubr.f32.mxu0 0.0
    %2744 = vmatmul.mubr.f32.gmra.mrb[0].mxu0 %v2672
    %v2745 = vpop.f32.mrb[0].mxu0
    %v2746 = vadd.f32 0.0, %v2745
    %v2747 = vpop.f32.mrb[0].mxu0
    %2748 = vdwg.mxu0
    %2749 = vset.pattern.permute.xlu0 2
    %2750 = vperm.xlu0 %2749, %v2001
    %v2751 = vpop.permute.xlu0 %2750
    %2752 = vset.pattern.permute.xlu0 2
    %2753 = vperm.xlu0 %2752, %v2002
    %v2754 = vpop.permute.xlu0 %2753
    %2755 = vset.pattern.permute.xlu0 2
    %2756 = vperm.xlu0 %2755, %v2003
    %v2757 = vpop.permute.xlu0 %2756
    %2758 = vset.pattern.permute.xlu0 2
    %2759 = vperm.xlu0 %2758, %v2004
    %v2760 = vpop.permute.xlu0 %2759
    %2761 = vset.pattern.permute.xlu0 2
    %2762 = vperm.xlu0 %2761, %v2005
    %v2763 = vpop.permute.xlu0 %2762
    %2764 = vset.pattern.permute.xlu0 2
    %2765 = vperm.xlu0 %2764, %v2006
    %v2766 = vpop.permute.xlu0 %2765
    %2767 = vset.pattern.permute.xlu0 2
    %2768 = vperm.xlu0 %2767, %v2007
    %v2769 = vpop.permute.xlu0 %2768
    %2770 = vset.pattern.permute.xlu0 2
    %2771 = vperm.xlu0 %2770, %v2008
    %v2772 = vpop.permute.xlu0 %2771
    %2773 = vset.pattern.permute.xlu0 2
    %2774 = vperm.xlu0 %2773, %v2009
    %v2775 = vpop.permute.xlu0 %2774
    %2776 = vset.pattern.permute.xlu0 2
    %2777 = vperm.xlu0 %2776, %v2010
    %v2778 = vpop.permute.xlu0 %2777
    %2779 = vset.pattern.permute.xlu0 2
    %2780 = vperm.xlu0 %2779, %v2011
    %v2781 = vpop.permute.xlu0 %2780
    %2782 = vset.pattern.permute.xlu0 2
    %2783 = vperm.xlu0 %2782, %v2012
    %v2784 = vpop.permute.xlu0 %2783
    %2785 = vset.pattern.permute.xlu0 2
    %2786 = vperm.xlu0 %2785, %v2013
    %v2787 = vpop.permute.xlu0 %2786
    %2788 = vset.pattern.permute.xlu0 2
    %2789 = vperm.xlu0 %2788, %v2014
    %v2790 = vpop.permute.xlu0 %2789
    %2791 = vset.pattern.permute.xlu0 2
    %2792 = vperm.xlu0 %2791, %v2015
    %v2793 = vpop.permute.xlu0 %2792
    %2794 = vset.pattern.permute.xlu0 2
    %2795 = vperm.xlu0 %2794, %v2016
    %v2796 = vpop.permute.xlu0 %2795
    %2797 = vset.pattern.permute.xlu0 2
    %2798 = vperm.xlu0 %2797, %v2017
    %v2799 = vpop.permute.xlu0 %2798
    %2800 = vset.pattern.permute.xlu0 2
    %2801 = vperm.xlu0 %2800, %v2018
    %v2802 = vpop.permute.xlu0 %2801
    %2803 = vset.pattern.permute.xlu0 2
    %2804 = vperm.xlu0 %2803, %v2019
    %v2805 = vpop.permute.xlu0 %2804
    %2806 = vset.pattern.permute.xlu0 2
    %2807 = vperm.xlu0 %2806, %v2020
    %v2808 = vpop.permute.xlu0 %2807
    %2809 = vset.pattern.permute.xlu0 2
    %2810 = vperm.xlu0 %2809, %v2021
    %v2811 = vpop.permute.xlu0 %2810
    %2812 = vset.pattern.permute.xlu0 2
    %2813 = vperm.xlu0 %2812, %v2022
    %v2814 = vpop.permute.xlu0 %2813
    %2815 = vset.pattern.permute.xlu0 2
    %2816 = vperm.xlu0 %2815, %v2023
    %v2817 = vpop.permute.xlu0 %2816
    %2818 = vset.pattern.permute.xlu0 2
    %2819 = vperm.xlu0 %2818, %v2024
    %v2820 = vpop.permute.xlu0 %2819
    %2821 = vset.pattern.permute.xlu0 2
    %2822 = vperm.xlu0 %2821, %v2025
    %v2823 = vpop.permute.xlu0 %2822
    %2824 = vset.pattern.permute.xlu0 2
    %2825 = vperm.xlu0 %2824, %v2026
    %v2826 = vpop.permute.xlu0 %2825
    %2827 = vset.pattern.permute.xlu0 2
    %2828 = vperm.xlu0 %2827, %v2027
    %v2829 = vpop.permute.xlu0 %2828
    %2830 = vset.pattern.permute.xlu0 2
    %2831 = vperm.xlu0 %2830, %v2028
    %v2832 = vpop.permute.xlu0 %2831
    %2833 = vset.pattern.permute.xlu0 2
    %2834 = vperm.xlu0 %2833, %v2029
    %v2835 = vpop.permute.xlu0 %2834
    %2836 = vset.pattern.permute.xlu0 2
    %2837 = vperm.xlu0 %2836, %v2030
    %v2838 = vpop.permute.xlu0 %2837
    %2839 = vset.pattern.permute.xlu0 2
    %2840 = vperm.xlu0 %2839, %v2031
    %v2841 = vpop.permute.xlu0 %2840
    %2842 = vset.pattern.permute.xlu0 2
    %2843 = vperm.xlu0 %2842, %v2032
    %v2844 = vpop.permute.xlu0 %2843
    %v2845 = vlaneseq
    %v2846 = vshrl.u32 %v2845, 7
    %v2847 = vsub.s32 %v65, %v2846
    %v2848 = vrot.slane %v2751, %v2847
    %v2849 = vlaneseq
    %v2850 = vshrl.u32 %v2849, 7
    %v2851 = vsub.s32 %v2165, %v2850
    %v2852 = vrot.slane %v2754, %v2851
    %v2853 = vsel %vm2170, %v2852, %v2848
    %v2854 = vlaneseq
    %v2855 = vshrl.u32 %v2854, 7
    %v2856 = vsub.s32 %v65, %v2855
    %v2857 = vrot.slane %v2757, %v2856
    %v2858 = vlaneseq
    %v2859 = vshrl.u32 %v2858, 7
    %v2860 = vsub.s32 %v2165, %v2859
    %v2861 = vrot.slane %v2760, %v2860
    %v2862 = vsel %vm2170, %v2861, %v2857
    %v2863 = vlaneseq
    %v2864 = vshrl.u32 %v2863, 7
    %v2865 = vsub.s32 %v65, %v2864
    %v2866 = vrot.slane %v2763, %v2865
    %v2867 = vlaneseq
    %v2868 = vshrl.u32 %v2867, 7
    %v2869 = vsub.s32 %v2165, %v2868
    %v2870 = vrot.slane %v2766, %v2869
    %v2871 = vsel %vm2170, %v2870, %v2866
    %v2872 = vlaneseq
    %v2873 = vshrl.u32 %v2872, 7
    %v2874 = vsub.s32 %v65, %v2873
    %v2875 = vrot.slane %v2769, %v2874
    %v2876 = vlaneseq
    %v2877 = vshrl.u32 %v2876, 7
    %v2878 = vsub.s32 %v2165, %v2877
    %v2879 = vrot.slane %v2772, %v2878
    %v2880 = vsel %vm2170, %v2879, %v2875
    %v2881 = vlaneseq
    %v2882 = vshrl.u32 %v2881, 7
    %v2883 = vsub.s32 %v65, %v2882
    %v2884 = vrot.slane %v2775, %v2883
    %v2885 = vlaneseq
    %v2886 = vshrl.u32 %v2885, 7
    %v2887 = vsub.s32 %v2165, %v2886
    %v2888 = vrot.slane %v2778, %v2887
    %v2889 = vsel %vm2170, %v2888, %v2884
    %v2890 = vlaneseq
    %v2891 = vshrl.u32 %v2890, 7
    %v2892 = vsub.s32 %v65, %v2891
    %v2893 = vrot.slane %v2781, %v2892
    %v2894 = vlaneseq
    %v2895 = vshrl.u32 %v2894, 7
    %v2896 = vsub.s32 %v2165, %v2895
    %v2897 = vrot.slane %v2784, %v2896
    %v2898 = vsel %vm2170, %v2897, %v2893
    %v2899 = vlaneseq
    %v2900 = vshrl.u32 %v2899, 7
    %v2901 = vsub.s32 %v65, %v2900
    %v2902 = vrot.slane %v2787, %v2901
    %v2903 = vlaneseq
    %v2904 = vshrl.u32 %v2903, 7
    %v2905 = vsub.s32 %v2165, %v2904
    %v2906 = vrot.slane %v2790, %v2905
    %v2907 = vsel %vm2170, %v2906, %v2902
    %v2908 = vlaneseq
    %v2909 = vshrl.u32 %v2908, 7
    %v2910 = vsub.s32 %v65, %v2909
    %v2911 = vrot.slane %v2793, %v2910
    %v2912 = vlaneseq
    %v2913 = vshrl.u32 %v2912, 7
    %v2914 = vsub.s32 %v2165, %v2913
    %v2915 = vrot.slane %v2796, %v2914
    %v2916 = vsel %vm2170, %v2915, %v2911
    %v2917 = vlaneseq
    %v2918 = vshrl.u32 %v2917, 7
    %v2919 = vsub.s32 %v65, %v2918
    %v2920 = vrot.slane %v2799, %v2919
    %v2921 = vlaneseq
    %v2922 = vshrl.u32 %v2921, 7
    %v2923 = vsub.s32 %v2165, %v2922
    %v2924 = vrot.slane %v2802, %v2923
    %v2925 = vsel %vm2170, %v2924, %v2920
    %v2926 = vlaneseq
    %v2927 = vshrl.u32 %v2926, 7
    %v2928 = vsub.s32 %v65, %v2927
    %v2929 = vrot.slane %v2805, %v2928
    %v2930 = vlaneseq
    %v2931 = vshrl.u32 %v2930, 7
    %v2932 = vsub.s32 %v2165, %v2931
    %v2933 = vrot.slane %v2808, %v2932
    %v2934 = vsel %vm2170, %v2933, %v2929
    %v2935 = vlaneseq
    %v2936 = vshrl.u32 %v2935, 7
    %v2937 = vsub.s32 %v65, %v2936
    %v2938 = vrot.slane %v2811, %v2937
    %v2939 = vlaneseq
    %v2940 = vshrl.u32 %v2939, 7
    %v2941 = vsub.s32 %v2165, %v2940
    %v2942 = vrot.slane %v2814, %v2941
    %v2943 = vsel %vm2170, %v2942, %v2938
    %v2944 = vlaneseq
    %v2945 = vshrl.u32 %v2944, 7
    %v2946 = vsub.s32 %v65, %v2945
    %v2947 = vrot.slane %v2817, %v2946
    %v2948 = vlaneseq
    %v2949 = vshrl.u32 %v2948, 7
    %v2950 = vsub.s32 %v2165, %v2949
    %v2951 = vrot.slane %v2820, %v2950
    %v2952 = vsel %vm2170, %v2951, %v2947
    %v2953 = vlaneseq
    %v2954 = vshrl.u32 %v2953, 7
    %v2955 = vsub.s32 %v65, %v2954
    %v2956 = vrot.slane %v2823, %v2955
    %v2957 = vlaneseq
    %v2958 = vshrl.u32 %v2957, 7
    %v2959 = vsub.s32 %v2165, %v2958
    %v2960 = vrot.slane %v2826, %v2959
    %v2961 = vsel %vm2170, %v2960, %v2956
    %v2962 = vlaneseq
    %v2963 = vshrl.u32 %v2962, 7
    %v2964 = vsub.s32 %v65, %v2963
    %v2965 = vrot.slane %v2829, %v2964
    %v2966 = vlaneseq
    %v2967 = vshrl.u32 %v2966, 7
    %v2968 = vsub.s32 %v2165, %v2967
    %v2969 = vrot.slane %v2832, %v2968
    %v2970 = vsel %vm2170, %v2969, %v2965
    %v2971 = vlaneseq
    %v2972 = vshrl.u32 %v2971, 7
    %v2973 = vsub.s32 %v65, %v2972
    %v2974 = vrot.slane %v2835, %v2973
    %v2975 = vlaneseq
    %v2976 = vshrl.u32 %v2975, 7
    %v2977 = vsub.s32 %v2165, %v2976
    %v2978 = vrot.slane %v2838, %v2977
    %v2979 = vsel %vm2170, %v2978, %v2974
    %v2980 = vlaneseq
    %v2981 = vshrl.u32 %v2980, 7
    %v2982 = vsub.s32 %v65, %v2981
    %v2983 = vrot.slane %v2841, %v2982
    %v2984 = vlaneseq
    %v2985 = vshrl.u32 %v2984, 7
    %v2986 = vsub.s32 %v2165, %v2985
    %v2987 = vrot.slane %v2844, %v2986
    %v2988 = vsel %vm2170, %v2987, %v2983
    %v2989 = vsel %vm2307, %v2862, %v2853
    %v2990 = vsel %vm2309, %v2871, %v2989
    %v2991 = vsel %vm2311, %v2880, %v2990
    %v2992 = vsel %vm2313, %v2889, %v2991
    %v2993 = vsel %vm2315, %v2898, %v2992
    %v2994 = vsel %vm2317, %v2907, %v2993
    %v2995 = vsel %vm2319, %v2916, %v2994
    %v2996 = vsel %vm2307, %v2934, %v2925
    %v2997 = vsel %vm2309, %v2943, %v2996
    %v2998 = vsel %vm2311, %v2952, %v2997
    %v2999 = vsel %vm2313, %v2961, %v2998
    %v3000 = vsel %vm2315, %v2970, %v2999
    %v3001 = vsel %vm2317, %v2979, %v3000
    %v3002 = vsel %vm2319, %v2988, %v3001
    %3003 = vrot.lane.b32.xlu0 %v505, 112
    %v3004 = vpop.permute.xlu0 %3003
    %3005 = vrot.lane.b32.xlu0 %v506, 112
    %v3006 = vpop.permute.xlu0 %3005
    %v3009 = vsel %vm2328, %v2995, 0
    %v3011 = vsel %vm2328, %v3002, 0
    %3013 = vmatprep.subr.mxu0 0.0
    %3014 = vmatpush1.msra.mxu0 %v3004
    %3015 = vmatprep.subr.mxu0 0.0
    %3016 = vmatpush1.msra.mxu0 %v3006
    %3017 = vmatprep.subr.mxu0 0.0
    %3018 = vmatpush1.msra.mxu0 0.0
    %3019 = vmatprep.subr.mxu0 0.0
    %3020 = vmatpush1.msra.mxu0 0.0
    %3021 = vmatprep.subr.mxu0 0.0
    %3022 = vmatpush1.msra.mxu0 0.0
    %3023 = vmatprep.subr.mxu0 0.0
    %3024 = vmatpush1.msra.mxu0 0.0
    %3025 = vmatprep.subr.mxu0 0.0
    %3026 = vmatpush1.msra.mxu0 0.0
    %3027 = vmatprep.subr.mxu0 0.0
    %3028 = vmatpush1.msra.mxu0 0.0
    %3029 = vmatprep.subr.mxu0 0.0
    %3030 = vmatpush1.msra.mxu0 0.0
    %3031 = vmatprep.subr.mxu0 0.0
    %3032 = vmatpush1.msra.mxu0 0.0
    %3033 = vmatprep.subr.mxu0 0.0
    %3034 = vmatpush1.msra.mxu0 0.0
    %3035 = vmatprep.subr.mxu0 0.0
    %3036 = vmatpush1.msra.mxu0 0.0
    %3037 = vmatprep.subr.mxu0 0.0
    %3038 = vmatpush1.msra.mxu0 0.0
    %3039 = vmatprep.subr.mxu0 0.0
    %3040 = vmatpush1.msra.mxu0 0.0
    %3041 = vmatprep.subr.mxu0 0.0
    %3042 = vmatpush1.msra.mxu0 0.0
    %3043 = vmatprep.subr.mxu0 0.0
    %3044 = vmatpush1.msra.mxu0 0.0
    %3045 = vmatprep.subr.mxu0 0.0
    %3046 = vmatpush1.msra.mxu0 0.0
    %3047 = vmatprep.subr.mxu0 0.0
    %3048 = vmatpush1.msra.mxu0 0.0
    %3049 = vmatprep.subr.mxu0 0.0
    %3050 = vmatpush1.msra.mxu0 0.0
    %3051 = vmatprep.subr.mxu0 0.0
    %3052 = vmatpush1.msra.mxu0 0.0
    %3053 = vmatprep.subr.mxu0 0.0
    %3054 = vmatpush1.msra.mxu0 0.0
    %3055 = vmatprep.subr.mxu0 0.0
    %3056 = vmatpush1.msra.mxu0 0.0
    %3057 = vmatprep.subr.mxu0 0.0
    %3058 = vmatpush1.msra.mxu0 0.0
    %3059 = vmatprep.subr.mxu0 0.0
    %3060 = vmatpush1.msra.mxu0 0.0
    %3061 = vmatprep.subr.mxu0 0.0
    %3062 = vmatpush1.msra.mxu0 0.0
    %3063 = vmatprep.subr.mxu0 0.0
    %3064 = vmatpush1.msra.mxu0 0.0
    %3065 = vmatprep.subr.mxu0 0.0
    %3066 = vmatpush1.msra.mxu0 0.0
    %3067 = vmatprep.subr.mxu0 0.0
    %3068 = vmatpush1.msra.mxu0 0.0
    %3069 = vmatprep.subr.mxu0 0.0
    %3070 = vmatpush1.msra.mxu0 0.0
    %3071 = vmatprep.subr.mxu0 0.0
    %3072 = vmatpush1.msra.mxu0 0.0
    %3073 = vmatprep.subr.mxu0 0.0
    %3074 = vmatpush1.msra.mxu0 0.0
    %3075 = vmatprep.subr.mxu0 0.0
    %3076 = vmatpush1.msra.mxu0 0.0
    %3077 = vmatprep.mubr.f32.mxu0 0.0
    %3078 = vmatmul.mubr.f32.gmra.mrb[0].mxu0 %v3009
    %v3079 = vpop.f32.mrb[0].mxu0
    %v3080 = vadd.f32 0.0, %v3079
    %v3081 = vpop.f32.mrb[0].mxu0
    %3082 = vmatprep.mubr.f32.mxu0 0.0
    %3083 = vmatmul.mubr.f32.gmra.mrb[0].mxu0 %v3011
    %v3084 = vpop.f32.mrb[0].mxu0
    %v3085 = vadd.f32 0.0, %v3084
    %v3086 = vpop.f32.mrb[0].mxu0
    %3087 = vdwg.mxu0
    %3088 = vset.pattern.permute.xlu0 3
    %3089 = vperm.xlu0 %3088, %v2001
    %v3090 = vpop.permute.xlu0 %3089
    %3091 = vset.pattern.permute.xlu0 3
    %3092 = vperm.xlu0 %3091, %v2002
    %v3093 = vpop.permute.xlu0 %3092
    %3094 = vset.pattern.permute.xlu0 3
    %3095 = vperm.xlu0 %3094, %v2003
    %v3096 = vpop.permute.xlu0 %3095
    %3097 = vset.pattern.permute.xlu0 3
    %3098 = vperm.xlu0 %3097, %v2004
    %v3099 = vpop.permute.xlu0 %3098
    %3100 = vset.pattern.permute.xlu0 3
    %3101 = vperm.xlu0 %3100, %v2005
    %v3102 = vpop.permute.xlu0 %3101
    %3103 = vset.pattern.permute.xlu0 3
    %3104 = vperm.xlu0 %3103, %v2006
    %v3105 = vpop.permute.xlu0 %3104
    %3106 = vset.pattern.permute.xlu0 3
    %3107 = vperm.xlu0 %3106, %v2007
    %v3108 = vpop.permute.xlu0 %3107
    %3109 = vset.pattern.permute.xlu0 3
    %3110 = vperm.xlu0 %3109, %v2008
    %v3111 = vpop.permute.xlu0 %3110
    %3112 = vset.pattern.permute.xlu0 3
    %3113 = vperm.xlu0 %3112, %v2009
    %v3114 = vpop.permute.xlu0 %3113
    %3115 = vset.pattern.permute.xlu0 3
    %3116 = vperm.xlu0 %3115, %v2010
    %v3117 = vpop.permute.xlu0 %3116
    %3118 = vset.pattern.permute.xlu0 3
    %3119 = vperm.xlu0 %3118, %v2011
    %v3120 = vpop.permute.xlu0 %3119
    %3121 = vset.pattern.permute.xlu0 3
    %3122 = vperm.xlu0 %3121, %v2012
    %v3123 = vpop.permute.xlu0 %3122
    %3124 = vset.pattern.permute.xlu0 3
    %3125 = vperm.xlu0 %3124, %v2013
    %v3126 = vpop.permute.xlu0 %3125
    %3127 = vset.pattern.permute.xlu0 3
    %3128 = vperm.xlu0 %3127, %v2014
    %v3129 = vpop.permute.xlu0 %3128
    %3130 = vset.pattern.permute.xlu0 3
    %3131 = vperm.xlu0 %3130, %v2015
    %v3132 = vpop.permute.xlu0 %3131
    %3133 = vset.pattern.permute.xlu0 3
    %3134 = vperm.xlu0 %3133, %v2016
    %v3135 = vpop.permute.xlu0 %3134
    %3136 = vset.pattern.permute.xlu0 3
    %3137 = vperm.xlu0 %3136, %v2017
    %v3138 = vpop.permute.xlu0 %3137
    %3139 = vset.pattern.permute.xlu0 3
    %3140 = vperm.xlu0 %3139, %v2018
    %v3141 = vpop.permute.xlu0 %3140
    %3142 = vset.pattern.permute.xlu0 3
    %3143 = vperm.xlu0 %3142, %v2019
    %v3144 = vpop.permute.xlu0 %3143
    %3145 = vset.pattern.permute.xlu0 3
    %3146 = vperm.xlu0 %3145, %v2020
    %v3147 = vpop.permute.xlu0 %3146
    %3148 = vset.pattern.permute.xlu0 3
    %3149 = vperm.xlu0 %3148, %v2021
    %v3150 = vpop.permute.xlu0 %3149
    %3151 = vset.pattern.permute.xlu0 3
    %3152 = vperm.xlu0 %3151, %v2022
    %v3153 = vpop.permute.xlu0 %3152
    %3154 = vset.pattern.permute.xlu0 3
    %3155 = vperm.xlu0 %3154, %v2023
    %v3156 = vpop.permute.xlu0 %3155
    %3157 = vset.pattern.permute.xlu0 3
    %3158 = vperm.xlu0 %3157, %v2024
    %v3159 = vpop.permute.xlu0 %3158
    %3160 = vset.pattern.permute.xlu0 3
    %3161 = vperm.xlu0 %3160, %v2025
    %v3162 = vpop.permute.xlu0 %3161
    %3163 = vset.pattern.permute.xlu0 3
    %3164 = vperm.xlu0 %3163, %v2026
    %v3165 = vpop.permute.xlu0 %3164
    %3166 = vset.pattern.permute.xlu0 3
    %3167 = vperm.xlu0 %3166, %v2027
    %v3168 = vpop.permute.xlu0 %3167
    %3169 = vset.pattern.permute.xlu0 3
    %3170 = vperm.xlu0 %3169, %v2028
    %v3171 = vpop.permute.xlu0 %3170
    %3172 = vset.pattern.permute.xlu0 3
    %3173 = vperm.xlu0 %3172, %v2029
    %v3174 = vpop.permute.xlu0 %3173
    %3175 = vset.pattern.permute.xlu0 3
    %3176 = vperm.xlu0 %3175, %v2030
    %v3177 = vpop.permute.xlu0 %3176
    %3178 = vset.pattern.permute.xlu0 3
    %3179 = vperm.xlu0 %3178, %v2031
    %v3180 = vpop.permute.xlu0 %3179
    %3181 = vset.pattern.permute.xlu0 3
    %3182 = vperm.xlu0 %3181, %v2032
    %v3183 = vpop.permute.xlu0 %3182
    %v3184 = vlaneseq
    %v3185 = vshrl.u32 %v3184, 7
    %v3186 = vsub.s32 %v65, %v3185
    %v3187 = vrot.slane %v3090, %v3186
    %v3188 = vlaneseq
    %v3189 = vshrl.u32 %v3188, 7
    %v3190 = vsub.s32 %v2165, %v3189
    %v3191 = vrot.slane %v3093, %v3190
    %v3192 = vsel %vm2170, %v3191, %v3187
    %v3193 = vlaneseq
    %v3194 = vshrl.u32 %v3193, 7
    %v3195 = vsub.s32 %v65, %v3194
    %v3196 = vrot.slane %v3096, %v3195
    %v3197 = vlaneseq
    %v3198 = vshrl.u32 %v3197, 7
    %v3199 = vsub.s32 %v2165, %v3198
    %v3200 = vrot.slane %v3099, %v3199
    %v3201 = vsel %vm2170, %v3200, %v3196
    %v3202 = vlaneseq
    %v3203 = vshrl.u32 %v3202, 7
    %v3204 = vsub.s32 %v65, %v3203
    %v3205 = vrot.slane %v3102, %v3204
    %v3206 = vlaneseq
    %v3207 = vshrl.u32 %v3206, 7
    %v3208 = vsub.s32 %v2165, %v3207
    %v3209 = vrot.slane %v3105, %v3208
    %v3210 = vsel %vm2170, %v3209, %v3205
    %v3211 = vlaneseq
    %v3212 = vshrl.u32 %v3211, 7
    %v3213 = vsub.s32 %v65, %v3212
    %v3214 = vrot.slane %v3108, %v3213
    %v3215 = vlaneseq
    %v3216 = vshrl.u32 %v3215, 7
    %v3217 = vsub.s32 %v2165, %v3216
    %v3218 = vrot.slane %v3111, %v3217
    %v3219 = vsel %vm2170, %v3218, %v3214
    %v3220 = vlaneseq
    %v3221 = vshrl.u32 %v3220, 7
    %v3222 = vsub.s32 %v65, %v3221
    %v3223 = vrot.slane %v3114, %v3222
    %v3224 = vlaneseq
    %v3225 = vshrl.u32 %v3224, 7
    %v3226 = vsub.s32 %v2165, %v3225
    %v3227 = vrot.slane %v3117, %v3226
    %v3228 = vsel %vm2170, %v3227, %v3223
    %v3229 = vlaneseq
    %v3230 = vshrl.u32 %v3229, 7
    %v3231 = vsub.s32 %v65, %v3230
    %v3232 = vrot.slane %v3120, %v3231
    %v3233 = vlaneseq
    %v3234 = vshrl.u32 %v3233, 7
    %v3235 = vsub.s32 %v2165, %v3234
    %v3236 = vrot.slane %v3123, %v3235
    %v3237 = vsel %vm2170, %v3236, %v3232
    %v3238 = vlaneseq
    %v3239 = vshrl.u32 %v3238, 7
    %v3240 = vsub.s32 %v65, %v3239
    %v3241 = vrot.slane %v3126, %v3240
    %v3242 = vlaneseq
    %v3243 = vshrl.u32 %v3242, 7
    %v3244 = vsub.s32 %v2165, %v3243
    %v3245 = vrot.slane %v3129, %v3244
    %v3246 = vsel %vm2170, %v3245, %v3241
    %v3247 = vlaneseq
    %v3248 = vshrl.u32 %v3247, 7
    %v3249 = vsub.s32 %v65, %v3248
    %v3250 = vrot.slane %v3132, %v3249
    %v3251 = vlaneseq
    %v3252 = vshrl.u32 %v3251, 7
    %v3253 = vsub.s32 %v2165, %v3252
    %v3254 = vrot.slane %v3135, %v3253
    %v3255 = vsel %vm2170, %v3254, %v3250
    %v3256 = vlaneseq
    %v3257 = vshrl.u32 %v3256, 7
    %v3258 = vsub.s32 %v65, %v3257
    %v3259 = vrot.slane %v3138, %v3258
    %v3260 = vlaneseq
    %v3261 = vshrl.u32 %v3260, 7
    %v3262 = vsub.s32 %v2165, %v3261
    %v3263 = vrot.slane %v3141, %v3262
    %v3264 = vsel %vm2170, %v3263, %v3259
    %v3265 = vlaneseq
    %v3266 = vshrl.u32 %v3265, 7
    %v3267 = vsub.s32 %v65, %v3266
    %v3268 = vrot.slane %v3144, %v3267
    %v3269 = vlaneseq
    %v3270 = vshrl.u32 %v3269, 7
    %v3271 = vsub.s32 %v2165, %v3270
    %v3272 = vrot.slane %v3147, %v3271
    %v3273 = vsel %vm2170, %v3272, %v3268
    %v3274 = vlaneseq
    %v3275 = vshrl.u32 %v3274, 7
    %v3276 = vsub.s32 %v65, %v3275
    %v3277 = vrot.slane %v3150, %v3276
    %v3278 = vlaneseq
    %v3279 = vshrl.u32 %v3278, 7
    %v3280 = vsub.s32 %v2165, %v3279
    %v3281 = vrot.slane %v3153, %v3280
    %v3282 = vsel %vm2170, %v3281, %v3277
    %v3283 = vlaneseq
    %v3284 = vshrl.u32 %v3283, 7
    %v3285 = vsub.s32 %v65, %v3284
    %v3286 = vrot.slane %v3156, %v3285
    %v3287 = vlaneseq
    %v3288 = vshrl.u32 %v3287, 7
    %v3289 = vsub.s32 %v2165, %v3288
    %v3290 = vrot.slane %v3159, %v3289
    %v3291 = vsel %vm2170, %v3290, %v3286
    %v3292 = vlaneseq
    %v3293 = vshrl.u32 %v3292, 7
    %v3294 = vsub.s32 %v65, %v3293
    %v3295 = vrot.slane %v3162, %v3294
    %v3296 = vlaneseq
    %v3297 = vshrl.u32 %v3296, 7
    %v3298 = vsub.s32 %v2165, %v3297
    %v3299 = vrot.slane %v3165, %v3298
    %v3300 = vsel %vm2170, %v3299, %v3295
    %v3301 = vlaneseq
    %v3302 = vshrl.u32 %v3301, 7
    %v3303 = vsub.s32 %v65, %v3302
    %v3304 = vrot.slane %v3168, %v3303
    %v3305 = vlaneseq
    %v3306 = vshrl.u32 %v3305, 7
    %v3307 = vsub.s32 %v2165, %v3306
    %v3308 = vrot.slane %v3171, %v3307
    %v3309 = vsel %vm2170, %v3308, %v3304
    %v3310 = vlaneseq
    %v3311 = vshrl.u32 %v3310, 7
    %v3312 = vsub.s32 %v65, %v3311
    %v3313 = vrot.slane %v3174, %v3312
    %v3314 = vlaneseq
    %v3315 = vshrl.u32 %v3314, 7
    %v3316 = vsub.s32 %v2165, %v3315
    %v3317 = vrot.slane %v3177, %v3316
    %v3318 = vsel %vm2170, %v3317, %v3313
    %v3319 = vlaneseq
    %v3320 = vshrl.u32 %v3319, 7
    %v3321 = vsub.s32 %v65, %v3320
    %v3322 = vrot.slane %v3180, %v3321
    %v3323 = vlaneseq
    %v3324 = vshrl.u32 %v3323, 7
    %v3325 = vsub.s32 %v2165, %v3324
    %v3326 = vrot.slane %v3183, %v3325
    %v3327 = vsel %vm2170, %v3326, %v3322
    %v3328 = vsel %vm2307, %v3201, %v3192
    %v3329 = vsel %vm2309, %v3210, %v3328
    %v3330 = vsel %vm2311, %v3219, %v3329
    %v3331 = vsel %vm2313, %v3228, %v3330
    %v3332 = vsel %vm2315, %v3237, %v3331
    %v3333 = vsel %vm2317, %v3246, %v3332
    %v3334 = vsel %vm2319, %v3255, %v3333
    %v3335 = vsel %vm2307, %v3273, %v3264
    %v3336 = vsel %vm2309, %v3282, %v3335
    %v3337 = vsel %vm2311, %v3291, %v3336
    %v3338 = vsel %vm2313, %v3300, %v3337
    %v3339 = vsel %vm2315, %v3309, %v3338
    %v3340 = vsel %vm2317, %v3318, %v3339
    %v3341 = vsel %vm2319, %v3327, %v3340
    %3342 = vrot.lane.b32.xlu0 %v505, 104
    %v3343 = vpop.permute.xlu0 %3342
    %3344 = vrot.lane.b32.xlu0 %v506, 104
    %v3345 = vpop.permute.xlu0 %3344
    %v3348 = vsel %vm2328, %v3334, 0
    %v3350 = vsel %vm2328, %v3341, 0
    %3352 = vmatprep.subr.mxu0 0.0
    %3353 = vmatpush1.msra.mxu0 %v3343
    %3354 = vmatprep.subr.mxu0 0.0
    %3355 = vmatpush1.msra.mxu0 %v3345
    %3356 = vmatprep.subr.mxu0 0.0
    %3357 = vmatpush1.msra.mxu0 0.0
    %3358 = vmatprep.subr.mxu0 0.0
    %3359 = vmatpush1.msra.mxu0 0.0
    %3360 = vmatprep.subr.mxu0 0.0
    %3361 = vmatpush1.msra.mxu0 0.0
    %3362 = vmatprep.subr.mxu0 0.0
    %3363 = vmatpush1.msra.mxu0 0.0
    %3364 = vmatprep.subr.mxu0 0.0
    %3365 = vmatpush1.msra.mxu0 0.0
    %3366 = vmatprep.subr.mxu0 0.0
    %3367 = vmatpush1.msra.mxu0 0.0
    %3368 = vmatprep.subr.mxu0 0.0
    %3369 = vmatpush1.msra.mxu0 0.0
    %3370 = vmatprep.subr.mxu0 0.0
    %3371 = vmatpush1.msra.mxu0 0.0
    %3372 = vmatprep.subr.mxu0 0.0
    %3373 = vmatpush1.msra.mxu0 0.0
    %3374 = vmatprep.subr.mxu0 0.0
    %3375 = vmatpush1.msra.mxu0 0.0
    %3376 = vmatprep.subr.mxu0 0.0
    %3377 = vmatpush1.msra.mxu0 0.0
    %3378 = vmatprep.subr.mxu0 0.0
    %3379 = vmatpush1.msra.mxu0 0.0
    %3380 = vmatprep.subr.mxu0 0.0
    %3381 = vmatpush1.msra.mxu0 0.0
    %3382 = vmatprep.subr.mxu0 0.0
    %3383 = vmatpush1.msra.mxu0 0.0
    %3384 = vmatprep.subr.mxu0 0.0
    %3385 = vmatpush1.msra.mxu0 0.0
    %3386 = vmatprep.subr.mxu0 0.0
    %3387 = vmatpush1.msra.mxu0 0.0
    %3388 = vmatprep.subr.mxu0 0.0
    %3389 = vmatpush1.msra.mxu0 0.0
    %3390 = vmatprep.subr.mxu0 0.0
    %3391 = vmatpush1.msra.mxu0 0.0
    %3392 = vmatprep.subr.mxu0 0.0
    %3393 = vmatpush1.msra.mxu0 0.0
    %3394 = vmatprep.subr.mxu0 0.0
    %3395 = vmatpush1.msra.mxu0 0.0
    %3396 = vmatprep.subr.mxu0 0.0
    %3397 = vmatpush1.msra.mxu0 0.0
    %3398 = vmatprep.subr.mxu0 0.0
    %3399 = vmatpush1.msra.mxu0 0.0
    %3400 = vmatprep.subr.mxu0 0.0
    %3401 = vmatpush1.msra.mxu0 0.0
    %3402 = vmatprep.subr.mxu0 0.0
    %3403 = vmatpush1.msra.mxu0 0.0
    %3404 = vmatprep.subr.mxu0 0.0
    %3405 = vmatpush1.msra.mxu0 0.0
    %3406 = vmatprep.subr.mxu0 0.0
    %3407 = vmatpush1.msra.mxu0 0.0
    %3408 = vmatprep.subr.mxu0 0.0
    %3409 = vmatpush1.msra.mxu0 0.0
    %3410 = vmatprep.subr.mxu0 0.0
    %3411 = vmatpush1.msra.mxu0 0.0
    %3412 = vmatprep.subr.mxu0 0.0
    %3413 = vmatpush1.msra.mxu0 0.0
    %3414 = vmatprep.subr.mxu0 0.0
    %3415 = vmatpush1.msra.mxu0 0.0
    %3416 = vmatprep.mubr.f32.mxu0 0.0
    %3417 = vmatmul.mubr.f32.gmra.mrb[0].mxu0 %v3348
    %v3418 = vpop.f32.mrb[0].mxu0
    %v3419 = vadd.f32 0.0, %v3418
    %v3420 = vpop.f32.mrb[0].mxu0
    %3421 = vmatprep.mubr.f32.mxu0 0.0
    %3422 = vmatmul.mubr.f32.gmra.mrb[0].mxu0 %v3350
    %v3423 = vpop.f32.mrb[0].mxu0
    %v3424 = vadd.f32 0.0, %v3423
    %v3425 = vpop.f32.mrb[0].mxu0
    %3426 = vdwg.mxu0
    %3429 = vrot.lane.b32.xlu0 %v2741, 8
    %v3430 = vpop.permute.xlu0 %3429
    %3431 = vrot.lane.b32.xlu0 %v2746, 8
    %v3432 = vpop.permute.xlu0 %3431
    %3437 = vrot.lane.b32.xlu0 %v3080, 16
    %v3438 = vpop.permute.xlu0 %3437
    %3439 = vrot.lane.b32.xlu0 %v3085, 16
    %v3440 = vpop.permute.xlu0 %3439
    %3445 = vrot.lane.b32.xlu0 %v3419, 24
    %v3446 = vpop.permute.xlu0 %3445
    %3447 = vrot.lane.b32.xlu0 %v3424, 24
    %v3448 = vpop.permute.xlu0 %3447
    %v3451 = vsel %vm342, %v2400, %v3430
    %v3452 = vsel %vm342, %v2405, %v3432
    %v3453 = vsel %vm2328, %v3451, %v3438
    %v3454 = vsel %vm2328, %v3452, %v3440
    %vm3455 = vcmask 195584
    %v3456 = vsel %vm3455, %v3453, %v3446
    %v3457 = vsel %vm3455, %v3454, %v3448
    %v3458 = vlaneseq
    %v3459 = vshrl.u32 %v3458, 7
    %v3460 = vsub.s32 0, %v3459
    %v3461 = vrot.slane %v325, %v3460
    %v3462 = vadd.f32 %v3456, %v3461
    %v3463 = vadd.f32 %v3457, %v3461
    %vm3464 = vcmp.gt.f32.partialorder %v3462, 0.0
    %vm3465 = vcmp.gt.f32.partialorder %v3463, 0.0
    %v3466 = vmin.f32 %v3462, 0.0
    %v3467 = vmin.f32 %v3463, 0.0
    %v3468 = vmul.f32 %v3466, 1.442695
    %v3469 = vpow.pop %v3468
    %v3470 = vmul.f32 %v3467, 1.442695
    %v3471 = vpow.pop %v3470
    %v3472 = vsub.f32 %v3469, 1.0
    %v3473 = vsub.f32 %v3471, 1.0
    %v3474 = vsel %vm3464, %v3462, %v3472
    %v3475 = vsel %vm3465, %v3463, %v3473
    %vm3476 = vcmask 261120
    %v3477 = vsel %vm3476, %v3474, 0.0
    %3478 = vadd.xlane.f32.xlu0 %v3477
    %v3479 = vpop.xlane.xlu0 %3478
    %v3480 = vsel %vm3476, %v3475, 0.0
    %3481 = vadd.xlane.f32.xlu0 %v3480
    %v3482 = vpop.xlane.xlu0 %3481
    %v3483 = vrcp.pop 32.0
    %v3484 = vmul.f32 %v3479, %v3483
    %v3485 = vmul.f32 %v3482, %v3483
    %v3486 = vsub.f32 %v3474, %v3484
    %v3487 = vsub.f32 %v3475, %v3485
    %v3488 = vmul.f32 %v3486, %v3486
    %v3489 = vmul.f32 %v3487, %v3487
    %v3490 = vsel %vm3476, %v3488, 0.0
    %3491 = vadd.xlane.f32.xlu0 %v3490
    %v3492 = vpop.xlane.xlu0 %3491
    %v3493 = vsel %vm3476, %v3489, 0.0
    %3494 = vadd.xlane.f32.xlu0 %v3493
    %v3495 = vpop.xlane.xlu0 %3494
    %v3496 = vmul.f32 %v3492, %v3483
    %v3497 = vmul.f32 %v3495, %v3483
    %v3498 = vadd.f32 %v3496, 1e-05
    %v3499 = vadd.f32 %v3497, 1e-05
    %v3500 = vrsqrt.pop %v3498
    %v3501 = vrsqrt.pop %v3499
    %v3502 = vmul.f32 %v3486, %v3500
    %v3503 = vmul.f32 %v3487, %v3501
    %v3504 = vlaneseq
    %v3505 = vshrl.u32 %v3504, 7
    %v3506 = vsub.s32 1, %v3505
    %v3507 = vrot.slane %v325, %v3506
    %v3508 = vmul.f32 %v3502, %v3507
    %v3509 = vmul.f32 %v3503, %v3507
    %v3510 = vlaneseq
    %v3511 = vshrl.u32 %v3510, 7
    %v3512 = vsub.s32 2, %v3511
    %v3513 = vrot.slane %v325, %v3512
    %v3514 = vadd.f32 %v3508, %v3513
    %v3515 = vadd.f32 %v3509, %v3513
    %v3516 = vadd.f32 %v3514, %v517
    %v3517 = vadd.f32 %v3515, %v518
    %v3518 = vld [vmem:[%s8] sm:$0xff]
    %v3519 = vld [vmem:[%s8 + $0x8] sm:$0xff]
    %v3520 = vld [vmem:[%s8 + $0x10] sm:$0xff]
    %v3521 = vld [vmem:[%s8 + $0x18] sm:$0xff]
    %v3522 = vld [vmem:[%s8 + $0x20] sm:$0xff]
    %v3523 = vld [vmem:[%s8 + $0x28] sm:$0xff]
    %v3524 = vld [vmem:[%s8 + $0x30] sm:$0xff]
    %v3525 = vld [vmem:[%s8 + $0x38] sm:$0xff]
    %v3526 = vld [vmem:[%s8 + $0x40] sm:$0xff]
    %v3527 = vld [vmem:[%s8 + $0x48] sm:$0xff]
    %v3528 = vld [vmem:[%s8 + $0x50] sm:$0xff]
    %v3529 = vld [vmem:[%s8 + $0x58] sm:$0xff]
    %v3530 = vld [vmem:[%s9] sm:$0x7]
    %v3531 = vld [vmem:[%s10] sm:$0xf]
    %v3532 = vld [vmem:[%s11] sm:$0xff]
    %v3533 = vld [vmem:[%s11 + $0x8] sm:$0xff]
    %v3534 = vld [vmem:[%s11 + $0x10] sm:$0xff]
    %v3535 = vld [vmem:[%s11 + $0x18] sm:$0xff]
    %v3536 = vld [vmem:[%s11 + $0x20] sm:$0xff]
    %v3537 = vld [vmem:[%s11 + $0x28] sm:$0xff]
    %v3538 = vld [vmem:[%s11 + $0x30] sm:$0xff]
    %v3539 = vld [vmem:[%s11 + $0x38] sm:$0xff]
    %v3540 = vld [vmem:[%s11 + $0x40] sm:$0xff]
    %v3541 = vld [vmem:[%s11 + $0x48] sm:$0xff]
    %v3542 = vld [vmem:[%s11 + $0x50] sm:$0xff]
    %v3543 = vld [vmem:[%s11 + $0x58] sm:$0xff]
    %v3544 = vld [vmem:[%s11 + $0x60] sm:$0xff]
    %v3545 = vld [vmem:[%s11 + $0x68] sm:$0xff]
    %v3546 = vld [vmem:[%s11 + $0x70] sm:$0xff]
    %v3547 = vld [vmem:[%s11 + $0x78] sm:$0xff]
    %v3549 = vsel %vm3476, %v3516, 0
    %v3552 = vsel %vm3476, %v3517, 0
    %3554 = vmatprep.subr.mxu0 %v3519
    %3555 = vmatpush1.msra.mxu0 %v3518
    %3556 = vmatprep.subr.mxu0 %v3522
    %3557 = vmatpush1.msra.mxu0 %v3521
    %3558 = vmatprep.subr.mxu0 %v3525
    %3559 = vmatpush1.msra.mxu0 %v3524
    %3560 = vmatprep.subr.mxu0 %v3528
    %3561 = vmatpush1.msra.mxu0 %v3527
    %3562 = vmatprep.subr.mxu0 0.0
    %3563 = vmatpush1.msra.mxu0 0.0
    %3564 = vmatprep.subr.mxu0 0.0
    %3565 = vmatpush1.msra.mxu0 0.0
    %3566 = vmatprep.subr.mxu0 0.0
    %3567 = vmatpush1.msra.mxu0 0.0
    %3568 = vmatprep.subr.mxu0 0.0
    %3569 = vmatpush1.msra.mxu0 0.0
    %3570 = vmatprep.subr.mxu0 0.0
    %3571 = vmatpush1.msra.mxu0 0.0
    %3572 = vmatprep.subr.mxu0 0.0
    %3573 = vmatpush1.msra.mxu0 0.0
    %3574 = vmatprep.subr.mxu0 0.0
    %3575 = vmatpush1.msra.mxu0 0.0
    %3576 = vmatprep.subr.mxu0 0.0
    %3577 = vmatpush1.msra.mxu0 0.0
    %3578 = vmatprep.subr.mxu0 0.0
    %3579 = vmatpush1.msra.mxu0 0.0
    %3580 = vmatprep.subr.mxu0 0.0
    %3581 = vmatpush1.msra.mxu0 0.0
    %3582 = vmatprep.subr.mxu0 0.0
    %3583 = vmatpush1.msra.mxu0 0.0
    %3584 = vmatprep.subr.mxu0 0.0
    %3585 = vmatpush1.msra.mxu0 0.0
    %3586 = vmatprep.subr.mxu0 0.0
    %3587 = vmatpush1.msra.mxu0 0.0
    %3588 = vmatprep.subr.mxu0 0.0
    %3589 = vmatpush1.msra.mxu0 0.0
    %3590 = vmatprep.subr.mxu0 0.0
    %3591 = vmatpush1.msra.mxu0 0.0
    %3592 = vmatprep.subr.mxu0 0.0
    %3593 = vmatpush1.msra.mxu0 0.0
    %3594 = vmatprep.subr.mxu0 0.0
    %3595 = vmatpush1.msra.mxu0 0.0
    %3596 = vmatprep.subr.mxu0 0.0
    %3597 = vmatpush1.msra.mxu0 0.0
    %3598 = vmatprep.subr.mxu0 0.0
    %3599 = vmatpush1.msra.mxu0 0.0
    %3600 = vmatprep.subr.mxu0 0.0
    %3601 = vmatpush1.msra.mxu0 0.0
    %3602 = vmatprep.subr.mxu0 0.0
    %3603 = vmatpush1.msra.mxu0 0.0
    %3604 = vmatprep.subr.mxu0 0.0
    %3605 = vmatpush1.msra.mxu0 0.0
    %3606 = vmatprep.subr.mxu0 0.0
    %3607 = vmatpush1.msra.mxu0 0.0
    %3608 = vmatprep.subr.mxu0 0.0
    %3609 = vmatpush1.msra.mxu0 0.0
    %3610 = vmatprep.subr.mxu0 0.0
    %3611 = vmatpush1.msra.mxu0 0.0
    %3612 = vmatprep.subr.mxu0 0.0
    %3613 = vmatpush1.msra.mxu0 0.0
    %3614 = vmatprep.subr.mxu0 0.0
    %3615 = vmatpush1.msra.mxu0 0.0
    %3616 = vmatprep.subr.mxu0 0.0
    %3617 = vmatpush1.msra.mxu0 0.0
    %3618 = vmatprep.mubr.f32.mxu0 0.0
    %3619 = vmatmul.mubr.f32.gmra.mrb[0].mxu0 %v3549
    %v3620 = vpop.f32.mrb[0].mxu0
    %v3621 = vadd.f32 0.0, %v3620
    %v3622 = vpop.f32.mrb[0].mxu0
    %v3623 = vadd.f32 0.0, %v3622
    %3624 = vmatprep.mubr.f32.mxu0 0.0
    %3625 = vmatmul.mubr.f32.gmra.mrb[0].mxu0 %v3552
    %v3626 = vpop.f32.mrb[0].mxu0
    %v3627 = vadd.f32 0.0, %v3626
    %v3628 = vpop.f32.mrb[0].mxu0
    %v3629 = vadd.f32 0.0, %v3628
    %3630 = vdwg.mxu0
    %3631 = vmatprep.subr.mxu0 0.0
    %3632 = vmatpush1.msra.mxu0 %v3520
    %3633 = vmatprep.subr.mxu0 0.0
    %3634 = vmatpush1.msra.mxu0 %v3523
    %3635 = vmatprep.subr.mxu0 0.0
    %3636 = vmatpush1.msra.mxu0 %v3526
    %3637 = vmatprep.subr.mxu0 0.0
    %3638 = vmatpush1.msra.mxu0 %v3529
    %3639 = vmatprep.subr.mxu0 0.0
    %3640 = vmatpush1.msra.mxu0 0.0
    %3641 = vmatprep.subr.mxu0 0.0
    %3642 = vmatpush1.msra.mxu0 0.0
    %3643 = vmatprep.subr.mxu0 0.0
    %3644 = vmatpush1.msra.mxu0 0.0
    %3645 = vmatprep.subr.mxu0 0.0
    %3646 = vmatpush1.msra.mxu0 0.0
    %3647 = vmatprep.subr.mxu0 0.0
    %3648 = vmatpush1.msra.mxu0 0.0
    %3649 = vmatprep.subr.mxu0 0.0
    %3650 = vmatpush1.msra.mxu0 0.0
    %3651 = vmatprep.subr.mxu0 0.0
    %3652 = vmatpush1.msra.mxu0 0.0
    %3653 = vmatprep.subr.mxu0 0.0
    %3654 = vmatpush1.msra.mxu0 0.0
    %3655 = vmatprep.subr.mxu0 0.0
    %3656 = vmatpush1.msra.mxu0 0.0
    %3657 = vmatprep.subr.mxu0 0.0
    %3658 = vmatpush1.msra.mxu0 0.0
    %3659 = vmatprep.subr.mxu0 0.0
    %3660 = vmatpush1.msra.mxu0 0.0
    %3661 = vmatprep.subr.mxu0 0.0
    %3662 = vmatpush1.msra.mxu0 0.0
    %3663 = vmatprep.subr.mxu0 0.0
    %3664 = vmatpush1.msra.mxu0 0.0
    %3665 = vmatprep.subr.mxu0 0.0
    %3666 = vmatpush1.msra.mxu0 0.0
    %3667 = vmatprep.subr.mxu0 0.0
    %3668 = vmatpush1.msra.mxu0 0.0
    %3669 = vmatprep.subr.mxu0 0.0
    %3670 = vmatpush1.msra.mxu0 0.0
    %3671 = vmatprep.subr.mxu0 0.0
    %3672 = vmatpush1.msra.mxu0 0.0
    %3673 = vmatprep.subr.mxu0 0.0
    %3674 = vmatpush1.msra.mxu0 0.0
    %3675 = vmatprep.subr.mxu0 0.0
    %3676 = vmatpush1.msra.mxu0 0.0
    %3677 = vmatprep.subr.mxu0 0.0
    %3678 = vmatpush1.msra.mxu0 0.0
    %3679 = vmatprep.subr.mxu0 0.0
    %3680 = vmatpush1.msra.mxu0 0.0
    %3681 = vmatprep.subr.mxu0 0.0
    %3682 = vmatpush1.msra.mxu0 0.0
    %3683 = vmatprep.subr.mxu0 0.0
    %3684 = vmatpush1.msra.mxu0 0.0
    %3685 = vmatprep.subr.mxu0 0.0
    %3686 = vmatpush1.msra.mxu0 0.0
    %3687 = vmatprep.subr.mxu0 0.0
    %3688 = vmatpush1.msra.mxu0 0.0
    %3689 = vmatprep.subr.mxu0 0.0
    %3690 = vmatpush1.msra.mxu0 0.0
    %3691 = vmatprep.subr.mxu0 0.0
    %3692 = vmatpush1.msra.mxu0 0.0
    %3693 = vmatprep.subr.mxu0 0.0
    %3694 = vmatpush1.msra.mxu0 0.0
    %3695 = vmatprep.mubr.f32.mxu0 0.0
    %3696 = vmatmul.mubr.f32.gmra.mrb[0].mxu0 %v3549
    %v3697 = vpop.f32.mrb[0].mxu0
    %v3698 = vadd.f32 0.0, %v3697
    %v3699 = vpop.f32.mrb[0].mxu0
    %3700 = vmatprep.mubr.f32.mxu0 0.0
    %3701 = vmatmul.mubr.f32.gmra.mrb[0].mxu0 %v3552
    %v3702 = vpop.f32.mrb[0].mxu0
    %v3703 = vadd.f32 0.0, %v3702
    %v3704 = vpop.f32.mrb[0].mxu0
    %3705 = vdwg.mxu0
    %v3706 = vlaneseq
    %v3707 = vshrl.u32 %v3706, 7
    %v3708 = vsub.s32 0, %v3707
    %v3709 = vrot.slane %v3530, %v3708
    %v3710 = vadd.f32 %v3621, %v3709
    %v3711 = vadd.f32 %v3627, %v3709
    %v3712 = vlaneseq
    %v3713 = vshrl.u32 %v3712, 7
    %v3714 = vsub.s32 1, %v3713
    %v3715 = vrot.slane %v3530, %v3714
    %v3716 = vadd.f32 %v3623, %v3715
    %v3717 = vadd.f32 %v3629, %v3715
    %v3718 = vlaneseq
    %v3719 = vshrl.u32 %v3718, 7
    %v3720 = vsub.s32 3, %v3719
    %v3721 = vrot.slane %v3531, %v3720
    %v3722 = vadd.f32 %v3698, %v3721
    %v3723 = vadd.f32 %v3703, %v3721
    %v3726 = vcombine.high %v3716, %v3716
    %v3728 = vunpack.c.l.s4 1966171168
    %v3729 = vunpack.c.0.s8 %v3728
    %v3730 = vlaneseq
    %v3731 = vshrl.u32 %v3730, 7
    %v3732 = vsub.s32 %v3729, %v3731
    %v3733 = vrot.slane %v3716, %v3732
    %v3735 = vunpack.c.l.s4 1966171168
    %v3736 = vunpack.c.0.s8 %v3735
    %v3737 = vlaneseq
    %v3738 = vshrl.u32 %v3737, 7
    %v3739 = vsub.s32 %v3736, %v3738
    %v3740 = vrot.slane %v3726, %v3739
    %v3741 = vcombine.high %v3733, %v3733
    %v3742 = vcombine.high %v3740, %v3740
    %v3744 = vunpack.c.l.s4 1966171168
    %v3745 = vunpack.c.0.s8 %v3744
    %v3746 = vlaneseq
    %v3747 = vshrl.u32 %v3746, 7
    %v3748 = vsub.s32 %v3745, %v3747
    %v3749 = vrot.slane %v3733, %v3748
    %v3751 = vunpack.c.l.s4 1966171168
    %v3752 = vunpack.c.0.s8 %v3751
    %v3753 = vlaneseq
    %v3754 = vshrl.u32 %v3753, 7
    %v3755 = vsub.s32 %v3752, %v3754
    %v3756 = vrot.slane %v3740, %v3755
    %v3758 = vunpack.c.l.s4 1966171168
    %v3759 = vunpack.c.0.s8 %v3758
    %v3760 = vlaneseq
    %v3761 = vshrl.u32 %v3760, 7
    %v3762 = vsub.s32 %v3759, %v3761
    %v3763 = vrot.slane %v3741, %v3762
    %v3765 = vunpack.c.l.s4 1966171168
    %v3766 = vunpack.c.0.s8 %v3765
    %v3767 = vlaneseq
    %v3768 = vshrl.u32 %v3767, 7
    %v3769 = vsub.s32 %v3766, %v3768
    %v3770 = vrot.slane %v3742, %v3769
    %v3771 = vcombine.high %v3749, %v3749
    %v3772 = vcombine.high %v3756, %v3756
    %v3773 = vcombine.high %v3763, %v3763
    %v3774 = vcombine.high %v3770, %v3770
    %v3775 = vcombine.high %v3717, %v3717
    %v3777 = vunpack.c.l.s4 1966171168
    %v3778 = vunpack.c.0.s8 %v3777
    %v3779 = vlaneseq
    %v3780 = vshrl.u32 %v3779, 7
    %v3781 = vsub.s32 %v3778, %v3780
    %v3782 = vrot.slane %v3717, %v3781
    %v3784 = vunpack.c.l.s4 1966171168
    %v3785 = vunpack.c.0.s8 %v3784
    %v3786 = vlaneseq
    %v3787 = vshrl.u32 %v3786, 7
    %v3788 = vsub.s32 %v3785, %v3787
    %v3789 = vrot.slane %v3775, %v3788
    %v3790 = vcombine.high %v3782, %v3782
    %v3791 = vcombine.high %v3789, %v3789
    %v3793 = vunpack.c.l.s4 1966171168
    %v3794 = vunpack.c.0.s8 %v3793
    %v3795 = vlaneseq
    %v3796 = vshrl.u32 %v3795, 7
    %v3797 = vsub.s32 %v3794, %v3796
    %v3798 = vrot.slane %v3782, %v3797
    %v3800 = vunpack.c.l.s4 1966171168
    %v3801 = vunpack.c.0.s8 %v3800
    %v3802 = vlaneseq
    %v3803 = vshrl.u32 %v3802, 7
    %v3804 = vsub.s32 %v3801, %v3803
    %v3805 = vrot.slane %v3789, %v3804
    %v3807 = vunpack.c.l.s4 1966171168
    %v3808 = vunpack.c.0.s8 %v3807
    %v3809 = vlaneseq
    %v3810 = vshrl.u32 %v3809, 7
    %v3811 = vsub.s32 %v3808, %v3810
    %v3812 = vrot.slane %v3790, %v3811
    %v3814 = vunpack.c.l.s4 1966171168
    %v3815 = vunpack.c.0.s8 %v3814
    %v3816 = vlaneseq
    %v3817 = vshrl.u32 %v3816, 7
    %v3818 = vsub.s32 %v3815, %v3817
    %v3819 = vrot.slane %v3791, %v3818
    %v3820 = vcombine.high %v3798, %v3798
    %v3821 = vcombine.high %v3805, %v3805
    %v3822 = vcombine.high %v3812, %v3812
    %v3823 = vcombine.high %v3819, %v3819
    %v3824 = vlaneseq
    %v3825 = vshrl.u32 %v3824, 7
    %v3826 = vsub.s32 0, %v3825
    %v3827 = vrot.slane %v3749, %v3826
    %v3828 = vlaneseq
    %v3829 = vshrl.u32 %v3828, 7
    %v3830 = vsub.s32 0, %v3829
    %v3831 = vrot.slane %v3763, %v3830
    %v3832 = vlaneseq
    %v3833 = vshrl.u32 %v3832, 7
    %v3834 = vsub.s32 0, %v3833
    %v3835 = vrot.slane %v3771, %v3834
    %v3836 = vlaneseq
    %v3837 = vshrl.u32 %v3836, 7
    %v3838 = vsub.s32 0, %v3837
    %v3839 = vrot.slane %v3773, %v3838
    %v3840 = vlaneseq
    %v3841 = vshrl.u32 %v3840, 7
    %v3842 = vsub.s32 0, %v3841
    %v3843 = vrot.slane %v3756, %v3842
    %v3844 = vlaneseq
    %v3845 = vshrl.u32 %v3844, 7
    %v3846 = vsub.s32 0, %v3845
    %v3847 = vrot.slane %v3770, %v3846
    %v3848 = vlaneseq
    %v3849 = vshrl.u32 %v3848, 7
    %v3850 = vsub.s32 0, %v3849
    %v3851 = vrot.slane %v3772, %v3850
    %v3852 = vlaneseq
    %v3853 = vshrl.u32 %v3852, 7
    %v3854 = vsub.s32 0, %v3853
    %v3855 = vrot.slane %v3774, %v3854
    %v3856 = vlaneseq
    %v3857 = vshrl.u32 %v3856, 7
    %v3858 = vsub.s32 0, %v3857
    %v3859 = vrot.slane %v3798, %v3858
    %v3860 = vlaneseq
    %v3861 = vshrl.u32 %v3860, 7
    %v3862 = vsub.s32 0, %v3861
    %v3863 = vrot.slane %v3812, %v3862
    %v3864 = vlaneseq
    %v3865 = vshrl.u32 %v3864, 7
    %v3866 = vsub.s32 0, %v3865
    %v3867 = vrot.slane %v3820, %v3866
    %v3868 = vlaneseq
    %v3869 = vshrl.u32 %v3868, 7
    %v3870 = vsub.s32 0, %v3869
    %v3871 = vrot.slane %v3822, %v3870
    %v3872 = vlaneseq
    %v3873 = vshrl.u32 %v3872, 7
    %v3874 = vsub.s32 0, %v3873
    %v3875 = vrot.slane %v3805, %v3874
    %v3876 = vlaneseq
    %v3877 = vshrl.u32 %v3876, 7
    %v3878 = vsub.s32 0, %v3877
    %v3879 = vrot.slane %v3819, %v3878
    %v3880 = vlaneseq
    %v3881 = vshrl.u32 %v3880, 7
    %v3882 = vsub.s32 0, %v3881
    %v3883 = vrot.slane %v3821, %v3882
    %v3884 = vlaneseq
    %v3885 = vshrl.u32 %v3884, 7
    %v3886 = vsub.s32 0, %v3885
    %v3887 = vrot.slane %v3823, %v3886
    %v3904 = vadd.f32 %v3827, %v3710
    %v3905 = vadd.f32 %v3827, %v3711
    %v3906 = vadd.f32 %v3831, %v3710
    %v3907 = vadd.f32 %v3831, %v3711
    %v3908 = vadd.f32 %v3835, %v3710
    %v3909 = vadd.f32 %v3835, %v3711
    %v3910 = vadd.f32 %v3839, %v3710
    %v3911 = vadd.f32 %v3839, %v3711
    %v3912 = vadd.f32 %v3843, %v3710
    %v3913 = vadd.f32 %v3843, %v3711
    %v3914 = vadd.f32 %v3847, %v3710
    %v3915 = vadd.f32 %v3847, %v3711
    %v3916 = vadd.f32 %v3851, %v3710
    %v3917 = vadd.f32 %v3851, %v3711
    %v3918 = vadd.f32 %v3855, %v3710
    %v3919 = vadd.f32 %v3855, %v3711
    %v3920 = vadd.f32 %v3859, %v3710
    %v3921 = vadd.f32 %v3859, %v3711
    %v3922 = vadd.f32 %v3863, %v3710
    %v3923 = vadd.f32 %v3863, %v3711
    %v3924 = vadd.f32 %v3867, %v3710
    %v3925 = vadd.f32 %v3867, %v3711
    %v3926 = vadd.f32 %v3871, %v3710
    %v3927 = vadd.f32 %v3871, %v3711
    %v3928 = vadd.f32 %v3875, %v3710
    %v3929 = vadd.f32 %v3875, %v3711
    %v3930 = vadd.f32 %v3879, %v3710
    %v3931 = vadd.f32 %v3879, %v3711
    %v3932 = vadd.f32 %v3883, %v3710
    %v3933 = vadd.f32 %v3883, %v3711
    %v3934 = vadd.f32 %v3887, %v3710
    %v3935 = vadd.f32 %v3887, %v3711
    %v3936 = vlaneseq
    %v3937 = vshrl.u32 %v3936, 7
    %v3938 = vsub.s32 2, %v3937
    %v3939 = vrot.slane %v3530, %v3938
    %v3940 = vmul.f32 %v737, %v3939
    %v3941 = vmul.f32 %v741, %v3939
    %v3942 = vmul.f32 %v748, %v3939
    %v3943 = vmul.f32 %v752, %v3939
    %v3944 = vmul.f32 %v759, %v3939
    %v3945 = vmul.f32 %v763, %v3939
    %v3946 = vmul.f32 %v770, %v3939
    %v3947 = vmul.f32 %v774, %v3939
    %v3948 = vmul.f32 %v781, %v3939
    %v3949 = vmul.f32 %v785, %v3939
    %v3950 = vmul.f32 %v792, %v3939
    %v3951 = vmul.f32 %v796, %v3939
    %v3952 = vmul.f32 %v803, %v3939
    %v3953 = vmul.f32 %v807, %v3939
    %v3954 = vmul.f32 %v814, %v3939
    %v3955 = vmul.f32 %v818, %v3939
    %v3956 = vmul.f32 %v825, %v3939
    %v3957 = vmul.f32 %v829, %v3939
    %v3958 = vmul.f32 %v836, %v3939
    %v3959 = vmul.f32 %v840, %v3939
    %v3960 = vmul.f32 %v847, %v3939
    %v3961 = vmul.f32 %v851, %v3939
    %v3962 = vmul.f32 %v858, %v3939
    %v3963 = vmul.f32 %v862, %v3939
    %v3964 = vmul.f32 %v869, %v3939
    %v3965 = vmul.f32 %v873, %v3939
    %v3966 = vmul.f32 %v880, %v3939
    %v3967 = vmul.f32 %v884, %v3939
    %v3968 = vmul.f32 %v891, %v3939
    %v3969 = vmul.f32 %v895, %v3939
    %v3970 = vmul.f32 %v902, %v3939
    %v3971 = vmul.f32 %v906, %v3939
    %v3972 = vadd.f32 %v3904, %v3940
    %v3973 = vadd.f32 %v3905, %v3941
    %v3974 = vadd.f32 %v3906, %v3942
    %v3975 = vadd.f32 %v3907, %v3943
    %v3976 = vadd.f32 %v3908, %v3944
    %v3977 = vadd.f32 %v3909, %v3945
    %v3978 = vadd.f32 %v3910, %v3946
    %v3979 = vadd.f32 %v3911, %v3947
    %v3980 = vadd.f32 %v3912, %v3948
    %v3981 = vadd.f32 %v3913, %v3949
    %v3982 = vadd.f32 %v3914, %v3950
    %v3983 = vadd.f32 %v3915, %v3951
    %v3984 = vadd.f32 %v3916, %v3952
    %v3985 = vadd.f32 %v3917, %v3953
    %v3986 = vadd.f32 %v3918, %v3954
    %v3987 = vadd.f32 %v3919, %v3955
    %v3988 = vadd.f32 %v3920, %v3956
    %v3989 = vadd.f32 %v3921, %v3957
    %v3990 = vadd.f32 %v3922, %v3958
    %v3991 = vadd.f32 %v3923, %v3959
    %v3992 = vadd.f32 %v3924, %v3960
    %v3993 = vadd.f32 %v3925, %v3961
    %v3994 = vadd.f32 %v3926, %v3962
    %v3995 = vadd.f32 %v3927, %v3963
    %v3996 = vadd.f32 %v3928, %v3964
    %v3997 = vadd.f32 %v3929, %v3965
    %v3998 = vadd.f32 %v3930, %v3966
    %v3999 = vadd.f32 %v3931, %v3967
    %v4000 = vadd.f32 %v3932, %v3968
    %v4001 = vadd.f32 %v3933, %v3969
    %v4002 = vadd.f32 %v3934, %v3970
    %v4003 = vadd.f32 %v3935, %v3971
    %v4004 = vmul.f32 %v3972, 0.2
    %v4005 = vmul.f32 %v3973, 0.2
    %v4006 = vmul.f32 %v3974, 0.2
    %v4007 = vmul.f32 %v3975, 0.2
    %v4008 = vmul.f32 %v3976, 0.2
    %v4009 = vmul.f32 %v3977, 0.2
    %v4010 = vmul.f32 %v3978, 0.2
    %v4011 = vmul.f32 %v3979, 0.2
    %v4012 = vmul.f32 %v3980, 0.2
    %v4013 = vmul.f32 %v3981, 0.2
    %v4014 = vmul.f32 %v3982, 0.2
    %v4015 = vmul.f32 %v3983, 0.2
    %v4016 = vmul.f32 %v3984, 0.2
    %v4017 = vmul.f32 %v3985, 0.2
    %v4018 = vmul.f32 %v3986, 0.2
    %v4019 = vmul.f32 %v3987, 0.2
    %v4020 = vmul.f32 %v3988, 0.2
    %v4021 = vmul.f32 %v3989, 0.2
    %v4022 = vmul.f32 %v3990, 0.2
    %v4023 = vmul.f32 %v3991, 0.2
    %v4024 = vmul.f32 %v3992, 0.2
    %v4025 = vmul.f32 %v3993, 0.2
    %v4026 = vmul.f32 %v3994, 0.2
    %v4027 = vmul.f32 %v3995, 0.2
    %v4028 = vmul.f32 %v3996, 0.2
    %v4029 = vmul.f32 %v3997, 0.2
    %v4030 = vmul.f32 %v3998, 0.2
    %v4031 = vmul.f32 %v3999, 0.2
    %v4032 = vmul.f32 %v4000, 0.2
    %v4033 = vmul.f32 %v4001, 0.2
    %v4034 = vmul.f32 %v4002, 0.2
    %v4035 = vmul.f32 %v4003, 0.2
    %v4036 = vmax.f32 %v3972, %v4004
    %v4037 = vmax.f32 %v3973, %v4005
    %v4038 = vmax.f32 %v3974, %v4006
    %v4039 = vmax.f32 %v3975, %v4007
    %v4040 = vmax.f32 %v3976, %v4008
    %v4041 = vmax.f32 %v3977, %v4009
    %v4042 = vmax.f32 %v3978, %v4010
    %v4043 = vmax.f32 %v3979, %v4011
    %v4044 = vmax.f32 %v3980, %v4012
    %v4045 = vmax.f32 %v3981, %v4013
    %v4046 = vmax.f32 %v3982, %v4014
    %v4047 = vmax.f32 %v3983, %v4015
    %v4048 = vmax.f32 %v3984, %v4016
    %v4049 = vmax.f32 %v3985, %v4017
    %v4050 = vmax.f32 %v3986, %v4018
    %v4051 = vmax.f32 %v3987, %v4019
    %v4052 = vmax.f32 %v3988, %v4020
    %v4053 = vmax.f32 %v3989, %v4021
    %v4054 = vmax.f32 %v3990, %v4022
    %v4055 = vmax.f32 %v3991, %v4023
    %v4056 = vmax.f32 %v3992, %v4024
    %v4057 = vmax.f32 %v3993, %v4025
    %v4058 = vmax.f32 %v3994, %v4026
    %v4059 = vmax.f32 %v3995, %v4027
    %v4060 = vmax.f32 %v3996, %v4028
    %v4061 = vmax.f32 %v3997, %v4029
    %v4062 = vmax.f32 %v3998, %v4030
    %v4063 = vmax.f32 %v3999, %v4031
    %v4064 = vmax.f32 %v4000, %v4032
    %v4065 = vmax.f32 %v4001, %v4033
    %v4066 = vmax.f32 %v4002, %v4034
    %v4067 = vmax.f32 %v4003, %v4035
    %4068 = vmatprep.subr.mxu0 0.0
    %4069 = vmatpush1.msra.mxu0 %v3532
    %4070 = vmatprep.subr.mxu0 0.0
    %4071 = vmatpush1.msra.mxu0 %v3533
    %4072 = vmatprep.subr.mxu0 0.0
    %4073 = vmatpush1.msra.mxu0 %v3534
    %4074 = vmatprep.subr.mxu0 0.0
    %4075 = vmatpush1.msra.mxu0 %v3535
    %4076 = vmatprep.subr.mxu0 0.0
    %4077 = vmatpush1.msra.mxu0 %v3536
    %4078 = vmatprep.subr.mxu0 0.0
    %4079 = vmatpush1.msra.mxu0 %v3537
    %4080 = vmatprep.subr.mxu0 0.0
    %4081 = vmatpush1.msra.mxu0 %v3538
    %4082 = vmatprep.subr.mxu0 0.0
    %4083 = vmatpush1.msra.mxu0 %v3539
    %4084 = vmatprep.subr.mxu0 0.0
    %4085 = vmatpush1.msra.mxu0 %v3540
    %4086 = vmatprep.subr.mxu0 0.0
    %4087 = vmatpush1.msra.mxu0 %v3541
    %4088 = vmatprep.subr.mxu0 0.0
    %4089 = vmatpush1.msra.mxu0 %v3542
    %4090 = vmatprep.subr.mxu0 0.0
    %4091 = vmatpush1.msra.mxu0 %v3543
    %4092 = vmatprep.subr.mxu0 0.0
    %4093 = vmatpush1.msra.mxu0 %v3544
    %4094 = vmatprep.subr.mxu0 0.0
    %4095 = vmatpush1.msra.mxu0 %v3545
    %4096 = vmatprep.subr.mxu0 0.0
    %4097 = vmatpush1.msra.mxu0 %v3546
    %4098 = vmatprep.subr.mxu0 0.0
    %4099 = vmatpush1.msra.mxu0 %v3547
    %4100 = vmatprep.subr.mxu0 0.0
    %4101 = vmatpush1.msra.mxu0 0.0
    %4102 = vmatprep.subr.mxu0 0.0
    %4103 = vmatpush1.msra.mxu0 0.0
    %4104 = vmatprep.subr.mxu0 0.0
    %4105 = vmatpush1.msra.mxu0 0.0
    %4106 = vmatprep.subr.mxu0 0.0
    %4107 = vmatpush1.msra.mxu0 0.0
    %4108 = vmatprep.subr.mxu0 0.0
    %4109 = vmatpush1.msra.mxu0 0.0
    %4110 = vmatprep.subr.mxu0 0.0
    %4111 = vmatpush1.msra.mxu0 0.0
    %4112 = vmatprep.subr.mxu0 0.0
    %4113 = vmatpush1.msra.mxu0 0.0
    %4114 = vmatprep.subr.mxu0 0.0
    %4115 = vmatpush1.msra.mxu0 0.0
    %4116 = vmatprep.subr.mxu0 0.0
    %4117 = vmatpush1.msra.mxu0 0.0
    %4118 = vmatprep.subr.mxu0 0.0
    %4119 = vmatpush1.msra.mxu0 0.0
    %4120 = vmatprep.subr.mxu0 0.0
    %4121 = vmatpush1.msra.mxu0 0.0
    %4122 = vmatprep.subr.mxu0 0.0
    %4123 = vmatpush1.msra.mxu0 0.0
    %4124 = vmatprep.subr.mxu0 0.0
    %4125 = vmatpush1.msra.mxu0 0.0
    %4126 = vmatprep.subr.mxu0 0.0
    %4127 = vmatpush1.msra.mxu0 0.0
    %4128 = vmatprep.subr.mxu0 0.0
    %4129 = vmatpush1.msra.mxu0 0.0
    %4130 = vmatprep.subr.mxu0 0.0
    %4131 = vmatpush1.msra.mxu0 0.0
    %4132 = vmatprep.mubr.f32.mxu0 0.0
    %4133 = vmatmul.mubr.f32.gmra.mrb[0].mxu0 %v4036
    %v4134 = vpop.f32.mrb[0].mxu0
    %v4135 = vadd.f32 0.0, %v4134
    %v4136 = vpop.f32.mrb[0].mxu0
    %4137 = vmatprep.mubr.f32.mxu0 0.0
    %4138 = vmatmul.mubr.f32.gmra.mrb[0].mxu0 %v4037
    %v4139 = vpop.f32.mrb[0].mxu0
    %v4140 = vadd.f32 0.0, %v4139
    %v4141 = vpop.f32.mrb[0].mxu0
    %4142 = vmatprep.mubr.f32.mxu0 0.0
    %4143 = vmatmul.mubr.f32.gmra.mrb[0].mxu0 %v4038
    %v4144 = vpop.f32.mrb[0].mxu0
    %v4145 = vadd.f32 0.0, %v4144
    %v4146 = vpop.f32.mrb[0].mxu0
    %4147 = vmatprep.mubr.f32.mxu0 0.0
    %4148 = vmatmul.mubr.f32.gmra.mrb[0].mxu0 %v4039
    %v4149 = vpop.f32.mrb[0].mxu0
    %v4150 = vadd.f32 0.0, %v4149
    %v4151 = vpop.f32.mrb[0].mxu0
    %4152 = vmatprep.mubr.f32.mxu0 0.0
    %4153 = vmatmul.mubr.f32.gmra.mrb[0].mxu0 %v4040
    %v4154 = vpop.f32.mrb[0].mxu0
    %v4155 = vadd.f32 0.0, %v4154
    %v4156 = vpop.f32.mrb[0].mxu0
    %4157 = vmatprep.mubr.f32.mxu0 0.0
    %4158 = vmatmul.mubr.f32.gmra.mrb[0].mxu0 %v4041
    %v4159 = vpop.f32.mrb[0].mxu0
    %v4160 = vadd.f32 0.0, %v4159
    %v4161 = vpop.f32.mrb[0].mxu0
    %4162 = vmatprep.mubr.f32.mxu0 0.0
    %4163 = vmatmul.mubr.f32.gmra.mrb[0].mxu0 %v4042
    %v4164 = vpop.f32.mrb[0].mxu0
    %v4165 = vadd.f32 0.0, %v4164
    %v4166 = vpop.f32.mrb[0].mxu0
    %4167 = vmatprep.mubr.f32.mxu0 0.0
    %4168 = vmatmul.mubr.f32.gmra.mrb[0].mxu0 %v4043
    %v4169 = vpop.f32.mrb[0].mxu0
    %v4170 = vadd.f32 0.0, %v4169
    %v4171 = vpop.f32.mrb[0].mxu0
    %4172 = vmatprep.mubr.f32.mxu0 0.0
    %4173 = vmatmul.mubr.f32.gmra.mrb[0].mxu0 %v4044
    %v4174 = vpop.f32.mrb[0].mxu0
    %v4175 = vadd.f32 0.0, %v4174
    %v4176 = vpop.f32.mrb[0].mxu0
    %4177 = vmatprep.mubr.f32.mxu0 0.0
    %4178 = vmatmul.mubr.f32.gmra.mrb[0].mxu0 %v4045
    %v4179 = vpop.f32.mrb[0].mxu0
    %v4180 = vadd.f32 0.0, %v4179
    %v4181 = vpop.f32.mrb[0].mxu0
    %4182 = vmatprep.mubr.f32.mxu0 0.0
    %4183 = vmatmul.mubr.f32.gmra.mrb[0].mxu0 %v4046
    %v4184 = vpop.f32.mrb[0].mxu0
    %v4185 = vadd.f32 0.0, %v4184
    %v4186 = vpop.f32.mrb[0].mxu0
    %4187 = vmatprep.mubr.f32.mxu0 0.0
    %4188 = vmatmul.mubr.f32.gmra.mrb[0].mxu0 %v4047
    %v4189 = vpop.f32.mrb[0].mxu0
    %v4190 = vadd.f32 0.0, %v4189
    %v4191 = vpop.f32.mrb[0].mxu0
    %4192 = vmatprep.mubr.f32.mxu0 0.0
    %4193 = vmatmul.mubr.f32.gmra.mrb[0].mxu0 %v4048
    %v4194 = vpop.f32.mrb[0].mxu0
    %v4195 = vadd.f32 0.0, %v4194
    %v4196 = vpop.f32.mrb[0].mxu0
    %4197 = vmatprep.mubr.f32.mxu0 0.0
    %4198 = vmatmul.mubr.f32.gmra.mrb[0].mxu0 %v4049
    %v4199 = vpop.f32.mrb[0].mxu0
    %v4200 = vadd.f32 0.0, %v4199
    %v4201 = vpop.f32.mrb[0].mxu0
    %4202 = vmatprep.mubr.f32.mxu0 0.0
    %4203 = vmatmul.mubr.f32.gmra.mrb[0].mxu0 %v4050
    %v4204 = vpop.f32.mrb[0].mxu0
    %v4205 = vadd.f32 0.0, %v4204
    %v4206 = vpop.f32.mrb[0].mxu0
    %4207 = vmatprep.mubr.f32.mxu0 0.0
    %4208 = vmatmul.mubr.f32.gmra.mrb[0].mxu0 %v4051
    %v4209 = vpop.f32.mrb[0].mxu0
    %v4210 = vadd.f32 0.0, %v4209
    %v4211 = vpop.f32.mrb[0].mxu0
    %4212 = vmatprep.mubr.f32.mxu0 0.0
    %4213 = vmatmul.mubr.f32.gmra.mrb[0].mxu0 %v4052
    %v4214 = vpop.f32.mrb[0].mxu0
    %v4215 = vadd.f32 0.0, %v4214
    %v4216 = vpop.f32.mrb[0].mxu0
    %4217 = vmatprep.mubr.f32.mxu0 0.0
    %4218 = vmatmul.mubr.f32.gmra.mrb[0].mxu0 %v4053
    %v4219 = vpop.f32.mrb[0].mxu0
    %v4220 = vadd.f32 0.0, %v4219
    %v4221 = vpop.f32.mrb[0].mxu0
    %4222 = vmatprep.mubr.f32.mxu0 0.0
    %4223 = vmatmul.mubr.f32.gmra.mrb[0].mxu0 %v4054
    %v4224 = vpop.f32.mrb[0].mxu0
    %v4225 = vadd.f32 0.0, %v4224
    %v4226 = vpop.f32.mrb[0].mxu0
    %4227 = vmatprep.mubr.f32.mxu0 0.0
    %4228 = vmatmul.mubr.f32.gmra.mrb[0].mxu0 %v4055
    %v4229 = vpop.f32.mrb[0].mxu0
    %v4230 = vadd.f32 0.0, %v4229
    %v4231 = vpop.f32.mrb[0].mxu0
    %4232 = vmatprep.mubr.f32.mxu0 0.0
    %4233 = vmatmul.mubr.f32.gmra.mrb[0].mxu0 %v4056
    %v4234 = vpop.f32.mrb[0].mxu0
    %v4235 = vadd.f32 0.0, %v4234
    %v4236 = vpop.f32.mrb[0].mxu0
    %4237 = vmatprep.mubr.f32.mxu0 0.0
    %4238 = vmatmul.mubr.f32.gmra.mrb[0].mxu0 %v4057
    %v4239 = vpop.f32.mrb[0].mxu0
    %v4240 = vadd.f32 0.0, %v4239
    %v4241 = vpop.f32.mrb[0].mxu0
    %4242 = vmatprep.mubr.f32.mxu0 0.0
    %4243 = vmatmul.mubr.f32.gmra.mrb[0].mxu0 %v4058
    %v4244 = vpop.f32.mrb[0].mxu0
    %v4245 = vadd.f32 0.0, %v4244
    %v4246 = vpop.f32.mrb[0].mxu0
    %4247 = vmatprep.mubr.f32.mxu0 0.0
    %4248 = vmatmul.mubr.f32.gmra.mrb[0].mxu0 %v4059
    %v4249 = vpop.f32.mrb[0].mxu0
    %v4250 = vadd.f32 0.0, %v4249
    %v4251 = vpop.f32.mrb[0].mxu0
    %4252 = vmatprep.mubr.f32.mxu0 0.0
    %4253 = vmatmul.mubr.f32.gmra.mrb[0].mxu0 %v4060
    %v4254 = vpop.f32.mrb[0].mxu0
    %v4255 = vadd.f32 0.0, %v4254
    %v4256 = vpop.f32.mrb[0].mxu0
    %4257 = vmatprep.mubr.f32.mxu0 0.0
    %4258 = vmatmul.mubr.f32.gmra.mrb[0].mxu0 %v4061
    %v4259 = vpop.f32.mrb[0].mxu0
    %v4260 = vadd.f32 0.0, %v4259
    %v4261 = vpop.f32.mrb[0].mxu0
    %4262 = vmatprep.mubr.f32.mxu0 0.0
    %4263 = vmatmul.mubr.f32.gmra.mrb[0].mxu0 %v4062
    %v4264 = vpop.f32.mrb[0].mxu0
    %v4265 = vadd.f32 0.0, %v4264
    %v4266 = vpop.f32.mrb[0].mxu0
    %4267 = vmatprep.mubr.f32.mxu0 0.0
    %4268 = vmatmul.mubr.f32.gmra.mrb[0].mxu0 %v4063
    %v4269 = vpop.f32.mrb[0].mxu0
    %v4270 = vadd.f32 0.0, %v4269
    %v4271 = vpop.f32.mrb[0].mxu0
    %4272 = vmatprep.mubr.f32.mxu0 0.0
    %4273 = vmatmul.mubr.f32.gmra.mrb[0].mxu0 %v4064
    %v4274 = vpop.f32.mrb[0].mxu0
    %v4275 = vadd.f32 0.0, %v4274
    %v4276 = vpop.f32.mrb[0].mxu0
    %4277 = vmatprep.mubr.f32.mxu0 0.0
    %4278 = vmatmul.mubr.f32.gmra.mrb[0].mxu0 %v4065
    %v4279 = vpop.f32.mrb[0].mxu0
    %v4280 = vadd.f32 0.0, %v4279
    %v4281 = vpop.f32.mrb[0].mxu0
    %4282 = vmatprep.mubr.f32.mxu0 0.0
    %4283 = vmatmul.mubr.f32.gmra.mrb[0].mxu0 %v4066
    %v4284 = vpop.f32.mrb[0].mxu0
    %v4285 = vadd.f32 0.0, %v4284
    %v4286 = vpop.f32.mrb[0].mxu0
    %4287 = vmatprep.mubr.f32.mxu0 0.0
    %4288 = vmatmul.mubr.f32.gmra.mrb[0].mxu0 %v4067
    %v4289 = vpop.f32.mrb[0].mxu0
    %v4290 = vadd.f32 0.0, %v4289
    %v4291 = vpop.f32.mrb[0].mxu0
    %4292 = vdwg.mxu0
    %v4293 = vsel %vm1504, %v4135, -1e+30
    %v4294 = vsel %vm1505, %v4140, -1e+30
    %v4295 = vsel %vm1506, %v4145, -1e+30
    %v4296 = vsel %vm1507, %v4150, -1e+30
    %v4297 = vsel %vm1508, %v4155, -1e+30
    %v4298 = vsel %vm1509, %v4160, -1e+30
    %v4299 = vsel %vm1510, %v4165, -1e+30
    %v4300 = vsel %vm1511, %v4170, -1e+30
    %v4301 = vsel %vm1512, %v4175, -1e+30
    %v4302 = vsel %vm1513, %v4180, -1e+30
    %v4303 = vsel %vm1514, %v4185, -1e+30
    %v4304 = vsel %vm1515, %v4190, -1e+30
    %v4305 = vsel %vm1516, %v4195, -1e+30
    %v4306 = vsel %vm1517, %v4200, -1e+30
    %v4307 = vsel %vm1518, %v4205, -1e+30
    %v4308 = vsel %vm1519, %v4210, -1e+30
    %v4309 = vsel %vm1520, %v4215, -1e+30
    %v4310 = vsel %vm1521, %v4220, -1e+30
    %v4311 = vsel %vm1522, %v4225, -1e+30
    %v4312 = vsel %vm1523, %v4230, -1e+30
    %v4313 = vsel %vm1524, %v4235, -1e+30
    %v4314 = vsel %vm1525, %v4240, -1e+30
    %v4315 = vsel %vm1526, %v4245, -1e+30
    %v4316 = vsel %vm1527, %v4250, -1e+30
    %v4317 = vsel %vm1528, %v4255, -1e+30
    %v4318 = vsel %vm1529, %v4260, -1e+30
    %v4319 = vsel %vm1530, %v4265, -1e+30
    %v4320 = vsel %vm1531, %v4270, -1e+30
    %v4321 = vsel %vm1532, %v4275, -1e+30
    %v4322 = vsel %vm1533, %v4280, -1e+30
    %v4323 = vsel %vm1534, %v4285, -1e+30
    %v4324 = vsel %vm1535, %v4290, -1e+30
    %v4325 = vsel %vm1568, %v4293, -inf
    %v4326 = vsel %vm1568, %v4294, -inf
    %v4327 = vmax.f32 %v4325, %v4326
    %v4328 = vrot.slane %v4327, 4
    %v4329 = vmax.f32 %v4327, %v4328
    %v4330 = vrot.slane %v4329, 2
    %v4331 = vmax.f32 %v4329, %v4330
    %v4332 = vrot.slane %v4331, 1
    %v4333 = vmax.f32 %v4331, %v4332
    %v4334 = vsel %vm1568, %v4295, -inf
    %v4335 = vsel %vm1568, %v4296, -inf
    %v4336 = vmax.f32 %v4334, %v4335
    %v4337 = vrot.slane %v4336, 4
    %v4338 = vmax.f32 %v4336, %v4337
    %v4339 = vrot.slane %v4338, 2
    %v4340 = vmax.f32 %v4338, %v4339
    %v4341 = vrot.slane %v4340, 1
    %v4342 = vmax.f32 %v4340, %v4341
    %v4343 = vsel %vm1568, %v4297, -inf
    %v4344 = vsel %vm1568, %v4298, -inf
    %v4345 = vmax.f32 %v4343, %v4344
    %v4346 = vrot.slane %v4345, 4
    %v4347 = vmax.f32 %v4345, %v4346
    %v4348 = vrot.slane %v4347, 2
    %v4349 = vmax.f32 %v4347, %v4348
    %v4350 = vrot.slane %v4349, 1
    %v4351 = vmax.f32 %v4349, %v4350
    %v4352 = vsel %vm1568, %v4299, -inf
    %v4353 = vsel %vm1568, %v4300, -inf
    %v4354 = vmax.f32 %v4352, %v4353
    %v4355 = vrot.slane %v4354, 4
    %v4356 = vmax.f32 %v4354, %v4355
    %v4357 = vrot.slane %v4356, 2
    %v4358 = vmax.f32 %v4356, %v4357
    %v4359 = vrot.slane %v4358, 1
    %v4360 = vmax.f32 %v4358, %v4359
    %v4361 = vsel %vm1568, %v4301, -inf
    %v4362 = vsel %vm1568, %v4302, -inf
    %v4363 = vmax.f32 %v4361, %v4362
    %v4364 = vrot.slane %v4363, 4
    %v4365 = vmax.f32 %v4363, %v4364
    %v4366 = vrot.slane %v4365, 2
    %v4367 = vmax.f32 %v4365, %v4366
    %v4368 = vrot.slane %v4367, 1
    %v4369 = vmax.f32 %v4367, %v4368
    %v4370 = vsel %vm1568, %v4303, -inf
    %v4371 = vsel %vm1568, %v4304, -inf
    %v4372 = vmax.f32 %v4370, %v4371
    %v4373 = vrot.slane %v4372, 4
    %v4374 = vmax.f32 %v4372, %v4373
    %v4375 = vrot.slane %v4374, 2
    %v4376 = vmax.f32 %v4374, %v4375
    %v4377 = vrot.slane %v4376, 1
    %v4378 = vmax.f32 %v4376, %v4377
    %v4379 = vsel %vm1568, %v4305, -inf
    %v4380 = vsel %vm1568, %v4306, -inf
    %v4381 = vmax.f32 %v4379, %v4380
    %v4382 = vrot.slane %v4381, 4
    %v4383 = vmax.f32 %v4381, %v4382
    %v4384 = vrot.slane %v4383, 2
    %v4385 = vmax.f32 %v4383, %v4384
    %v4386 = vrot.slane %v4385, 1
    %v4387 = vmax.f32 %v4385, %v4386
    %v4388 = vsel %vm1568, %v4307, -inf
    %v4389 = vsel %vm1568, %v4308, -inf
    %v4390 = vmax.f32 %v4388, %v4389
    %v4391 = vrot.slane %v4390, 4
    %v4392 = vmax.f32 %v4390, %v4391
    %v4393 = vrot.slane %v4392, 2
    %v4394 = vmax.f32 %v4392, %v4393
    %v4395 = vrot.slane %v4394, 1
    %v4396 = vmax.f32 %v4394, %v4395
    %v4397 = vsel %vm1568, %v4309, -inf
    %v4398 = vsel %vm1568, %v4310, -inf
    %v4399 = vmax.f32 %v4397, %v4398
    %v4400 = vrot.slane %v4399, 4
    %v4401 = vmax.f32 %v4399, %v4400
    %v4402 = vrot.slane %v4401, 2
    %v4403 = vmax.f32 %v4401, %v4402
    %v4404 = vrot.slane %v4403, 1
    %v4405 = vmax.f32 %v4403, %v4404
    %v4406 = vsel %vm1568, %v4311, -inf
    %v4407 = vsel %vm1568, %v4312, -inf
    %v4408 = vmax.f32 %v4406, %v4407
    %v4409 = vrot.slane %v4408, 4
    %v4410 = vmax.f32 %v4408, %v4409
    %v4411 = vrot.slane %v4410, 2
    %v4412 = vmax.f32 %v4410, %v4411
    %v4413 = vrot.slane %v4412, 1
    %v4414 = vmax.f32 %v4412, %v4413
    %v4415 = vsel %vm1568, %v4313, -inf
    %v4416 = vsel %vm1568, %v4314, -inf
    %v4417 = vmax.f32 %v4415, %v4416
    %v4418 = vrot.slane %v4417, 4
    %v4419 = vmax.f32 %v4417, %v4418
    %v4420 = vrot.slane %v4419, 2
    %v4421 = vmax.f32 %v4419, %v4420
    %v4422 = vrot.slane %v4421, 1
    %v4423 = vmax.f32 %v4421, %v4422
    %v4424 = vsel %vm1568, %v4315, -inf
    %v4425 = vsel %vm1568, %v4316, -inf
    %v4426 = vmax.f32 %v4424, %v4425
    %v4427 = vrot.slane %v4426, 4
    %v4428 = vmax.f32 %v4426, %v4427
    %v4429 = vrot.slane %v4428, 2
    %v4430 = vmax.f32 %v4428, %v4429
    %v4431 = vrot.slane %v4430, 1
    %v4432 = vmax.f32 %v4430, %v4431
    %v4433 = vsel %vm1568, %v4317, -inf
    %v4434 = vsel %vm1568, %v4318, -inf
    %v4435 = vmax.f32 %v4433, %v4434
    %v4436 = vrot.slane %v4435, 4
    %v4437 = vmax.f32 %v4435, %v4436
    %v4438 = vrot.slane %v4437, 2
    %v4439 = vmax.f32 %v4437, %v4438
    %v4440 = vrot.slane %v4439, 1
    %v4441 = vmax.f32 %v4439, %v4440
    %v4442 = vsel %vm1568, %v4319, -inf
    %v4443 = vsel %vm1568, %v4320, -inf
    %v4444 = vmax.f32 %v4442, %v4443
    %v4445 = vrot.slane %v4444, 4
    %v4446 = vmax.f32 %v4444, %v4445
    %v4447 = vrot.slane %v4446, 2
    %v4448 = vmax.f32 %v4446, %v4447
    %v4449 = vrot.slane %v4448, 1
    %v4450 = vmax.f32 %v4448, %v4449
    %v4451 = vsel %vm1568, %v4321, -inf
    %v4452 = vsel %vm1568, %v4322, -inf
    %v4453 = vmax.f32 %v4451, %v4452
    %v4454 = vrot.slane %v4453, 4
    %v4455 = vmax.f32 %v4453, %v4454
    %v4456 = vrot.slane %v4455, 2
    %v4457 = vmax.f32 %v4455, %v4456
    %v4458 = vrot.slane %v4457, 1
    %v4459 = vmax.f32 %v4457, %v4458
    %v4460 = vsel %vm1568, %v4323, -inf
    %v4461 = vsel %vm1568, %v4324, -inf
    %v4462 = vmax.f32 %v4460, %v4461
    %v4463 = vrot.slane %v4462, 4
    %v4464 = vmax.f32 %v4462, %v4463
    %v4465 = vrot.slane %v4464, 2
    %v4466 = vmax.f32 %v4464, %v4465
    %v4467 = vrot.slane %v4466, 1
    %v4468 = vmax.f32 %v4466, %v4467
    %v4469 = vsub.f32 %v4293, %v4333
    %v4470 = vsub.f32 %v4294, %v4333
    %v4471 = vsub.f32 %v4295, %v4342
    %v4472 = vsub.f32 %v4296, %v4342
    %v4473 = vsub.f32 %v4297, %v4351
    %v4474 = vsub.f32 %v4298, %v4351
    %v4475 = vsub.f32 %v4299, %v4360
    %v4476 = vsub.f32 %v4300, %v4360
    %v4477 = vsub.f32 %v4301, %v4369
    %v4478 = vsub.f32 %v4302, %v4369
    %v4479 = vsub.f32 %v4303, %v4378
    %v4480 = vsub.f32 %v4304, %v4378
    %v4481 = vsub.f32 %v4305, %v4387
    %v4482 = vsub.f32 %v4306, %v4387
    %v4483 = vsub.f32 %v4307, %v4396
    %v4484 = vsub.f32 %v4308, %v4396
    %v4485 = vsub.f32 %v4309, %v4405
    %v4486 = vsub.f32 %v4310, %v4405
    %v4487 = vsub.f32 %v4311, %v4414
    %v4488 = vsub.f32 %v4312, %v4414
    %v4489 = vsub.f32 %v4313, %v4423
    %v4490 = vsub.f32 %v4314, %v4423
    %v4491 = vsub.f32 %v4315, %v4432
    %v4492 = vsub.f32 %v4316, %v4432
    %v4493 = vsub.f32 %v4317, %v4441
    %v4494 = vsub.f32 %v4318, %v4441
    %v4495 = vsub.f32 %v4319, %v4450
    %v4496 = vsub.f32 %v4320, %v4450
    %v4497 = vsub.f32 %v4321, %v4459
    %v4498 = vsub.f32 %v4322, %v4459
    %v4499 = vsub.f32 %v4323, %v4468
    %v4500 = vsub.f32 %v4324, %v4468
    %v4501 = vmul.f32 %v4469, 1.442695
    %v4502 = vpow.pop %v4501
    %v4503 = vmul.f32 %v4470, 1.442695
    %v4504 = vpow.pop %v4503
    %v4505 = vmul.f32 %v4471, 1.442695
    %v4506 = vpow.pop %v4505
    %v4507 = vmul.f32 %v4472, 1.442695
    %v4508 = vpow.pop %v4507
    %v4509 = vmul.f32 %v4473, 1.442695
    %v4510 = vpow.pop %v4509
    %v4511 = vmul.f32 %v4474, 1.442695
    %v4512 = vpow.pop %v4511
    %v4513 = vmul.f32 %v4475, 1.442695
    %v4514 = vpow.pop %v4513
    %v4515 = vmul.f32 %v4476, 1.442695
    %v4516 = vpow.pop %v4515
    %v4517 = vmul.f32 %v4477, 1.442695
    %v4518 = vpow.pop %v4517
    %v4519 = vmul.f32 %v4478, 1.442695
    %v4520 = vpow.pop %v4519
    %v4521 = vmul.f32 %v4479, 1.442695
    %v4522 = vpow.pop %v4521
    %v4523 = vmul.f32 %v4480, 1.442695
    %v4524 = vpow.pop %v4523
    %v4525 = vmul.f32 %v4481, 1.442695
    %v4526 = vpow.pop %v4525
    %v4527 = vmul.f32 %v4482, 1.442695
    %v4528 = vpow.pop %v4527
    %v4529 = vmul.f32 %v4483, 1.442695
    %v4530 = vpow.pop %v4529
    %v4531 = vmul.f32 %v4484, 1.442695
    %v4532 = vpow.pop %v4531
    %v4533 = vmul.f32 %v4485, 1.442695
    %v4534 = vpow.pop %v4533
    %v4535 = vmul.f32 %v4486, 1.442695
    %v4536 = vpow.pop %v4535
    %v4537 = vmul.f32 %v4487, 1.442695
    %v4538 = vpow.pop %v4537
    %v4539 = vmul.f32 %v4488, 1.442695
    %v4540 = vpow.pop %v4539
    %v4541 = vmul.f32 %v4489, 1.442695
    %v4542 = vpow.pop %v4541
    %v4543 = vmul.f32 %v4490, 1.442695
    %v4544 = vpow.pop %v4543
    %v4545 = vmul.f32 %v4491, 1.442695
    %v4546 = vpow.pop %v4545
    %v4547 = vmul.f32 %v4492, 1.442695
    %v4548 = vpow.pop %v4547
    %v4549 = vmul.f32 %v4493, 1.442695
    %v4550 = vpow.pop %v4549
    %v4551 = vmul.f32 %v4494, 1.442695
    %v4552 = vpow.pop %v4551
    %v4553 = vmul.f32 %v4495, 1.442695
    %v4554 = vpow.pop %v4553
    %v4555 = vmul.f32 %v4496, 1.442695
    %v4556 = vpow.pop %v4555
    %v4557 = vmul.f32 %v4497, 1.442695
    %v4558 = vpow.pop %v4557
    %v4559 = vmul.f32 %v4498, 1.442695
    %v4560 = vpow.pop %v4559
    %v4561 = vmul.f32 %v4499, 1.442695
    %v4562 = vpow.pop %v4561
    %v4563 = vmul.f32 %v4500, 1.442695
    %v4564 = vpow.pop %v4563
    %v4565 = vmul.f32 %v4502, %v1270
    %v4566 = vmul.f32 %v4504, %v1274
    %v4567 = vmul.f32 %v4506, %v1281
    %v4568 = vmul.f32 %v4508, %v1285
    %v4569 = vmul.f32 %v4510, %v1292
    %v4570 = vmul.f32 %v4512, %v1296
    %v4571 = vmul.f32 %v4514, %v1303
    %v4572 = vmul.f32 %v4516, %v1307
    %v4573 = vmul.f32 %v4518, %v1314
    %v4574 = vmul.f32 %v4520, %v1318
    %v4575 = vmul.f32 %v4522, %v1325
    %v4576 = vmul.f32 %v4524, %v1329
    %v4577 = vmul.f32 %v4526, %v1336
    %v4578 = vmul.f32 %v4528, %v1340
    %v4579 = vmul.f32 %v4530, %v1347
    %v4580 = vmul.f32 %v4532, %v1351
    %v4581 = vmul.f32 %v4534, %v1358
    %v4582 = vmul.f32 %v4536, %v1362
    %v4583 = vmul.f32 %v4538, %v1369
    %v4584 = vmul.f32 %v4540, %v1373
    %v4585 = vmul.f32 %v4542, %v1380
    %v4586 = vmul.f32 %v4544, %v1384
    %v4587 = vmul.f32 %v4546, %v1391
    %v4588 = vmul.f32 %v4548, %v1395
    %v4589 = vmul.f32 %v4550, %v1402
    %v4590 = vmul.f32 %v4552, %v1406
    %v4591 = vmul.f32 %v4554, %v1413
    %v4592 = vmul.f32 %v4556, %v1417
    %v4593 = vmul.f32 %v4558, %v1424
    %v4594 = vmul.f32 %v4560, %v1428
    %v4595 = vmul.f32 %v4562, %v1435
    %v4596 = vmul.f32 %v4564, %v1439
    %v4597 = vsel %vm1568, %v4565, 0.0
    %v4598 = vsel %vm1568, %v4566, 0.0
    %v4599 = vadd.f32 %v4597, %v4598
    %v4600 = vrot.slane %v4599, 4
    %v4601 = vadd.f32 %v4599, %v4600
    %v4602 = vrot.slane %v4601, 2
    %v4603 = vadd.f32 %v4601, %v4602
    %v4604 = vrot.slane %v4603, 1
    %v4605 = vadd.f32 %v4603, %v4604
    %v4606 = vsel %vm1568, %v4567, 0.0
    %v4607 = vsel %vm1568, %v4568, 0.0
    %v4608 = vadd.f32 %v4606, %v4607
    %v4609 = vrot.slane %v4608, 4
    %v4610 = vadd.f32 %v4608, %v4609
    %v4611 = vrot.slane %v4610, 2
    %v4612 = vadd.f32 %v4610, %v4611
    %v4613 = vrot.slane %v4612, 1
    %v4614 = vadd.f32 %v4612, %v4613
    %v4615 = vsel %vm1568, %v4569, 0.0
    %v4616 = vsel %vm1568, %v4570, 0.0
    %v4617 = vadd.f32 %v4615, %v4616
    %v4618 = vrot.slane %v4617, 4
    %v4619 = vadd.f32 %v4617, %v4618
    %v4620 = vrot.slane %v4619, 2
    %v4621 = vadd.f32 %v4619, %v4620
    %v4622 = vrot.slane %v4621, 1
    %v4623 = vadd.f32 %v4621, %v4622
    %v4624 = vsel %vm1568, %v4571, 0.0
    %v4625 = vsel %vm1568, %v4572, 0.0
    %v4626 = vadd.f32 %v4624, %v4625
    %v4627 = vrot.slane %v4626, 4
    %v4628 = vadd.f32 %v4626, %v4627
    %v4629 = vrot.slane %v4628, 2
    %v4630 = vadd.f32 %v4628, %v4629
    %v4631 = vrot.slane %v4630, 1
    %v4632 = vadd.f32 %v4630, %v4631
    %v4633 = vsel %vm1568, %v4573, 0.0
    %v4634 = vsel %vm1568, %v4574, 0.0
    %v4635 = vadd.f32 %v4633, %v4634
    %v4636 = vrot.slane %v4635, 4
    %v4637 = vadd.f32 %v4635, %v4636
    %v4638 = vrot.slane %v4637, 2
    %v4639 = vadd.f32 %v4637, %v4638
    %v4640 = vrot.slane %v4639, 1
    %v4641 = vadd.f32 %v4639, %v4640
    %v4642 = vsel %vm1568, %v4575, 0.0
    %v4643 = vsel %vm1568, %v4576, 0.0
    %v4644 = vadd.f32 %v4642, %v4643
    %v4645 = vrot.slane %v4644, 4
    %v4646 = vadd.f32 %v4644, %v4645
    %v4647 = vrot.slane %v4646, 2
    %v4648 = vadd.f32 %v4646, %v4647
    %v4649 = vrot.slane %v4648, 1
    %v4650 = vadd.f32 %v4648, %v4649
    %v4651 = vsel %vm1568, %v4577, 0.0
    %v4652 = vsel %vm1568, %v4578, 0.0
    %v4653 = vadd.f32 %v4651, %v4652
    %v4654 = vrot.slane %v4653, 4
    %v4655 = vadd.f32 %v4653, %v4654
    %v4656 = vrot.slane %v4655, 2
    %v4657 = vadd.f32 %v4655, %v4656
    %v4658 = vrot.slane %v4657, 1
    %v4659 = vadd.f32 %v4657, %v4658
    %v4660 = vsel %vm1568, %v4579, 0.0
    %v4661 = vsel %vm1568, %v4580, 0.0
    %v4662 = vadd.f32 %v4660, %v4661
    %v4663 = vrot.slane %v4662, 4
    %v4664 = vadd.f32 %v4662, %v4663
    %v4665 = vrot.slane %v4664, 2
    %v4666 = vadd.f32 %v4664, %v4665
    %v4667 = vrot.slane %v4666, 1
    %v4668 = vadd.f32 %v4666, %v4667
    %v4669 = vsel %vm1568, %v4581, 0.0
    %v4670 = vsel %vm1568, %v4582, 0.0
    %v4671 = vadd.f32 %v4669, %v4670
    %v4672 = vrot.slane %v4671, 4
    %v4673 = vadd.f32 %v4671, %v4672
    %v4674 = vrot.slane %v4673, 2
    %v4675 = vadd.f32 %v4673, %v4674
    %v4676 = vrot.slane %v4675, 1
    %v4677 = vadd.f32 %v4675, %v4676
    %v4678 = vsel %vm1568, %v4583, 0.0
    %v4679 = vsel %vm1568, %v4584, 0.0
    %v4680 = vadd.f32 %v4678, %v4679
    %v4681 = vrot.slane %v4680, 4
    %v4682 = vadd.f32 %v4680, %v4681
    %v4683 = vrot.slane %v4682, 2
    %v4684 = vadd.f32 %v4682, %v4683
    %v4685 = vrot.slane %v4684, 1
    %v4686 = vadd.f32 %v4684, %v4685
    %v4687 = vsel %vm1568, %v4585, 0.0
    %v4688 = vsel %vm1568, %v4586, 0.0
    %v4689 = vadd.f32 %v4687, %v4688
    %v4690 = vrot.slane %v4689, 4
    %v4691 = vadd.f32 %v4689, %v4690
    %v4692 = vrot.slane %v4691, 2
    %v4693 = vadd.f32 %v4691, %v4692
    %v4694 = vrot.slane %v4693, 1
    %v4695 = vadd.f32 %v4693, %v4694
    %v4696 = vsel %vm1568, %v4587, 0.0
    %v4697 = vsel %vm1568, %v4588, 0.0
    %v4698 = vadd.f32 %v4696, %v4697
    %v4699 = vrot.slane %v4698, 4
    %v4700 = vadd.f32 %v4698, %v4699
    %v4701 = vrot.slane %v4700, 2
    %v4702 = vadd.f32 %v4700, %v4701
    %v4703 = vrot.slane %v4702, 1
    %v4704 = vadd.f32 %v4702, %v4703
    %v4705 = vsel %vm1568, %v4589, 0.0
    %v4706 = vsel %vm1568, %v4590, 0.0
    %v4707 = vadd.f32 %v4705, %v4706
    %v4708 = vrot.slane %v4707, 4
    %v4709 = vadd.f32 %v4707, %v4708
    %v4710 = vrot.slane %v4709, 2
    %v4711 = vadd.f32 %v4709, %v4710
    %v4712 = vrot.slane %v4711, 1
    %v4713 = vadd.f32 %v4711, %v4712
    %v4714 = vsel %vm1568, %v4591, 0.0
    %v4715 = vsel %vm1568, %v4592, 0.0
    %v4716 = vadd.f32 %v4714, %v4715
    %v4717 = vrot.slane %v4716, 4
    %v4718 = vadd.f32 %v4716, %v4717
    %v4719 = vrot.slane %v4718, 2
    %v4720 = vadd.f32 %v4718, %v4719
    %v4721 = vrot.slane %v4720, 1
    %v4722 = vadd.f32 %v4720, %v4721
    %v4723 = vsel %vm1568, %v4593, 0.0
    %v4724 = vsel %vm1568, %v4594, 0.0
    %v4725 = vadd.f32 %v4723, %v4724
    %v4726 = vrot.slane %v4725, 4
    %v4727 = vadd.f32 %v4725, %v4726
    %v4728 = vrot.slane %v4727, 2
    %v4729 = vadd.f32 %v4727, %v4728
    %v4730 = vrot.slane %v4729, 1
    %v4731 = vadd.f32 %v4729, %v4730
    %v4732 = vsel %vm1568, %v4595, 0.0
    %v4733 = vsel %vm1568, %v4596, 0.0
    %v4734 = vadd.f32 %v4732, %v4733
    %v4735 = vrot.slane %v4734, 4
    %v4736 = vadd.f32 %v4734, %v4735
    %v4737 = vrot.slane %v4736, 2
    %v4738 = vadd.f32 %v4736, %v4737
    %v4739 = vrot.slane %v4738, 1
    %v4740 = vadd.f32 %v4738, %v4739
    %v4741 = vrcp.pop %v4605
    %v4742 = vrcp.pop %v4614
    %v4743 = vrcp.pop %v4623
    %v4744 = vrcp.pop %v4632
    %v4745 = vrcp.pop %v4641
    %v4746 = vrcp.pop %v4650
    %v4747 = vrcp.pop %v4659
    %v4748 = vrcp.pop %v4668
    %v4749 = vrcp.pop %v4677
    %v4750 = vrcp.pop %v4686
    %v4751 = vrcp.pop %v4695
    %v4752 = vrcp.pop %v4704
    %v4753 = vrcp.pop %v4713
    %v4754 = vrcp.pop %v4722
    %v4755 = vrcp.pop %v4731
    %v4756 = vrcp.pop %v4740
    %v4757 = vmul.f32 %v4565, %v4741
    %v4758 = vmul.f32 %v4566, %v4741
    %v4759 = vmul.f32 %v4567, %v4742
    %v4760 = vmul.f32 %v4568, %v4742
    %v4761 = vmul.f32 %v4569, %v4743
    %v4762 = vmul.f32 %v4570, %v4743
    %v4763 = vmul.f32 %v4571, %v4744
    %v4764 = vmul.f32 %v4572, %v4744
    %v4765 = vmul.f32 %v4573, %v4745
    %v4766 = vmul.f32 %v4574, %v4745
    %v4767 = vmul.f32 %v4575, %v4746
    %v4768 = vmul.f32 %v4576, %v4746
    %v4769 = vmul.f32 %v4577, %v4747
    %v4770 = vmul.f32 %v4578, %v4747
    %v4771 = vmul.f32 %v4579, %v4748
    %v4772 = vmul.f32 %v4580, %v4748
    %v4773 = vmul.f32 %v4581, %v4749
    %v4774 = vmul.f32 %v4582, %v4749
    %v4775 = vmul.f32 %v4583, %v4750
    %v4776 = vmul.f32 %v4584, %v4750
    %v4777 = vmul.f32 %v4585, %v4751
    %v4778 = vmul.f32 %v4586, %v4751
    %v4779 = vmul.f32 %v4587, %v4752
    %v4780 = vmul.f32 %v4588, %v4752
    %v4781 = vmul.f32 %v4589, %v4753
    %v4782 = vmul.f32 %v4590, %v4753
    %v4783 = vmul.f32 %v4591, %v4754
    %v4784 = vmul.f32 %v4592, %v4754
    %v4785 = vmul.f32 %v4593, %v4755
    %v4786 = vmul.f32 %v4594, %v4755
    %v4787 = vmul.f32 %v4595, %v4756
    %v4788 = vmul.f32 %v4596, %v4756
    %4821 = vset.pattern.permute.xlu0 1
    %4822 = vperm.xlu0 %4821, %v4757
    %v4823 = vpop.permute.xlu0 %4822
    %4824 = vset.pattern.permute.xlu0 1
    %4825 = vperm.xlu0 %4824, %v4758
    %v4826 = vpop.permute.xlu0 %4825
    %4827 = vset.pattern.permute.xlu0 1
    %4828 = vperm.xlu0 %4827, %v4759
    %v4829 = vpop.permute.xlu0 %4828
    %4830 = vset.pattern.permute.xlu0 1
    %4831 = vperm.xlu0 %4830, %v4760
    %v4832 = vpop.permute.xlu0 %4831
    %4833 = vset.pattern.permute.xlu0 1
    %4834 = vperm.xlu0 %4833, %v4761
    %v4835 = vpop.permute.xlu0 %4834
    %4836 = vset.pattern.permute.xlu0 1
    %4837 = vperm.xlu0 %4836, %v4762
    %v4838 = vpop.permute.xlu0 %4837
    %4839 = vset.pattern.permute.xlu0 1
    %4840 = vperm.xlu0 %4839, %v4763
    %v4841 = vpop.permute.xlu0 %4840
    %4842 = vset.pattern.permute.xlu0 1
    %4843 = vperm.xlu0 %4842, %v4764
    %v4844 = vpop.permute.xlu0 %4843
    %4845 = vset.pattern.permute.xlu0 1
    %4846 = vperm.xlu0 %4845, %v4765
    %v4847 = vpop.permute.xlu0 %4846
    %4848 = vset.pattern.permute.xlu0 1
    %4849 = vperm.xlu0 %4848, %v4766
    %v4850 = vpop.permute.xlu0 %4849
    %4851 = vset.pattern.permute.xlu0 1
    %4852 = vperm.xlu0 %4851, %v4767
    %v4853 = vpop.permute.xlu0 %4852
    %4854 = vset.pattern.permute.xlu0 1
    %4855 = vperm.xlu0 %4854, %v4768
    %v4856 = vpop.permute.xlu0 %4855
    %4857 = vset.pattern.permute.xlu0 1
    %4858 = vperm.xlu0 %4857, %v4769
    %v4859 = vpop.permute.xlu0 %4858
    %4860 = vset.pattern.permute.xlu0 1
    %4861 = vperm.xlu0 %4860, %v4770
    %v4862 = vpop.permute.xlu0 %4861
    %4863 = vset.pattern.permute.xlu0 1
    %4864 = vperm.xlu0 %4863, %v4771
    %v4865 = vpop.permute.xlu0 %4864
    %4866 = vset.pattern.permute.xlu0 1
    %4867 = vperm.xlu0 %4866, %v4772
    %v4868 = vpop.permute.xlu0 %4867
    %4869 = vset.pattern.permute.xlu0 1
    %4870 = vperm.xlu0 %4869, %v4773
    %v4871 = vpop.permute.xlu0 %4870
    %4872 = vset.pattern.permute.xlu0 1
    %4873 = vperm.xlu0 %4872, %v4774
    %v4874 = vpop.permute.xlu0 %4873
    %4875 = vset.pattern.permute.xlu0 1
    %4876 = vperm.xlu0 %4875, %v4775
    %v4877 = vpop.permute.xlu0 %4876
    %4878 = vset.pattern.permute.xlu0 1
    %4879 = vperm.xlu0 %4878, %v4776
    %v4880 = vpop.permute.xlu0 %4879
    %4881 = vset.pattern.permute.xlu0 1
    %4882 = vperm.xlu0 %4881, %v4777
    %v4883 = vpop.permute.xlu0 %4882
    %4884 = vset.pattern.permute.xlu0 1
    %4885 = vperm.xlu0 %4884, %v4778
    %v4886 = vpop.permute.xlu0 %4885
    %4887 = vset.pattern.permute.xlu0 1
    %4888 = vperm.xlu0 %4887, %v4779
    %v4889 = vpop.permute.xlu0 %4888
    %4890 = vset.pattern.permute.xlu0 1
    %4891 = vperm.xlu0 %4890, %v4780
    %v4892 = vpop.permute.xlu0 %4891
    %4893 = vset.pattern.permute.xlu0 1
    %4894 = vperm.xlu0 %4893, %v4781
    %v4895 = vpop.permute.xlu0 %4894
    %4896 = vset.pattern.permute.xlu0 1
    %4897 = vperm.xlu0 %4896, %v4782
    %v4898 = vpop.permute.xlu0 %4897
    %4899 = vset.pattern.permute.xlu0 1
    %4900 = vperm.xlu0 %4899, %v4783
    %v4901 = vpop.permute.xlu0 %4900
    %4902 = vset.pattern.permute.xlu0 1
    %4903 = vperm.xlu0 %4902, %v4784
    %v4904 = vpop.permute.xlu0 %4903
    %4905 = vset.pattern.permute.xlu0 1
    %4906 = vperm.xlu0 %4905, %v4785
    %v4907 = vpop.permute.xlu0 %4906
    %4908 = vset.pattern.permute.xlu0 1
    %4909 = vperm.xlu0 %4908, %v4786
    %v4910 = vpop.permute.xlu0 %4909
    %4911 = vset.pattern.permute.xlu0 1
    %4912 = vperm.xlu0 %4911, %v4787
    %v4913 = vpop.permute.xlu0 %4912
    %4914 = vset.pattern.permute.xlu0 1
    %4915 = vperm.xlu0 %4914, %v4788
    %v4916 = vpop.permute.xlu0 %4915
    %v4917 = vlaneseq
    %v4918 = vshrl.u32 %v4917, 7
    %v4919 = vsub.s32 %v65, %v4918
    %v4920 = vrot.slane %v4823, %v4919
    %v4921 = vlaneseq
    %v4922 = vshrl.u32 %v4921, 7
    %v4923 = vsub.s32 %v2165, %v4922
    %v4924 = vrot.slane %v4826, %v4923
    %v4925 = vsel %vm2170, %v4924, %v4920
    %v4926 = vlaneseq
    %v4927 = vshrl.u32 %v4926, 7
    %v4928 = vsub.s32 %v65, %v4927
    %v4929 = vrot.slane %v4829, %v4928
    %v4930 = vlaneseq
    %v4931 = vshrl.u32 %v4930, 7
    %v4932 = vsub.s32 %v2165, %v4931
    %v4933 = vrot.slane %v4832, %v4932
    %v4934 = vsel %vm2170, %v4933, %v4929
    %v4935 = vlaneseq
    %v4936 = vshrl.u32 %v4935, 7
    %v4937 = vsub.s32 %v65, %v4936
    %v4938 = vrot.slane %v4835, %v4937
    %v4939 = vlaneseq
    %v4940 = vshrl.u32 %v4939, 7
    %v4941 = vsub.s32 %v2165, %v4940
    %v4942 = vrot.slane %v4838, %v4941
    %v4943 = vsel %vm2170, %v4942, %v4938
    %v4944 = vlaneseq
    %v4945 = vshrl.u32 %v4944, 7
    %v4946 = vsub.s32 %v65, %v4945
    %v4947 = vrot.slane %v4841, %v4946
    %v4948 = vlaneseq
    %v4949 = vshrl.u32 %v4948, 7
    %v4950 = vsub.s32 %v2165, %v4949
    %v4951 = vrot.slane %v4844, %v4950
    %v4952 = vsel %vm2170, %v4951, %v4947
    %v4953 = vlaneseq
    %v4954 = vshrl.u32 %v4953, 7
    %v4955 = vsub.s32 %v65, %v4954
    %v4956 = vrot.slane %v4847, %v4955
    %v4957 = vlaneseq
    %v4958 = vshrl.u32 %v4957, 7
    %v4959 = vsub.s32 %v2165, %v4958
    %v4960 = vrot.slane %v4850, %v4959
    %v4961 = vsel %vm2170, %v4960, %v4956
    %v4962 = vlaneseq
    %v4963 = vshrl.u32 %v4962, 7
    %v4964 = vsub.s32 %v65, %v4963
    %v4965 = vrot.slane %v4853, %v4964
    %v4966 = vlaneseq
    %v4967 = vshrl.u32 %v4966, 7
    %v4968 = vsub.s32 %v2165, %v4967
    %v4969 = vrot.slane %v4856, %v4968
    %v4970 = vsel %vm2170, %v4969, %v4965
    %v4971 = vlaneseq
    %v4972 = vshrl.u32 %v4971, 7
    %v4973 = vsub.s32 %v65, %v4972
    %v4974 = vrot.slane %v4859, %v4973
    %v4975 = vlaneseq
    %v4976 = vshrl.u32 %v4975, 7
    %v4977 = vsub.s32 %v2165, %v4976
    %v4978 = vrot.slane %v4862, %v4977
    %v4979 = vsel %vm2170, %v4978, %v4974
    %v4980 = vlaneseq
    %v4981 = vshrl.u32 %v4980, 7
    %v4982 = vsub.s32 %v65, %v4981
    %v4983 = vrot.slane %v4865, %v4982
    %v4984 = vlaneseq
    %v4985 = vshrl.u32 %v4984, 7
    %v4986 = vsub.s32 %v2165, %v4985
    %v4987 = vrot.slane %v4868, %v4986
    %v4988 = vsel %vm2170, %v4987, %v4983
    %v4989 = vlaneseq
    %v4990 = vshrl.u32 %v4989, 7
    %v4991 = vsub.s32 %v65, %v4990
    %v4992 = vrot.slane %v4871, %v4991
    %v4993 = vlaneseq
    %v4994 = vshrl.u32 %v4993, 7
    %v4995 = vsub.s32 %v2165, %v4994
    %v4996 = vrot.slane %v4874, %v4995
    %v4997 = vsel %vm2170, %v4996, %v4992
    %v4998 = vlaneseq
    %v4999 = vshrl.u32 %v4998, 7
    %v5000 = vsub.s32 %v65, %v4999
    %v5001 = vrot.slane %v4877, %v5000
    %v5002 = vlaneseq
    %v5003 = vshrl.u32 %v5002, 7
    %v5004 = vsub.s32 %v2165, %v5003
    %v5005 = vrot.slane %v4880, %v5004
    %v5006 = vsel %vm2170, %v5005, %v5001
    %v5007 = vlaneseq
    %v5008 = vshrl.u32 %v5007, 7
    %v5009 = vsub.s32 %v65, %v5008
    %v5010 = vrot.slane %v4883, %v5009
    %v5011 = vlaneseq
    %v5012 = vshrl.u32 %v5011, 7
    %v5013 = vsub.s32 %v2165, %v5012
    %v5014 = vrot.slane %v4886, %v5013
    %v5015 = vsel %vm2170, %v5014, %v5010
    %v5016 = vlaneseq
    %v5017 = vshrl.u32 %v5016, 7
    %v5018 = vsub.s32 %v65, %v5017
    %v5019 = vrot.slane %v4889, %v5018
    %v5020 = vlaneseq
    %v5021 = vshrl.u32 %v5020, 7
    %v5022 = vsub.s32 %v2165, %v5021
    %v5023 = vrot.slane %v4892, %v5022
    %v5024 = vsel %vm2170, %v5023, %v5019
    %v5025 = vlaneseq
    %v5026 = vshrl.u32 %v5025, 7
    %v5027 = vsub.s32 %v65, %v5026
    %v5028 = vrot.slane %v4895, %v5027
    %v5029 = vlaneseq
    %v5030 = vshrl.u32 %v5029, 7
    %v5031 = vsub.s32 %v2165, %v5030
    %v5032 = vrot.slane %v4898, %v5031
    %v5033 = vsel %vm2170, %v5032, %v5028
    %v5034 = vlaneseq
    %v5035 = vshrl.u32 %v5034, 7
    %v5036 = vsub.s32 %v65, %v5035
    %v5037 = vrot.slane %v4901, %v5036
    %v5038 = vlaneseq
    %v5039 = vshrl.u32 %v5038, 7
    %v5040 = vsub.s32 %v2165, %v5039
    %v5041 = vrot.slane %v4904, %v5040
    %v5042 = vsel %vm2170, %v5041, %v5037
    %v5043 = vlaneseq
    %v5044 = vshrl.u32 %v5043, 7
    %v5045 = vsub.s32 %v65, %v5044
    %v5046 = vrot.slane %v4907, %v5045
    %v5047 = vlaneseq
    %v5048 = vshrl.u32 %v5047, 7
    %v5049 = vsub.s32 %v2165, %v5048
    %v5050 = vrot.slane %v4910, %v5049
    %v5051 = vsel %vm2170, %v5050, %v5046
    %v5052 = vlaneseq
    %v5053 = vshrl.u32 %v5052, 7
    %v5054 = vsub.s32 %v65, %v5053
    %v5055 = vrot.slane %v4913, %v5054
    %v5056 = vlaneseq
    %v5057 = vshrl.u32 %v5056, 7
    %v5058 = vsub.s32 %v2165, %v5057
    %v5059 = vrot.slane %v4916, %v5058
    %v5060 = vsel %vm2170, %v5059, %v5055
    %v5061 = vsel %vm2307, %v4934, %v4925
    %v5062 = vsel %vm2309, %v4943, %v5061
    %v5063 = vsel %vm2311, %v4952, %v5062
    %v5064 = vsel %vm2313, %v4961, %v5063
    %v5065 = vsel %vm2315, %v4970, %v5064
    %v5066 = vsel %vm2317, %v4979, %v5065
    %v5067 = vsel %vm2319, %v4988, %v5066
    %v5068 = vsel %vm2307, %v5006, %v4997
    %v5069 = vsel %vm2309, %v5015, %v5068
    %v5070 = vsel %vm2311, %v5024, %v5069
    %v5071 = vsel %vm2313, %v5033, %v5070
    %v5072 = vsel %vm2315, %v5042, %v5071
    %v5073 = vsel %vm2317, %v5051, %v5072
    %v5074 = vsel %vm2319, %v5060, %v5073
    %5077 = vrot.lane.b32.xlu0 %v3710, 112
    %v5078 = vpop.permute.xlu0 %5077
    %5079 = vrot.lane.b32.xlu0 %v3711, 112
    %v5080 = vpop.permute.xlu0 %5079
    %v5083 = vsel %vm2328, %v5067, 0
    %v5085 = vsel %vm2328, %v5074, 0
    %5087 = vmatprep.subr.mxu0 0.0
    %5088 = vmatpush1.msra.mxu0 %v5078
    %5089 = vmatprep.subr.mxu0 0.0
    %5090 = vmatpush1.msra.mxu0 %v5080
    %5091 = vmatprep.subr.mxu0 0.0
    %5092 = vmatpush1.msra.mxu0 0.0
    %5093 = vmatprep.subr.mxu0 0.0
    %5094 = vmatpush1.msra.mxu0 0.0
    %5095 = vmatprep.subr.mxu0 0.0
    %5096 = vmatpush1.msra.mxu0 0.0
    %5097 = vmatprep.subr.mxu0 0.0
    %5098 = vmatpush1.msra.mxu0 0.0
    %5099 = vmatprep.subr.mxu0 0.0
    %5100 = vmatpush1.msra.mxu0 0.0
    %5101 = vmatprep.subr.mxu0 0.0
    %5102 = vmatpush1.msra.mxu0 0.0
    %5103 = vmatprep.subr.mxu0 0.0
    %5104 = vmatpush1.msra.mxu0 0.0
    %5105 = vmatprep.subr.mxu0 0.0
    %5106 = vmatpush1.msra.mxu0 0.0
    %5107 = vmatprep.subr.mxu0 0.0
    %5108 = vmatpush1.msra.mxu0 0.0
    %5109 = vmatprep.subr.mxu0 0.0
    %5110 = vmatpush1.msra.mxu0 0.0
    %5111 = vmatprep.subr.mxu0 0.0
    %5112 = vmatpush1.msra.mxu0 0.0
    %5113 = vmatprep.subr.mxu0 0.0
    %5114 = vmatpush1.msra.mxu0 0.0
    %5115 = vmatprep.subr.mxu0 0.0
    %5116 = vmatpush1.msra.mxu0 0.0
    %5117 = vmatprep.subr.mxu0 0.0
    %5118 = vmatpush1.msra.mxu0 0.0
    %5119 = vmatprep.subr.mxu0 0.0
    %5120 = vmatpush1.msra.mxu0 0.0
    %5121 = vmatprep.subr.mxu0 0.0
    %5122 = vmatpush1.msra.mxu0 0.0
    %5123 = vmatprep.subr.mxu0 0.0
    %5124 = vmatpush1.msra.mxu0 0.0
    %5125 = vmatprep.subr.mxu0 0.0
    %5126 = vmatpush1.msra.mxu0 0.0
    %5127 = vmatprep.subr.mxu0 0.0
    %5128 = vmatpush1.msra.mxu0 0.0
    %5129 = vmatprep.subr.mxu0 0.0
    %5130 = vmatpush1.msra.mxu0 0.0
    %5131 = vmatprep.subr.mxu0 0.0
    %5132 = vmatpush1.msra.mxu0 0.0
    %5133 = vmatprep.subr.mxu0 0.0
    %5134 = vmatpush1.msra.mxu0 0.0
    %5135 = vmatprep.subr.mxu0 0.0
    %5136 = vmatpush1.msra.mxu0 0.0
    %5137 = vmatprep.subr.mxu0 0.0
    %5138 = vmatpush1.msra.mxu0 0.0
    %5139 = vmatprep.subr.mxu0 0.0
    %5140 = vmatpush1.msra.mxu0 0.0
    %5141 = vmatprep.subr.mxu0 0.0
    %5142 = vmatpush1.msra.mxu0 0.0
    %5143 = vmatprep.subr.mxu0 0.0
    %5144 = vmatpush1.msra.mxu0 0.0
    %5145 = vmatprep.subr.mxu0 0.0
    %5146 = vmatpush1.msra.mxu0 0.0
    %5147 = vmatprep.subr.mxu0 0.0
    %5148 = vmatpush1.msra.mxu0 0.0
    %5149 = vmatprep.subr.mxu0 0.0
    %5150 = vmatpush1.msra.mxu0 0.0
    %5151 = vmatprep.mubr.f32.mxu0 0.0
    %5152 = vmatmul.mubr.f32.gmra.mrb[0].mxu0 %v5083
    %v5153 = vpop.f32.mrb[0].mxu0
    %v5154 = vadd.f32 0.0, %v5153
    %v5155 = vpop.f32.mrb[0].mxu0
    %5156 = vmatprep.mubr.f32.mxu0 0.0
    %5157 = vmatmul.mubr.f32.gmra.mrb[0].mxu0 %v5085
    %v5158 = vpop.f32.mrb[0].mxu0
    %v5159 = vadd.f32 0.0, %v5158
    %v5160 = vpop.f32.mrb[0].mxu0
    %5161 = vdwg.mxu0
    %5162 = vset.pattern.permute.xlu0 2
    %5163 = vperm.xlu0 %5162, %v4757
    %v5164 = vpop.permute.xlu0 %5163
    %5165 = vset.pattern.permute.xlu0 2
    %5166 = vperm.xlu0 %5165, %v4758
    %v5167 = vpop.permute.xlu0 %5166
    %5168 = vset.pattern.permute.xlu0 2
    %5169 = vperm.xlu0 %5168, %v4759
    %v5170 = vpop.permute.xlu0 %5169
    %5171 = vset.pattern.permute.xlu0 2
    %5172 = vperm.xlu0 %5171, %v4760
    %v5173 = vpop.permute.xlu0 %5172
    %5174 = vset.pattern.permute.xlu0 2
    %5175 = vperm.xlu0 %5174, %v4761
    %v5176 = vpop.permute.xlu0 %5175
    %5177 = vset.pattern.permute.xlu0 2
    %5178 = vperm.xlu0 %5177, %v4762
    %v5179 = vpop.permute.xlu0 %5178
    %5180 = vset.pattern.permute.xlu0 2
    %5181 = vperm.xlu0 %5180, %v4763
    %v5182 = vpop.permute.xlu0 %5181
    %5183 = vset.pattern.permute.xlu0 2
    %5184 = vperm.xlu0 %5183, %v4764
    %v5185 = vpop.permute.xlu0 %5184
    %5186 = vset.pattern.permute.xlu0 2
    %5187 = vperm.xlu0 %5186, %v4765
    %v5188 = vpop.permute.xlu0 %5187
    %5189 = vset.pattern.permute.xlu0 2
    %5190 = vperm.xlu0 %5189, %v4766
    %v5191 = vpop.permute.xlu0 %5190
    %5192 = vset.pattern.permute.xlu0 2
    %5193 = vperm.xlu0 %5192, %v4767
    %v5194 = vpop.permute.xlu0 %5193
    %5195 = vset.pattern.permute.xlu0 2
    %5196 = vperm.xlu0 %5195, %v4768
    %v5197 = vpop.permute.xlu0 %5196
    %5198 = vset.pattern.permute.xlu0 2
    %5199 = vperm.xlu0 %5198, %v4769
    %v5200 = vpop.permute.xlu0 %5199
    %5201 = vset.pattern.permute.xlu0 2
    %5202 = vperm.xlu0 %5201, %v4770
    %v5203 = vpop.permute.xlu0 %5202
    %5204 = vset.pattern.permute.xlu0 2
    %5205 = vperm.xlu0 %5204, %v4771
    %v5206 = vpop.permute.xlu0 %5205
    %5207 = vset.pattern.permute.xlu0 2
    %5208 = vperm.xlu0 %5207, %v4772
    %v5209 = vpop.permute.xlu0 %5208
    %5210 = vset.pattern.permute.xlu0 2
    %5211 = vperm.xlu0 %5210, %v4773
    %v5212 = vpop.permute.xlu0 %5211
    %5213 = vset.pattern.permute.xlu0 2
    %5214 = vperm.xlu0 %5213, %v4774
    %v5215 = vpop.permute.xlu0 %5214
    %5216 = vset.pattern.permute.xlu0 2
    %5217 = vperm.xlu0 %5216, %v4775
    %v5218 = vpop.permute.xlu0 %5217
    %5219 = vset.pattern.permute.xlu0 2
    %5220 = vperm.xlu0 %5219, %v4776
    %v5221 = vpop.permute.xlu0 %5220
    %5222 = vset.pattern.permute.xlu0 2
    %5223 = vperm.xlu0 %5222, %v4777
    %v5224 = vpop.permute.xlu0 %5223
    %5225 = vset.pattern.permute.xlu0 2
    %5226 = vperm.xlu0 %5225, %v4778
    %v5227 = vpop.permute.xlu0 %5226
    %5228 = vset.pattern.permute.xlu0 2
    %5229 = vperm.xlu0 %5228, %v4779
    %v5230 = vpop.permute.xlu0 %5229
    %5231 = vset.pattern.permute.xlu0 2
    %5232 = vperm.xlu0 %5231, %v4780
    %v5233 = vpop.permute.xlu0 %5232
    %5234 = vset.pattern.permute.xlu0 2
    %5235 = vperm.xlu0 %5234, %v4781
    %v5236 = vpop.permute.xlu0 %5235
    %5237 = vset.pattern.permute.xlu0 2
    %5238 = vperm.xlu0 %5237, %v4782
    %v5239 = vpop.permute.xlu0 %5238
    %5240 = vset.pattern.permute.xlu0 2
    %5241 = vperm.xlu0 %5240, %v4783
    %v5242 = vpop.permute.xlu0 %5241
    %5243 = vset.pattern.permute.xlu0 2
    %5244 = vperm.xlu0 %5243, %v4784
    %v5245 = vpop.permute.xlu0 %5244
    %5246 = vset.pattern.permute.xlu0 2
    %5247 = vperm.xlu0 %5246, %v4785
    %v5248 = vpop.permute.xlu0 %5247
    %5249 = vset.pattern.permute.xlu0 2
    %5250 = vperm.xlu0 %5249, %v4786
    %v5251 = vpop.permute.xlu0 %5250
    %5252 = vset.pattern.permute.xlu0 2
    %5253 = vperm.xlu0 %5252, %v4787
    %v5254 = vpop.permute.xlu0 %5253
    %5255 = vset.pattern.permute.xlu0 2
    %5256 = vperm.xlu0 %5255, %v4788
    %v5257 = vpop.permute.xlu0 %5256
    %v5258 = vlaneseq
    %v5259 = vshrl.u32 %v5258, 7
    %v5260 = vsub.s32 %v65, %v5259
    %v5261 = vrot.slane %v5164, %v5260
    %v5262 = vlaneseq
    %v5263 = vshrl.u32 %v5262, 7
    %v5264 = vsub.s32 %v2165, %v5263
    %v5265 = vrot.slane %v5167, %v5264
    %v5266 = vsel %vm2170, %v5265, %v5261
    %v5267 = vlaneseq
    %v5268 = vshrl.u32 %v5267, 7
    %v5269 = vsub.s32 %v65, %v5268
    %v5270 = vrot.slane %v5170, %v5269
    %v5271 = vlaneseq
    %v5272 = vshrl.u32 %v5271, 7
    %v5273 = vsub.s32 %v2165, %v5272
    %v5274 = vrot.slane %v5173, %v5273
    %v5275 = vsel %vm2170, %v5274, %v5270
    %v5276 = vlaneseq
    %v5277 = vshrl.u32 %v5276, 7
    %v5278 = vsub.s32 %v65, %v5277
    %v5279 = vrot.slane %v5176, %v5278
    %v5280 = vlaneseq
    %v5281 = vshrl.u32 %v5280, 7
    %v5282 = vsub.s32 %v2165, %v5281
    %v5283 = vrot.slane %v5179, %v5282
    %v5284 = vsel %vm2170, %v5283, %v5279
    %v5285 = vlaneseq
    %v5286 = vshrl.u32 %v5285, 7
    %v5287 = vsub.s32 %v65, %v5286
    %v5288 = vrot.slane %v5182, %v5287
    %v5289 = vlaneseq
    %v5290 = vshrl.u32 %v5289, 7
    %v5291 = vsub.s32 %v2165, %v5290
    %v5292 = vrot.slane %v5185, %v5291
    %v5293 = vsel %vm2170, %v5292, %v5288
    %v5294 = vlaneseq
    %v5295 = vshrl.u32 %v5294, 7
    %v5296 = vsub.s32 %v65, %v5295
    %v5297 = vrot.slane %v5188, %v5296
    %v5298 = vlaneseq
    %v5299 = vshrl.u32 %v5298, 7
    %v5300 = vsub.s32 %v2165, %v5299
    %v5301 = vrot.slane %v5191, %v5300
    %v5302 = vsel %vm2170, %v5301, %v5297
    %v5303 = vlaneseq
    %v5304 = vshrl.u32 %v5303, 7
    %v5305 = vsub.s32 %v65, %v5304
    %v5306 = vrot.slane %v5194, %v5305
    %v5307 = vlaneseq
    %v5308 = vshrl.u32 %v5307, 7
    %v5309 = vsub.s32 %v2165, %v5308
    %v5310 = vrot.slane %v5197, %v5309
    %v5311 = vsel %vm2170, %v5310, %v5306
    %v5312 = vlaneseq
    %v5313 = vshrl.u32 %v5312, 7
    %v5314 = vsub.s32 %v65, %v5313
    %v5315 = vrot.slane %v5200, %v5314
    %v5316 = vlaneseq
    %v5317 = vshrl.u32 %v5316, 7
    %v5318 = vsub.s32 %v2165, %v5317
    %v5319 = vrot.slane %v5203, %v5318
    %v5320 = vsel %vm2170, %v5319, %v5315
    %v5321 = vlaneseq
    %v5322 = vshrl.u32 %v5321, 7
    %v5323 = vsub.s32 %v65, %v5322
    %v5324 = vrot.slane %v5206, %v5323
    %v5325 = vlaneseq
    %v5326 = vshrl.u32 %v5325, 7
    %v5327 = vsub.s32 %v2165, %v5326
    %v5328 = vrot.slane %v5209, %v5327
    %v5329 = vsel %vm2170, %v5328, %v5324
    %v5330 = vlaneseq
    %v5331 = vshrl.u32 %v5330, 7
    %v5332 = vsub.s32 %v65, %v5331
    %v5333 = vrot.slane %v5212, %v5332
    %v5334 = vlaneseq
    %v5335 = vshrl.u32 %v5334, 7
    %v5336 = vsub.s32 %v2165, %v5335
    %v5337 = vrot.slane %v5215, %v5336
    %v5338 = vsel %vm2170, %v5337, %v5333
    %v5339 = vlaneseq
    %v5340 = vshrl.u32 %v5339, 7
    %v5341 = vsub.s32 %v65, %v5340
    %v5342 = vrot.slane %v5218, %v5341
    %v5343 = vlaneseq
    %v5344 = vshrl.u32 %v5343, 7
    %v5345 = vsub.s32 %v2165, %v5344
    %v5346 = vrot.slane %v5221, %v5345
    %v5347 = vsel %vm2170, %v5346, %v5342
    %v5348 = vlaneseq
    %v5349 = vshrl.u32 %v5348, 7
    %v5350 = vsub.s32 %v65, %v5349
    %v5351 = vrot.slane %v5224, %v5350
    %v5352 = vlaneseq
    %v5353 = vshrl.u32 %v5352, 7
    %v5354 = vsub.s32 %v2165, %v5353
    %v5355 = vrot.slane %v5227, %v5354
    %v5356 = vsel %vm2170, %v5355, %v5351
    %v5357 = vlaneseq
    %v5358 = vshrl.u32 %v5357, 7
    %v5359 = vsub.s32 %v65, %v5358
    %v5360 = vrot.slane %v5230, %v5359
    %v5361 = vlaneseq
    %v5362 = vshrl.u32 %v5361, 7
    %v5363 = vsub.s32 %v2165, %v5362
    %v5364 = vrot.slane %v5233, %v5363
    %v5365 = vsel %vm2170, %v5364, %v5360
    %v5366 = vlaneseq
    %v5367 = vshrl.u32 %v5366, 7
    %v5368 = vsub.s32 %v65, %v5367
    %v5369 = vrot.slane %v5236, %v5368
    %v5370 = vlaneseq
    %v5371 = vshrl.u32 %v5370, 7
    %v5372 = vsub.s32 %v2165, %v5371
    %v5373 = vrot.slane %v5239, %v5372
    %v5374 = vsel %vm2170, %v5373, %v5369
    %v5375 = vlaneseq
    %v5376 = vshrl.u32 %v5375, 7
    %v5377 = vsub.s32 %v65, %v5376
    %v5378 = vrot.slane %v5242, %v5377
    %v5379 = vlaneseq
    %v5380 = vshrl.u32 %v5379, 7
    %v5381 = vsub.s32 %v2165, %v5380
    %v5382 = vrot.slane %v5245, %v5381
    %v5383 = vsel %vm2170, %v5382, %v5378
    %v5384 = vlaneseq
    %v5385 = vshrl.u32 %v5384, 7
    %v5386 = vsub.s32 %v65, %v5385
    %v5387 = vrot.slane %v5248, %v5386
    %v5388 = vlaneseq
    %v5389 = vshrl.u32 %v5388, 7
    %v5390 = vsub.s32 %v2165, %v5389
    %v5391 = vrot.slane %v5251, %v5390
    %v5392 = vsel %vm2170, %v5391, %v5387
    %v5393 = vlaneseq
    %v5394 = vshrl.u32 %v5393, 7
    %v5395 = vsub.s32 %v65, %v5394
    %v5396 = vrot.slane %v5254, %v5395
    %v5397 = vlaneseq
    %v5398 = vshrl.u32 %v5397, 7
    %v5399 = vsub.s32 %v2165, %v5398
    %v5400 = vrot.slane %v5257, %v5399
    %v5401 = vsel %vm2170, %v5400, %v5396
    %v5402 = vsel %vm2307, %v5275, %v5266
    %v5403 = vsel %vm2309, %v5284, %v5402
    %v5404 = vsel %vm2311, %v5293, %v5403
    %v5405 = vsel %vm2313, %v5302, %v5404
    %v5406 = vsel %vm2315, %v5311, %v5405
    %v5407 = vsel %vm2317, %v5320, %v5406
    %v5408 = vsel %vm2319, %v5329, %v5407
    %v5409 = vsel %vm2307, %v5347, %v5338
    %v5410 = vsel %vm2309, %v5356, %v5409
    %v5411 = vsel %vm2311, %v5365, %v5410
    %v5412 = vsel %vm2313, %v5374, %v5411
    %v5413 = vsel %vm2315, %v5383, %v5412
    %v5414 = vsel %vm2317, %v5392, %v5413
    %v5415 = vsel %vm2319, %v5401, %v5414
    %5416 = vrot.lane.b32.xlu0 %v3710, 96
    %v5417 = vpop.permute.xlu0 %5416
    %5418 = vrot.lane.b32.xlu0 %v3711, 96
    %v5419 = vpop.permute.xlu0 %5418
    %v5422 = vsel %vm2328, %v5408, 0
    %v5424 = vsel %vm2328, %v5415, 0
    %5426 = vmatprep.subr.mxu0 0.0
    %5427 = vmatpush1.msra.mxu0 %v5417
    %5428 = vmatprep.subr.mxu0 0.0
    %5429 = vmatpush1.msra.mxu0 %v5419
    %5430 = vmatprep.subr.mxu0 0.0
    %5431 = vmatpush1.msra.mxu0 0.0
    %5432 = vmatprep.subr.mxu0 0.0
    %5433 = vmatpush1.msra.mxu0 0.0
    %5434 = vmatprep.subr.mxu0 0.0
    %5435 = vmatpush1.msra.mxu0 0.0
    %5436 = vmatprep.subr.mxu0 0.0
    %5437 = vmatpush1.msra.mxu0 0.0
    %5438 = vmatprep.subr.mxu0 0.0
    %5439 = vmatpush1.msra.mxu0 0.0
    %5440 = vmatprep.subr.mxu0 0.0
    %5441 = vmatpush1.msra.mxu0 0.0
    %5442 = vmatprep.subr.mxu0 0.0
    %5443 = vmatpush1.msra.mxu0 0.0
    %5444 = vmatprep.subr.mxu0 0.0
    %5445 = vmatpush1.msra.mxu0 0.0
    %5446 = vmatprep.subr.mxu0 0.0
    %5447 = vmatpush1.msra.mxu0 0.0
    %5448 = vmatprep.subr.mxu0 0.0
    %5449 = vmatpush1.msra.mxu0 0.0
    %5450 = vmatprep.subr.mxu0 0.0
    %5451 = vmatpush1.msra.mxu0 0.0
    %5452 = vmatprep.subr.mxu0 0.0
    %5453 = vmatpush1.msra.mxu0 0.0
    %5454 = vmatprep.subr.mxu0 0.0
    %5455 = vmatpush1.msra.mxu0 0.0
    %5456 = vmatprep.subr.mxu0 0.0
    %5457 = vmatpush1.msra.mxu0 0.0
    %5458 = vmatprep.subr.mxu0 0.0
    %5459 = vmatpush1.msra.mxu0 0.0
    %5460 = vmatprep.subr.mxu0 0.0
    %5461 = vmatpush1.msra.mxu0 0.0
    %5462 = vmatprep.subr.mxu0 0.0
    %5463 = vmatpush1.msra.mxu0 0.0
    %5464 = vmatprep.subr.mxu0 0.0
    %5465 = vmatpush1.msra.mxu0 0.0
    %5466 = vmatprep.subr.mxu0 0.0
    %5467 = vmatpush1.msra.mxu0 0.0
    %5468 = vmatprep.subr.mxu0 0.0
    %5469 = vmatpush1.msra.mxu0 0.0
    %5470 = vmatprep.subr.mxu0 0.0
    %5471 = vmatpush1.msra.mxu0 0.0
    %5472 = vmatprep.subr.mxu0 0.0
    %5473 = vmatpush1.msra.mxu0 0.0
    %5474 = vmatprep.subr.mxu0 0.0
    %5475 = vmatpush1.msra.mxu0 0.0
    %5476 = vmatprep.subr.mxu0 0.0
    %5477 = vmatpush1.msra.mxu0 0.0
    %5478 = vmatprep.subr.mxu0 0.0
    %5479 = vmatpush1.msra.mxu0 0.0
    %5480 = vmatprep.subr.mxu0 0.0
    %5481 = vmatpush1.msra.mxu0 0.0
    %5482 = vmatprep.subr.mxu0 0.0
    %5483 = vmatpush1.msra.mxu0 0.0
    %5484 = vmatprep.subr.mxu0 0.0
    %5485 = vmatpush1.msra.mxu0 0.0
    %5486 = vmatprep.subr.mxu0 0.0
    %5487 = vmatpush1.msra.mxu0 0.0
    %5488 = vmatprep.subr.mxu0 0.0
    %5489 = vmatpush1.msra.mxu0 0.0
    %5490 = vmatprep.mubr.f32.mxu0 0.0
    %5491 = vmatmul.mubr.f32.gmra.mrb[0].mxu0 %v5422
    %v5492 = vpop.f32.mrb[0].mxu0
    %v5493 = vadd.f32 0.0, %v5492
    %v5494 = vpop.f32.mrb[0].mxu0
    %5495 = vmatprep.mubr.f32.mxu0 0.0
    %5496 = vmatmul.mubr.f32.gmra.mrb[0].mxu0 %v5424
    %v5497 = vpop.f32.mrb[0].mxu0
    %v5498 = vadd.f32 0.0, %v5497
    %v5499 = vpop.f32.mrb[0].mxu0
    %5500 = vdwg.mxu0
    %5501 = vset.pattern.permute.xlu0 3
    %5502 = vperm.xlu0 %5501, %v4757
    %v5503 = vpop.permute.xlu0 %5502
    %5504 = vset.pattern.permute.xlu0 3
    %5505 = vperm.xlu0 %5504, %v4758
    %v5506 = vpop.permute.xlu0 %5505
    %5507 = vset.pattern.permute.xlu0 3
    %5508 = vperm.xlu0 %5507, %v4759
    %v5509 = vpop.permute.xlu0 %5508
    %5510 = vset.pattern.permute.xlu0 3
    %5511 = vperm.xlu0 %5510, %v4760
    %v5512 = vpop.permute.xlu0 %5511
    %5513 = vset.pattern.permute.xlu0 3
    %5514 = vperm.xlu0 %5513, %v4761
    %v5515 = vpop.permute.xlu0 %5514
    %5516 = vset.pattern.permute.xlu0 3
    %5517 = vperm.xlu0 %5516, %v4762
    %v5518 = vpop.permute.xlu0 %5517
    %5519 = vset.pattern.permute.xlu0 3
    %5520 = vperm.xlu0 %5519, %v4763
    %v5521 = vpop.permute.xlu0 %5520
    %5522 = vset.pattern.permute.xlu0 3
    %5523 = vperm.xlu0 %5522, %v4764
    %v5524 = vpop.permute.xlu0 %5523
    %5525 = vset.pattern.permute.xlu0 3
    %5526 = vperm.xlu0 %5525, %v4765
    %v5527 = vpop.permute.xlu0 %5526
    %5528 = vset.pattern.permute.xlu0 3
    %5529 = vperm.xlu0 %5528, %v4766
    %v5530 = vpop.permute.xlu0 %5529
    %5531 = vset.pattern.permute.xlu0 3
    %5532 = vperm.xlu0 %5531, %v4767
    %v5533 = vpop.permute.xlu0 %5532
    %5534 = vset.pattern.permute.xlu0 3
    %5535 = vperm.xlu0 %5534, %v4768
    %v5536 = vpop.permute.xlu0 %5535
    %5537 = vset.pattern.permute.xlu0 3
    %5538 = vperm.xlu0 %5537, %v4769
    %v5539 = vpop.permute.xlu0 %5538
    %5540 = vset.pattern.permute.xlu0 3
    %5541 = vperm.xlu0 %5540, %v4770
    %v5542 = vpop.permute.xlu0 %5541
    %5543 = vset.pattern.permute.xlu0 3
    %5544 = vperm.xlu0 %5543, %v4771
    %v5545 = vpop.permute.xlu0 %5544
    %5546 = vset.pattern.permute.xlu0 3
    %5547 = vperm.xlu0 %5546, %v4772
    %v5548 = vpop.permute.xlu0 %5547
    %5549 = vset.pattern.permute.xlu0 3
    %5550 = vperm.xlu0 %5549, %v4773
    %v5551 = vpop.permute.xlu0 %5550
    %5552 = vset.pattern.permute.xlu0 3
    %5553 = vperm.xlu0 %5552, %v4774
    %v5554 = vpop.permute.xlu0 %5553
    %5555 = vset.pattern.permute.xlu0 3
    %5556 = vperm.xlu0 %5555, %v4775
    %v5557 = vpop.permute.xlu0 %5556
    %5558 = vset.pattern.permute.xlu0 3
    %5559 = vperm.xlu0 %5558, %v4776
    %v5560 = vpop.permute.xlu0 %5559
    %5561 = vset.pattern.permute.xlu0 3
    %5562 = vperm.xlu0 %5561, %v4777
    %v5563 = vpop.permute.xlu0 %5562
    %5564 = vset.pattern.permute.xlu0 3
    %5565 = vperm.xlu0 %5564, %v4778
    %v5566 = vpop.permute.xlu0 %5565
    %5567 = vset.pattern.permute.xlu0 3
    %5568 = vperm.xlu0 %5567, %v4779
    %v5569 = vpop.permute.xlu0 %5568
    %5570 = vset.pattern.permute.xlu0 3
    %5571 = vperm.xlu0 %5570, %v4780
    %v5572 = vpop.permute.xlu0 %5571
    %5573 = vset.pattern.permute.xlu0 3
    %5574 = vperm.xlu0 %5573, %v4781
    %v5575 = vpop.permute.xlu0 %5574
    %5576 = vset.pattern.permute.xlu0 3
    %5577 = vperm.xlu0 %5576, %v4782
    %v5578 = vpop.permute.xlu0 %5577
    %5579 = vset.pattern.permute.xlu0 3
    %5580 = vperm.xlu0 %5579, %v4783
    %v5581 = vpop.permute.xlu0 %5580
    %5582 = vset.pattern.permute.xlu0 3
    %5583 = vperm.xlu0 %5582, %v4784
    %v5584 = vpop.permute.xlu0 %5583
    %5585 = vset.pattern.permute.xlu0 3
    %5586 = vperm.xlu0 %5585, %v4785
    %v5587 = vpop.permute.xlu0 %5586
    %5588 = vset.pattern.permute.xlu0 3
    %5589 = vperm.xlu0 %5588, %v4786
    %v5590 = vpop.permute.xlu0 %5589
    %5591 = vset.pattern.permute.xlu0 3
    %5592 = vperm.xlu0 %5591, %v4787
    %v5593 = vpop.permute.xlu0 %5592
    %5594 = vset.pattern.permute.xlu0 3
    %5595 = vperm.xlu0 %5594, %v4788
    %v5596 = vpop.permute.xlu0 %5595
    %v5597 = vlaneseq
    %v5598 = vshrl.u32 %v5597, 7
    %v5599 = vsub.s32 %v65, %v5598
    %v5600 = vrot.slane %v5503, %v5599
    %v5601 = vlaneseq
    %v5602 = vshrl.u32 %v5601, 7
    %v5603 = vsub.s32 %v2165, %v5602
    %v5604 = vrot.slane %v5506, %v5603
    %v5605 = vsel %vm2170, %v5604, %v5600
    %v5606 = vlaneseq
    %v5607 = vshrl.u32 %v5606, 7
    %v5608 = vsub.s32 %v65, %v5607
    %v5609 = vrot.slane %v5509, %v5608
    %v5610 = vlaneseq
    %v5611 = vshrl.u32 %v5610, 7
    %v5612 = vsub.s32 %v2165, %v5611
    %v5613 = vrot.slane %v5512, %v5612
    %v5614 = vsel %vm2170, %v5613, %v5609
    %v5615 = vlaneseq
    %v5616 = vshrl.u32 %v5615, 7
    %v5617 = vsub.s32 %v65, %v5616
    %v5618 = vrot.slane %v5515, %v5617
    %v5619 = vlaneseq
    %v5620 = vshrl.u32 %v5619, 7
    %v5621 = vsub.s32 %v2165, %v5620
    %v5622 = vrot.slane %v5518, %v5621
    %v5623 = vsel %vm2170, %v5622, %v5618
    %v5624 = vlaneseq
    %v5625 = vshrl.u32 %v5624, 7
    %v5626 = vsub.s32 %v65, %v5625
    %v5627 = vrot.slane %v5521, %v5626
    %v5628 = vlaneseq
    %v5629 = vshrl.u32 %v5628, 7
    %v5630 = vsub.s32 %v2165, %v5629
    %v5631 = vrot.slane %v5524, %v5630
    %v5632 = vsel %vm2170, %v5631, %v5627
    %v5633 = vlaneseq
    %v5634 = vshrl.u32 %v5633, 7
    %v5635 = vsub.s32 %v65, %v5634
    %v5636 = vrot.slane %v5527, %v5635
    %v5637 = vlaneseq
    %v5638 = vshrl.u32 %v5637, 7
    %v5639 = vsub.s32 %v2165, %v5638
    %v5640 = vrot.slane %v5530, %v5639
    %v5641 = vsel %vm2170, %v5640, %v5636
    %v5642 = vlaneseq
    %v5643 = vshrl.u32 %v5642, 7
    %v5644 = vsub.s32 %v65, %v5643
    %v5645 = vrot.slane %v5533, %v5644
    %v5646 = vlaneseq
    %v5647 = vshrl.u32 %v5646, 7
    %v5648 = vsub.s32 %v2165, %v5647
    %v5649 = vrot.slane %v5536, %v5648
    %v5650 = vsel %vm2170, %v5649, %v5645
    %v5651 = vlaneseq
    %v5652 = vshrl.u32 %v5651, 7
    %v5653 = vsub.s32 %v65, %v5652
    %v5654 = vrot.slane %v5539, %v5653
    %v5655 = vlaneseq
    %v5656 = vshrl.u32 %v5655, 7
    %v5657 = vsub.s32 %v2165, %v5656
    %v5658 = vrot.slane %v5542, %v5657
    %v5659 = vsel %vm2170, %v5658, %v5654
    %v5660 = vlaneseq
    %v5661 = vshrl.u32 %v5660, 7
    %v5662 = vsub.s32 %v65, %v5661
    %v5663 = vrot.slane %v5545, %v5662
    %v5664 = vlaneseq
    %v5665 = vshrl.u32 %v5664, 7
    %v5666 = vsub.s32 %v2165, %v5665
    %v5667 = vrot.slane %v5548, %v5666
    %v5668 = vsel %vm2170, %v5667, %v5663
    %v5669 = vlaneseq
    %v5670 = vshrl.u32 %v5669, 7
    %v5671 = vsub.s32 %v65, %v5670
    %v5672 = vrot.slane %v5551, %v5671
    %v5673 = vlaneseq
    %v5674 = vshrl.u32 %v5673, 7
    %v5675 = vsub.s32 %v2165, %v5674
    %v5676 = vrot.slane %v5554, %v5675
    %v5677 = vsel %vm2170, %v5676, %v5672
    %v5678 = vlaneseq
    %v5679 = vshrl.u32 %v5678, 7
    %v5680 = vsub.s32 %v65, %v5679
    %v5681 = vrot.slane %v5557, %v5680
    %v5682 = vlaneseq
    %v5683 = vshrl.u32 %v5682, 7
    %v5684 = vsub.s32 %v2165, %v5683
    %v5685 = vrot.slane %v5560, %v5684
    %v5686 = vsel %vm2170, %v5685, %v5681
    %v5687 = vlaneseq
    %v5688 = vshrl.u32 %v5687, 7
    %v5689 = vsub.s32 %v65, %v5688
    %v5690 = vrot.slane %v5563, %v5689
    %v5691 = vlaneseq
    %v5692 = vshrl.u32 %v5691, 7
    %v5693 = vsub.s32 %v2165, %v5692
    %v5694 = vrot.slane %v5566, %v5693
    %v5695 = vsel %vm2170, %v5694, %v5690
    %v5696 = vlaneseq
    %v5697 = vshrl.u32 %v5696, 7
    %v5698 = vsub.s32 %v65, %v5697
    %v5699 = vrot.slane %v5569, %v5698
    %v5700 = vlaneseq
    %v5701 = vshrl.u32 %v5700, 7
    %v5702 = vsub.s32 %v2165, %v5701
    %v5703 = vrot.slane %v5572, %v5702
    %v5704 = vsel %vm2170, %v5703, %v5699
    %v5705 = vlaneseq
    %v5706 = vshrl.u32 %v5705, 7
    %v5707 = vsub.s32 %v65, %v5706
    %v5708 = vrot.slane %v5575, %v5707
    %v5709 = vlaneseq
    %v5710 = vshrl.u32 %v5709, 7
    %v5711 = vsub.s32 %v2165, %v5710
    %v5712 = vrot.slane %v5578, %v5711
    %v5713 = vsel %vm2170, %v5712, %v5708
    %v5714 = vlaneseq
    %v5715 = vshrl.u32 %v5714, 7
    %v5716 = vsub.s32 %v65, %v5715
    %v5717 = vrot.slane %v5581, %v5716
    %v5718 = vlaneseq
    %v5719 = vshrl.u32 %v5718, 7
    %v5720 = vsub.s32 %v2165, %v5719
    %v5721 = vrot.slane %v5584, %v5720
    %v5722 = vsel %vm2170, %v5721, %v5717
    %v5723 = vlaneseq
    %v5724 = vshrl.u32 %v5723, 7
    %v5725 = vsub.s32 %v65, %v5724
    %v5726 = vrot.slane %v5587, %v5725
    %v5727 = vlaneseq
    %v5728 = vshrl.u32 %v5727, 7
    %v5729 = vsub.s32 %v2165, %v5728
    %v5730 = vrot.slane %v5590, %v5729
    %v5731 = vsel %vm2170, %v5730, %v5726
    %v5732 = vlaneseq
    %v5733 = vshrl.u32 %v5732, 7
    %v5734 = vsub.s32 %v65, %v5733
    %v5735 = vrot.slane %v5593, %v5734
    %v5736 = vlaneseq
    %v5737 = vshrl.u32 %v5736, 7
    %v5738 = vsub.s32 %v2165, %v5737
    %v5739 = vrot.slane %v5596, %v5738
    %v5740 = vsel %vm2170, %v5739, %v5735
    %v5741 = vsel %vm2307, %v5614, %v5605
    %v5742 = vsel %vm2309, %v5623, %v5741
    %v5743 = vsel %vm2311, %v5632, %v5742
    %v5744 = vsel %vm2313, %v5641, %v5743
    %v5745 = vsel %vm2315, %v5650, %v5744
    %v5746 = vsel %vm2317, %v5659, %v5745
    %v5747 = vsel %vm2319, %v5668, %v5746
    %v5748 = vsel %vm2307, %v5686, %v5677
    %v5749 = vsel %vm2309, %v5695, %v5748
    %v5750 = vsel %vm2311, %v5704, %v5749
    %v5751 = vsel %vm2313, %v5713, %v5750
    %v5752 = vsel %vm2315, %v5722, %v5751
    %v5753 = vsel %vm2317, %v5731, %v5752
    %v5754 = vsel %vm2319, %v5740, %v5753
    %5755 = vrot.lane.b32.xlu0 %v3710, 80
    %v5756 = vpop.permute.xlu0 %5755
    %5757 = vrot.lane.b32.xlu0 %v3711, 80
    %v5758 = vpop.permute.xlu0 %5757
    %v5761 = vsel %vm2328, %v5747, 0
    %v5763 = vsel %vm2328, %v5754, 0
    %5765 = vmatprep.subr.mxu0 0.0
    %5766 = vmatpush1.msra.mxu0 %v5756
    %5767 = vmatprep.subr.mxu0 0.0
    %5768 = vmatpush1.msra.mxu0 %v5758
    %5769 = vmatprep.subr.mxu0 0.0
    %5770 = vmatpush1.msra.mxu0 0.0
    %5771 = vmatprep.subr.mxu0 0.0
    %5772 = vmatpush1.msra.mxu0 0.0
    %5773 = vmatprep.subr.mxu0 0.0
    %5774 = vmatpush1.msra.mxu0 0.0
    %5775 = vmatprep.subr.mxu0 0.0
    %5776 = vmatpush1.msra.mxu0 0.0
    %5777 = vmatprep.subr.mxu0 0.0
    %5778 = vmatpush1.msra.mxu0 0.0
    %5779 = vmatprep.subr.mxu0 0.0
    %5780 = vmatpush1.msra.mxu0 0.0
    %5781 = vmatprep.subr.mxu0 0.0
    %5782 = vmatpush1.msra.mxu0 0.0
    %5783 = vmatprep.subr.mxu0 0.0
    %5784 = vmatpush1.msra.mxu0 0.0
    %5785 = vmatprep.subr.mxu0 0.0
    %5786 = vmatpush1.msra.mxu0 0.0
    %5787 = vmatprep.subr.mxu0 0.0
    %5788 = vmatpush1.msra.mxu0 0.0
    %5789 = vmatprep.subr.mxu0 0.0
    %5790 = vmatpush1.msra.mxu0 0.0
    %5791 = vmatprep.subr.mxu0 0.0
    %5792 = vmatpush1.msra.mxu0 0.0
    %5793 = vmatprep.subr.mxu0 0.0
    %5794 = vmatpush1.msra.mxu0 0.0
    %5795 = vmatprep.subr.mxu0 0.0
    %5796 = vmatpush1.msra.mxu0 0.0
    %5797 = vmatprep.subr.mxu0 0.0
    %5798 = vmatpush1.msra.mxu0 0.0
    %5799 = vmatprep.subr.mxu0 0.0
    %5800 = vmatpush1.msra.mxu0 0.0
    %5801 = vmatprep.subr.mxu0 0.0
    %5802 = vmatpush1.msra.mxu0 0.0
    %5803 = vmatprep.subr.mxu0 0.0
    %5804 = vmatpush1.msra.mxu0 0.0
    %5805 = vmatprep.subr.mxu0 0.0
    %5806 = vmatpush1.msra.mxu0 0.0
    %5807 = vmatprep.subr.mxu0 0.0
    %5808 = vmatpush1.msra.mxu0 0.0
    %5809 = vmatprep.subr.mxu0 0.0
    %5810 = vmatpush1.msra.mxu0 0.0
    %5811 = vmatprep.subr.mxu0 0.0
    %5812 = vmatpush1.msra.mxu0 0.0
    %5813 = vmatprep.subr.mxu0 0.0
    %5814 = vmatpush1.msra.mxu0 0.0
    %5815 = vmatprep.subr.mxu0 0.0
    %5816 = vmatpush1.msra.mxu0 0.0
    %5817 = vmatprep.subr.mxu0 0.0
    %5818 = vmatpush1.msra.mxu0 0.0
    %5819 = vmatprep.subr.mxu0 0.0
    %5820 = vmatpush1.msra.mxu0 0.0
    %5821 = vmatprep.subr.mxu0 0.0
    %5822 = vmatpush1.msra.mxu0 0.0
    %5823 = vmatprep.subr.mxu0 0.0
    %5824 = vmatpush1.msra.mxu0 0.0
    %5825 = vmatprep.subr.mxu0 0.0
    %5826 = vmatpush1.msra.mxu0 0.0
    %5827 = vmatprep.subr.mxu0 0.0
    %5828 = vmatpush1.msra.mxu0 0.0
    %5829 = vmatprep.mubr.f32.mxu0 0.0
    %5830 = vmatmul.mubr.f32.gmra.mrb[0].mxu0 %v5761
    %v5831 = vpop.f32.mrb[0].mxu0
    %v5832 = vadd.f32 0.0, %v5831
    %v5833 = vpop.f32.mrb[0].mxu0
    %5834 = vmatprep.mubr.f32.mxu0 0.0
    %5835 = vmatmul.mubr.f32.gmra.mrb[0].mxu0 %v5763
    %v5836 = vpop.f32.mrb[0].mxu0
    %v5837 = vadd.f32 0.0, %v5836
    %v5838 = vpop.f32.mrb[0].mxu0
    %5839 = vdwg.mxu0
    %5840 = vset.pattern.permute.xlu0 0
    %5841 = vperm.xlu0 %5840, %v4757
    %v5842 = vpop.permute.xlu0 %5841
    %5843 = vset.pattern.permute.xlu0 0
    %5844 = vperm.xlu0 %5843, %v4758
    %v5845 = vpop.permute.xlu0 %5844
    %5846 = vset.pattern.permute.xlu0 0
    %5847 = vperm.xlu0 %5846, %v4759
    %v5848 = vpop.permute.xlu0 %5847
    %5849 = vset.pattern.permute.xlu0 0
    %5850 = vperm.xlu0 %5849, %v4760
    %v5851 = vpop.permute.xlu0 %5850
    %5852 = vset.pattern.permute.xlu0 0
    %5853 = vperm.xlu0 %5852, %v4761
    %v5854 = vpop.permute.xlu0 %5853
    %5855 = vset.pattern.permute.xlu0 0
    %5856 = vperm.xlu0 %5855, %v4762
    %v5857 = vpop.permute.xlu0 %5856
    %5858 = vset.pattern.permute.xlu0 0
    %5859 = vperm.xlu0 %5858, %v4763
    %v5860 = vpop.permute.xlu0 %5859
    %5861 = vset.pattern.permute.xlu0 0
    %5862 = vperm.xlu0 %5861, %v4764
    %v5863 = vpop.permute.xlu0 %5862
    %5864 = vset.pattern.permute.xlu0 0
    %5865 = vperm.xlu0 %5864, %v4765
    %v5866 = vpop.permute.xlu0 %5865
    %5867 = vset.pattern.permute.xlu0 0
    %5868 = vperm.xlu0 %5867, %v4766
    %v5869 = vpop.permute.xlu0 %5868
    %5870 = vset.pattern.permute.xlu0 0
    %5871 = vperm.xlu0 %5870, %v4767
    %v5872 = vpop.permute.xlu0 %5871
    %5873 = vset.pattern.permute.xlu0 0
    %5874 = vperm.xlu0 %5873, %v4768
    %v5875 = vpop.permute.xlu0 %5874
    %5876 = vset.pattern.permute.xlu0 0
    %5877 = vperm.xlu0 %5876, %v4769
    %v5878 = vpop.permute.xlu0 %5877
    %5879 = vset.pattern.permute.xlu0 0
    %5880 = vperm.xlu0 %5879, %v4770
    %v5881 = vpop.permute.xlu0 %5880
    %5882 = vset.pattern.permute.xlu0 0
    %5883 = vperm.xlu0 %5882, %v4771
    %v5884 = vpop.permute.xlu0 %5883
    %5885 = vset.pattern.permute.xlu0 0
    %5886 = vperm.xlu0 %5885, %v4772
    %v5887 = vpop.permute.xlu0 %5886
    %5888 = vset.pattern.permute.xlu0 0
    %5889 = vperm.xlu0 %5888, %v4773
    %v5890 = vpop.permute.xlu0 %5889
    %5891 = vset.pattern.permute.xlu0 0
    %5892 = vperm.xlu0 %5891, %v4774
    %v5893 = vpop.permute.xlu0 %5892
    %5894 = vset.pattern.permute.xlu0 0
    %5895 = vperm.xlu0 %5894, %v4775
    %v5896 = vpop.permute.xlu0 %5895
    %5897 = vset.pattern.permute.xlu0 0
    %5898 = vperm.xlu0 %5897, %v4776
    %v5899 = vpop.permute.xlu0 %5898
    %5900 = vset.pattern.permute.xlu0 0
    %5901 = vperm.xlu0 %5900, %v4777
    %v5902 = vpop.permute.xlu0 %5901
    %5903 = vset.pattern.permute.xlu0 0
    %5904 = vperm.xlu0 %5903, %v4778
    %v5905 = vpop.permute.xlu0 %5904
    %5906 = vset.pattern.permute.xlu0 0
    %5907 = vperm.xlu0 %5906, %v4779
    %v5908 = vpop.permute.xlu0 %5907
    %5909 = vset.pattern.permute.xlu0 0
    %5910 = vperm.xlu0 %5909, %v4780
    %v5911 = vpop.permute.xlu0 %5910
    %5912 = vset.pattern.permute.xlu0 0
    %5913 = vperm.xlu0 %5912, %v4781
    %v5914 = vpop.permute.xlu0 %5913
    %5915 = vset.pattern.permute.xlu0 0
    %5916 = vperm.xlu0 %5915, %v4782
    %v5917 = vpop.permute.xlu0 %5916
    %5918 = vset.pattern.permute.xlu0 0
    %5919 = vperm.xlu0 %5918, %v4783
    %v5920 = vpop.permute.xlu0 %5919
    %5921 = vset.pattern.permute.xlu0 0
    %5922 = vperm.xlu0 %5921, %v4784
    %v5923 = vpop.permute.xlu0 %5922
    %5924 = vset.pattern.permute.xlu0 0
    %5925 = vperm.xlu0 %5924, %v4785
    %v5926 = vpop.permute.xlu0 %5925
    %5927 = vset.pattern.permute.xlu0 0
    %5928 = vperm.xlu0 %5927, %v4786
    %v5929 = vpop.permute.xlu0 %5928
    %5930 = vset.pattern.permute.xlu0 0
    %5931 = vperm.xlu0 %5930, %v4787
    %v5932 = vpop.permute.xlu0 %5931
    %5933 = vset.pattern.permute.xlu0 0
    %5934 = vperm.xlu0 %5933, %v4788
    %v5935 = vpop.permute.xlu0 %5934
    %v5936 = vlaneseq
    %v5937 = vshrl.u32 %v5936, 7
    %v5938 = vsub.s32 %v65, %v5937
    %v5939 = vrot.slane %v5842, %v5938
    %v5940 = vlaneseq
    %v5941 = vshrl.u32 %v5940, 7
    %v5942 = vsub.s32 %v2165, %v5941
    %v5943 = vrot.slane %v5845, %v5942
    %v5944 = vsel %vm2170, %v5943, %v5939
    %v5945 = vlaneseq
    %v5946 = vshrl.u32 %v5945, 7
    %v5947 = vsub.s32 %v65, %v5946
    %v5948 = vrot.slane %v5848, %v5947
    %v5949 = vlaneseq
    %v5950 = vshrl.u32 %v5949, 7
    %v5951 = vsub.s32 %v2165, %v5950
    %v5952 = vrot.slane %v5851, %v5951
    %v5953 = vsel %vm2170, %v5952, %v5948
    %v5954 = vlaneseq
    %v5955 = vshrl.u32 %v5954, 7
    %v5956 = vsub.s32 %v65, %v5955
    %v5957 = vrot.slane %v5854, %v5956
    %v5958 = vlaneseq
    %v5959 = vshrl.u32 %v5958, 7
    %v5960 = vsub.s32 %v2165, %v5959
    %v5961 = vrot.slane %v5857, %v5960
    %v5962 = vsel %vm2170, %v5961, %v5957
    %v5963 = vlaneseq
    %v5964 = vshrl.u32 %v5963, 7
    %v5965 = vsub.s32 %v65, %v5964
    %v5966 = vrot.slane %v5860, %v5965
    %v5967 = vlaneseq
    %v5968 = vshrl.u32 %v5967, 7
    %v5969 = vsub.s32 %v2165, %v5968
    %v5970 = vrot.slane %v5863, %v5969
    %v5971 = vsel %vm2170, %v5970, %v5966
    %v5972 = vlaneseq
    %v5973 = vshrl.u32 %v5972, 7
    %v5974 = vsub.s32 %v65, %v5973
    %v5975 = vrot.slane %v5866, %v5974
    %v5976 = vlaneseq
    %v5977 = vshrl.u32 %v5976, 7
    %v5978 = vsub.s32 %v2165, %v5977
    %v5979 = vrot.slane %v5869, %v5978
    %v5980 = vsel %vm2170, %v5979, %v5975
    %v5981 = vlaneseq
    %v5982 = vshrl.u32 %v5981, 7
    %v5983 = vsub.s32 %v65, %v5982
    %v5984 = vrot.slane %v5872, %v5983
    %v5985 = vlaneseq
    %v5986 = vshrl.u32 %v5985, 7
    %v5987 = vsub.s32 %v2165, %v5986
    %v5988 = vrot.slane %v5875, %v5987
    %v5989 = vsel %vm2170, %v5988, %v5984
    %v5990 = vlaneseq
    %v5991 = vshrl.u32 %v5990, 7
    %v5992 = vsub.s32 %v65, %v5991
    %v5993 = vrot.slane %v5878, %v5992
    %v5994 = vlaneseq
    %v5995 = vshrl.u32 %v5994, 7
    %v5996 = vsub.s32 %v2165, %v5995
    %v5997 = vrot.slane %v5881, %v5996
    %v5998 = vsel %vm2170, %v5997, %v5993
    %v5999 = vlaneseq
    %v6000 = vshrl.u32 %v5999, 7
    %v6001 = vsub.s32 %v65, %v6000
    %v6002 = vrot.slane %v5884, %v6001
    %v6003 = vlaneseq
    %v6004 = vshrl.u32 %v6003, 7
    %v6005 = vsub.s32 %v2165, %v6004
    %v6006 = vrot.slane %v5887, %v6005
    %v6007 = vsel %vm2170, %v6006, %v6002
    %v6008 = vlaneseq
    %v6009 = vshrl.u32 %v6008, 7
    %v6010 = vsub.s32 %v65, %v6009
    %v6011 = vrot.slane %v5890, %v6010
    %v6012 = vlaneseq
    %v6013 = vshrl.u32 %v6012, 7
    %v6014 = vsub.s32 %v2165, %v6013
    %v6015 = vrot.slane %v5893, %v6014
    %v6016 = vsel %vm2170, %v6015, %v6011
    %v6017 = vlaneseq
    %v6018 = vshrl.u32 %v6017, 7
    %v6019 = vsub.s32 %v65, %v6018
    %v6020 = vrot.slane %v5896, %v6019
    %v6021 = vlaneseq
    %v6022 = vshrl.u32 %v6021, 7
    %v6023 = vsub.s32 %v2165, %v6022
    %v6024 = vrot.slane %v5899, %v6023
    %v6025 = vsel %vm2170, %v6024, %v6020
    %v6026 = vlaneseq
    %v6027 = vshrl.u32 %v6026, 7
    %v6028 = vsub.s32 %v65, %v6027
    %v6029 = vrot.slane %v5902, %v6028
    %v6030 = vlaneseq
    %v6031 = vshrl.u32 %v6030, 7
    %v6032 = vsub.s32 %v2165, %v6031
    %v6033 = vrot.slane %v5905, %v6032
    %v6034 = vsel %vm2170, %v6033, %v6029
    %v6035 = vlaneseq
    %v6036 = vshrl.u32 %v6035, 7
    %v6037 = vsub.s32 %v65, %v6036
    %v6038 = vrot.slane %v5908, %v6037
    %v6039 = vlaneseq
    %v6040 = vshrl.u32 %v6039, 7
    %v6041 = vsub.s32 %v2165, %v6040
    %v6042 = vrot.slane %v5911, %v6041
    %v6043 = vsel %vm2170, %v6042, %v6038
    %v6044 = vlaneseq
    %v6045 = vshrl.u32 %v6044, 7
    %v6046 = vsub.s32 %v65, %v6045
    %v6047 = vrot.slane %v5914, %v6046
    %v6048 = vlaneseq
    %v6049 = vshrl.u32 %v6048, 7
    %v6050 = vsub.s32 %v2165, %v6049
    %v6051 = vrot.slane %v5917, %v6050
    %v6052 = vsel %vm2170, %v6051, %v6047
    %v6053 = vlaneseq
    %v6054 = vshrl.u32 %v6053, 7
    %v6055 = vsub.s32 %v65, %v6054
    %v6056 = vrot.slane %v5920, %v6055
    %v6057 = vlaneseq
    %v6058 = vshrl.u32 %v6057, 7
    %v6059 = vsub.s32 %v2165, %v6058
    %v6060 = vrot.slane %v5923, %v6059
    %v6061 = vsel %vm2170, %v6060, %v6056
    %v6062 = vlaneseq
    %v6063 = vshrl.u32 %v6062, 7
    %v6064 = vsub.s32 %v65, %v6063
    %v6065 = vrot.slane %v5926, %v6064
    %v6066 = vlaneseq
    %v6067 = vshrl.u32 %v6066, 7
    %v6068 = vsub.s32 %v2165, %v6067
    %v6069 = vrot.slane %v5929, %v6068
    %v6070 = vsel %vm2170, %v6069, %v6065
    %v6071 = vlaneseq
    %v6072 = vshrl.u32 %v6071, 7
    %v6073 = vsub.s32 %v65, %v6072
    %v6074 = vrot.slane %v5932, %v6073
    %v6075 = vlaneseq
    %v6076 = vshrl.u32 %v6075, 7
    %v6077 = vsub.s32 %v2165, %v6076
    %v6078 = vrot.slane %v5935, %v6077
    %v6079 = vsel %vm2170, %v6078, %v6074
    %v6080 = vsel %vm2307, %v5953, %v5944
    %v6081 = vsel %vm2309, %v5962, %v6080
    %v6082 = vsel %vm2311, %v5971, %v6081
    %v6083 = vsel %vm2313, %v5980, %v6082
    %v6084 = vsel %vm2315, %v5989, %v6083
    %v6085 = vsel %vm2317, %v5998, %v6084
    %v6086 = vsel %vm2319, %v6007, %v6085
    %v6087 = vsel %vm2307, %v6025, %v6016
    %v6088 = vsel %vm2309, %v6034, %v6087
    %v6089 = vsel %vm2311, %v6043, %v6088
    %v6090 = vsel %vm2313, %v6052, %v6089
    %v6091 = vsel %vm2315, %v6061, %v6090
    %v6092 = vsel %vm2317, %v6070, %v6091
    %v6093 = vsel %vm2319, %v6079, %v6092
    %v6094 = vsel %vm2328, %v6086, 0
    %v6096 = vsel %vm2328, %v6093, 0
    %6098 = vmatprep.subr.mxu0 0.0
    %6099 = vmatpush1.msra.mxu0 %v3710
    %6100 = vmatprep.subr.mxu0 0.0
    %6101 = vmatpush1.msra.mxu0 %v3711
    %6102 = vmatprep.subr.mxu0 0.0
    %6103 = vmatpush1.msra.mxu0 0.0
    %6104 = vmatprep.subr.mxu0 0.0
    %6105 = vmatpush1.msra.mxu0 0.0
    %6106 = vmatprep.subr.mxu0 0.0
    %6107 = vmatpush1.msra.mxu0 0.0
    %6108 = vmatprep.subr.mxu0 0.0
    %6109 = vmatpush1.msra.mxu0 0.0
    %6110 = vmatprep.subr.mxu0 0.0
    %6111 = vmatpush1.msra.mxu0 0.0
    %6112 = vmatprep.subr.mxu0 0.0
    %6113 = vmatpush1.msra.mxu0 0.0
    %6114 = vmatprep.subr.mxu0 0.0
    %6115 = vmatpush1.msra.mxu0 0.0
    %6116 = vmatprep.subr.mxu0 0.0
    %6117 = vmatpush1.msra.mxu0 0.0
    %6118 = vmatprep.subr.mxu0 0.0
    %6119 = vmatpush1.msra.mxu0 0.0
    %6120 = vmatprep.subr.mxu0 0.0
    %6121 = vmatpush1.msra.mxu0 0.0
    %6122 = vmatprep.subr.mxu0 0.0
    %6123 = vmatpush1.msra.mxu0 0.0
    %6124 = vmatprep.subr.mxu0 0.0
    %6125 = vmatpush1.msra.mxu0 0.0
    %6126 = vmatprep.subr.mxu0 0.0
    %6127 = vmatpush1.msra.mxu0 0.0
    %6128 = vmatprep.subr.mxu0 0.0
    %6129 = vmatpush1.msra.mxu0 0.0
    %6130 = vmatprep.subr.mxu0 0.0
    %6131 = vmatpush1.msra.mxu0 0.0
    %6132 = vmatprep.subr.mxu0 0.0
    %6133 = vmatpush1.msra.mxu0 0.0
    %6134 = vmatprep.subr.mxu0 0.0
    %6135 = vmatpush1.msra.mxu0 0.0
    %6136 = vmatprep.subr.mxu0 0.0
    %6137 = vmatpush1.msra.mxu0 0.0
    %6138 = vmatprep.subr.mxu0 0.0
    %6139 = vmatpush1.msra.mxu0 0.0
    %6140 = vmatprep.subr.mxu0 0.0
    %6141 = vmatpush1.msra.mxu0 0.0
    %6142 = vmatprep.subr.mxu0 0.0
    %6143 = vmatpush1.msra.mxu0 0.0
    %6144 = vmatprep.subr.mxu0 0.0
    %6145 = vmatpush1.msra.mxu0 0.0
    %6146 = vmatprep.subr.mxu0 0.0
    %6147 = vmatpush1.msra.mxu0 0.0
    %6148 = vmatprep.subr.mxu0 0.0
    %6149 = vmatpush1.msra.mxu0 0.0
    %6150 = vmatprep.subr.mxu0 0.0
    %6151 = vmatpush1.msra.mxu0 0.0
    %6152 = vmatprep.subr.mxu0 0.0
    %6153 = vmatpush1.msra.mxu0 0.0
    %6154 = vmatprep.subr.mxu0 0.0
    %6155 = vmatpush1.msra.mxu0 0.0
    %6156 = vmatprep.subr.mxu0 0.0
    %6157 = vmatpush1.msra.mxu0 0.0
    %6158 = vmatprep.subr.mxu0 0.0
    %6159 = vmatpush1.msra.mxu0 0.0
    %6160 = vmatprep.subr.mxu0 0.0
    %6161 = vmatpush1.msra.mxu0 0.0
    %6162 = vmatprep.mubr.f32.mxu0 0.0
    %6163 = vmatmul.mubr.f32.gmra.mrb[0].mxu0 %v6094
    %v6164 = vpop.f32.mrb[0].mxu0
    %v6165 = vadd.f32 %v5154, %v6164
    %v6166 = vpop.f32.mrb[0].mxu0
    %6167 = vmatprep.mubr.f32.mxu0 0.0
    %6168 = vmatmul.mubr.f32.gmra.mrb[0].mxu0 %v6096
    %v6169 = vpop.f32.mrb[0].mxu0
    %v6170 = vadd.f32 %v5159, %v6169
    %v6171 = vpop.f32.mrb[0].mxu0
    %6172 = vdwg.mxu0
    %v6173 = vadd.f32 %v6165, %v5493
    %v6174 = vadd.f32 %v6170, %v5498
    %v6175 = vadd.f32 %v6173, %v5832
    %v6176 = vadd.f32 %v6174, %v5837
    %v6177 = vmul.f32 %v6175, 0.25
    %v6178 = vmul.f32 %v6176, 0.25
    %v6179 = vlaneseq
    %v6180 = vshrl.u32 %v6179, 7
    %v6181 = vsub.s32 0, %v6180
    %v6182 = vrot.slane %v3531, %v6181
    %v6183 = vadd.f32 %v6177, %v6182
    %v6184 = vadd.f32 %v6178, %v6182
    %vm6185 = vcmp.gt.f32.partialorder %v6183, 0.0
    %vm6186 = vcmp.gt.f32.partialorder %v6184, 0.0
    %v6187 = vmin.f32 %v6183, 0.0
    %v6188 = vmin.f32 %v6184, 0.0
    %v6189 = vmul.f32 %v6187, 1.442695
    %v6190 = vpow.pop %v6189
    %v6191 = vmul.f32 %v6188, 1.442695
    %v6192 = vpow.pop %v6191
    %v6193 = vsub.f32 %v6190, 1.0
    %v6194 = vsub.f32 %v6192, 1.0
    %v6195 = vsel %vm6185, %v6183, %v6193
    %v6196 = vsel %vm6186, %v6184, %v6194
    %v6197 = vsel %vm2328, %v6195, 0.0
    %6198 = vadd.xlane.f32.xlu0 %v6197
    %v6199 = vpop.xlane.xlu0 %6198
    %v6200 = vsel %vm2328, %v6196, 0.0
    %6201 = vadd.xlane.f32.xlu0 %v6200
    %v6202 = vpop.xlane.xlu0 %6201
    %v6203 = vrcp.pop 16.0
    %v6204 = vmul.f32 %v6199, %v6203
    %v6205 = vmul.f32 %v6202, %v6203
    %v6206 = vsub.f32 %v6195, %v6204
    %v6207 = vsub.f32 %v6196, %v6205
    %v6208 = vmul.f32 %v6206, %v6206
    %v6209 = vmul.f32 %v6207, %v6207
    %v6210 = vsel %vm2328, %v6208, 0.0
    %6211 = vadd.xlane.f32.xlu0 %v6210
    %v6212 = vpop.xlane.xlu0 %6211
    %v6213 = vsel %vm2328, %v6209, 0.0
    %6214 = vadd.xlane.f32.xlu0 %v6213
    %v6215 = vpop.xlane.xlu0 %6214
    %v6216 = vmul.f32 %v6212, %v6203
    %v6217 = vmul.f32 %v6215, %v6203
    %v6218 = vadd.f32 %v6216, 1e-05
    %v6219 = vadd.f32 %v6217, 1e-05
    %v6220 = vrsqrt.pop %v6218
    %v6221 = vrsqrt.pop %v6219
    %v6222 = vmul.f32 %v6206, %v6220
    %v6223 = vmul.f32 %v6207, %v6221
    %v6224 = vlaneseq
    %v6225 = vshrl.u32 %v6224, 7
    %v6226 = vsub.s32 1, %v6225
    %v6227 = vrot.slane %v3531, %v6226
    %v6228 = vmul.f32 %v6222, %v6227
    %v6229 = vmul.f32 %v6223, %v6227
    %v6230 = vlaneseq
    %v6231 = vshrl.u32 %v6230, 7
    %v6232 = vsub.s32 2, %v6231
    %v6233 = vrot.slane %v3531, %v6232
    %v6234 = vadd.f32 %v6228, %v6233
    %v6235 = vadd.f32 %v6229, %v6233
    %v6236 = vadd.f32 %v6234, %v3722
    %v6237 = vadd.f32 %v6235, %v3723
    %v6238 = vsel %vm2328, %v6236, 0.0
    %v6239 = vsel %vm2328, %v6237, 0.0
    %6240 = vst [vmem:[#allocation2] sm:$0xff] %v6238
    %6241 = vst [vmem:[#allocation2 + $0x8] sm:$0xff] %v6239
    // Predicated region
    $region50: #{advanced_gnn_encoder.1} parent=1 // pred_check
      _
    $region51: #{advanced_gnn_encoder.1} parent=1 // pred_check_branch
      %6243 = sbr.rel (0) target = $region53
    $region52: #{advanced_gnn_encoder.1} parent=1 // pred_region
      %s6245 = ssub.s32 256, 256
      %6246 = vsyncadd [#allocation3], %s6245
      %s6247 = sshll.u32 [#allocation2], 4
      %s6248 = int_to_ptr.vmem [resolvable:$true] %s6247
      %6253 = dma.vmem_to_hbm [thread:$0]  %s6248, 256, %s12, [#allocation3], 128, 128, 8
    $region53: #{advanced_gnn_encoder.1} parent=1 // pred_fallthru
      _
    // Predicated region
    $region54: #{advanced_gnn_encoder.1} parent=1 // pred_check
      _
    $region55: #{advanced_gnn_encoder.1} parent=1 // pred_check_branch
      %6255 = sbr.rel (0) target = $region57
    $region56: #{advanced_gnn_encoder.1} parent=1 // pred_region
      %6256 = dma.done [#allocation3], 256
    $region57: #{advanced_gnn_encoder.1} parent=1 // pred_fallthru
      _
    %6257 = vsyncpa [#allocation3], 1

</llo_original>
